<compile_context>
chip_gen: v6e
topology: v6e:2x2x1
jax: 0.10.0
libtpu: 0.0.40
codegen_flags: <defaults>
</compile_context>

<pallas_src>
import jax
import jax.numpy as jnp
from jax import lax
from jax import image as jax_image
from jax.experimental import pallas as pl
from jax.experimental.pallas import tpu as pltpu

# ---- small synthetic CLIP-ViT config (real: 224/14 -> 257 tok, 1024 hid,
# ---- 16 heads, 24 layers, 4096 MLP, mapper 1024->768, max_length 77) ----
IMG = 32                       # resize target (stands in for 224)
PATCH = 8                      # patch size (stands in for 14)
NP = (IMG // PATCH) ** 2       # 16 patches
S_REAL = NP + 1                # 17 tokens (CLS + patches); real: 257
S_PAD = 24                     # sequence padded to a multiple of 8 (real: 264)
CP = 3 * PATCH * PATCH         # 192 flattened patch pixels
D = 128                        # vision hidden (real 1024) -- multiple of 128
HEADS = 4                      # real 16
HEAD_DIM = D // HEADS          # 32 (real 64)
FF = 256                       # MLP intermediate (real 4096) -- multiple of 128
LAYERS = 3                     # real 24
PROJ = 256                     # mapper output (real 768) -- multiple of 128
MAX_LEN = 32                   # stands in for max_length = 77
BT = 2                         # images per grid step (use 4-8 at real size)
M = BT * S_PAD                 # matmul row count per step
VW = max(3 * D, FF, PROJ)      # packed per-layer vector slab width (384, lane-dense)
HV_W = max(D, PROJ)            # width of the fixed head/mapper vector slab
EPS = 1e-5

MEAN = jnp.array([0.48145466, 0.4578275, 0.40821073], jnp.float32)
STD = jnp.array([0.26862954, 0.26130258, 0.27577711], jnp.float32)


def _layernorm(x, g, b):
    mu = jnp.mean(x, axis=-1, keepdims=True)
    var = jnp.mean(jnp.square(x - mu), axis=-1, keepdims=True)
    return (x - mu) * lax.rsqrt(var + EPS) * g + b


def clip_vit_kernel(patches_ref, head_vecs_ref, emb_ref, w_patch_ref,
                    w_qkv_ref, w_o_ref, w_fc1_ref, w_fc2_ref,
                    lvec_ref, w_map_ref, o_ref, x_ref):
    """One grid step = one block of BT images x one encoder layer.

    Activations ([M, D] f32) live in the x_ref VMEM scratch across layer steps.
    Patch/CLS/pos embedding + pre-LN is folded into layer step 0 and the
    1024->768 mapper into the last step.
    """
    layer = pl.program_id(1)

    # ---- layer step 0: patch embedding (stride==kernel conv == matmul)
    # ----               + CLS/pos emb + CLIP pre_layrnorm ----
    @pl.when(layer == 0)
    def _():
        p = patches_ref[...].reshape(M, CP).astype(jnp.bfloat16)
        pe = jnp.dot(p, w_patch_ref[...],
                     preferred_element_type=jnp.float32)          # [M, D]
        emb = jnp.concatenate([emb_ref[...]] * BT, axis=0)        # tile over BT images
        x0 = pe + emb
        x_ref[...] = _layernorm(x0, head_vecs_ref[0:1, 0:D],
                                head_vecs_ref[1:2, 0:D])

    x = x_ref[...]                                                # [M, D] f32

    # ---- self-attention (pre-LN, non-causal) ----
    h = _layernorm(x, lvec_ref[0, 0:1, 0:D],
                   lvec_ref[0, 1:2, 0:D]).astype(jnp.bfloat16)
    # fused QKV: one [M, D] @ [D, 3D] matmul (q|k|v concatenated along columns)
    qkv = jnp.dot(h, w_qkv_ref[0],
                  preferred_element_type=jnp.float32) + lvec_ref[0, 7:8, 0:3 * D]

    scale = HEAD_DIM ** -0.5
    kpos = lax.broadcasted_iota(jnp.int32, (S_PAD, S_PAD), 1)
    kmask = kpos < S_REAL                                         # mask padded key tokens

    # per-(image, head) scores/softmax/PV; static small loop, 2D MXU matmuls.
    ctx_rows = []
    for i in range(BT):
        r0 = i * S_PAD
        heads = []
        for hh in range(HEADS):
            c0 = hh * HEAD_DIM
            q_h = (qkv[r0:r0 + S_PAD, c0:c0 + HEAD_DIM] * scale).astype(jnp.bfloat16)
            k_h = qkv[r0:r0 + S_PAD, D + c0:D + c0 + HEAD_DIM].astype(jnp.bfloat16)
            v_h = qkv[r0:r0 + S_PAD, 2 * D + c0:2 * D + c0 + HEAD_DIM].astype(jnp.bfloat16)
            s = jnp.einsum("qd,kd->qk", q_h, k_h,
                           preferred_element_type=jnp.float32)    # [S_PAD, S_PAD]
            s = jnp.where(kmask, s, -1e9)
            s = s - jnp.max(s, axis=-1, keepdims=True)
            e = jnp.exp(s)
            p_h = e / jnp.sum(e, axis=-1, keepdims=True)          # exact softmax
            heads.append(jnp.dot(p_h.astype(jnp.bfloat16), v_h,
                                 preferred_element_type=jnp.float32))
        ctx_rows.append(jnp.concatenate(heads, axis=-1))          # [S_PAD, D]
    ctx = jnp.concatenate(ctx_rows, axis=0).astype(jnp.bfloat16)  # [M, D]

    # out-projection: one full-width [M, D] @ [D, D] matmul (no sum over heads)
    attn = jnp.dot(ctx, w_o_ref[0],
                   preferred_element_type=jnp.float32) + lvec_ref[0, 4:5, 0:D]
    x1 = x + attn

    # ---- MLP (pre-LN, quick_gelu) ----
    h2 = _layernorm(x1, lvec_ref[0, 2:3, 0:D],
                    lvec_ref[0, 3:4, 0:D]).astype(jnp.bfloat16)
    a = jnp.dot(h2, w_fc1_ref[0],
                preferred_element_type=jnp.float32) + lvec_ref[0, 5:6, 0:FF]
    a = a * jax.nn.sigmoid(1.702 * a)                             # CLIP quick_gelu
    m = jnp.dot(a.astype(jnp.bfloat16), w_fc2_ref[0],
                preferred_element_type=jnp.float32) + lvec_ref[0, 6:7, 0:D]
    x2 = x1 + m
    x_ref[...] = x2

    # ---- last layer: mapper Linear(D -> PROJ) + zero padded rows (for F.pad) ----
    @pl.when(layer == pl.num_programs(1) - 1)
    def _():
        z = jnp.dot(x2.astype(jnp.bfloat16), w_map_ref[...],
                    preferred_element_type=jnp.float32) + head_vecs_ref[2:3, 0:PROJ]
        z = z.reshape(BT, S_PAD, PROJ)
        rows = lax.broadcasted_iota(jnp.int32, (BT, S_PAD, PROJ), 1)
        o_ref[...] = jnp.where(rows < S_REAL, z, 0.0).astype(o_ref.dtype)


def run_clip_vit(patches_ext, params):
    """patches_ext: [B, S_PAD, CP] f32 (B multiple of BT) -> [B, S_PAD, PROJ]."""
    batch = patches_ext.shape[0]
    assert batch % BT == 0

    def fixed(arr):
        nd = arr.ndim
        return pl.BlockSpec(arr.shape, lambda b, l, nd=nd: (0,) * nd)

    def per_layer(arr):
        tail = arr.shape[1:]
        nz = len(tail)
        return pl.BlockSpec((1,) + tail, lambda b, l, nz=nz: (l,) + (0,) * nz)

    in_specs = [
        pl.BlockSpec((BT, S_PAD, CP), lambda b, l: (b, 0, 0)),   # patch block (BT images)
        fixed(params["head_vecs"]),                              # pre-LN g/b + mapper bias
        fixed(params["emb"]),                                    # CLS + positional embedding
        fixed(params["w_patch"]),                                # patch conv weight
        per_layer(params["w_qkv"]),                              # [L, D, 3D] bf16 (fused QKV)
        per_layer(params["w_o"]),                                # [L, D, D]  bf16
        per_layer(params["w_fc1"]),                              # [L, D, FF] bf16
        per_layer(params["w_fc2"]),                              # [L, FF, D] bf16
        per_layer(params["lvecs"]),                              # [L, 8, VW] packed vectors
        fixed(params["w_map"]),                                  # mapper weight
    ]
    grid_spec = pltpu.PrefetchScalarGridSpec(
        num_scalar_prefetch=0,
        grid=(batch // BT, LAYERS),
        in_specs=in_specs,
        out_specs=pl.BlockSpec((BT, S_PAD, PROJ), lambda b, l: (b, 0, 0)),
        scratch_shapes=[pltpu.VMEM((M, D), jnp.float32)],        # resident activations
    )
    return pl.pallas_call(
        clip_vit_kernel,
        out_shape=jax.ShapeDtypeStruct((batch, S_PAD, PROJ), jnp.float32),
        grid_spec=grid_spec,
        compiler_params=pltpu.CompilerParams(
            dimension_semantics=("parallel", "arbitrary"),
            # demo shapes: 32 MiB is plenty.  Real config: ~96-112 MiB on
            # v5e/v6e; on v7x keep <=~48 MiB and FF-tile the MLP weights.
            vmem_limit_bytes=32 * 1024 * 1024),
    )(patches_ext, params["head_vecs"], params["emb"], params["w_patch"],
      params["w_qkv"], params["w_o"], params["w_fc1"], params["w_fc2"],
      params["lvecs"], params["w_map"])


def clip_image_projector(x, params):
    """x: [B, 3, H, W] float32 in [-1, 1]  ->  [B, MAX_LEN, PROJ] float32."""
    # TODO(synk): the list-input branch of ClipImageProjector.forward returns a
    #             text-tower null_cond (FrozenCLIPEmbedder + BPE tokenizer); no
    #             Pallas equivalent, only the image branch is implemented.
    b = x.shape[0]
    # TODO(synk): kornia's antialiased align_corners=True bicubic resize has no
    #             exact Pallas/JAX equivalent; jax.image.resize bicubic is glue.
    x = jax_image.resize(x, (b, 3, IMG, IMG), method="bicubic")
    x = (x + 1.0) / 2.0
    x = (x - MEAN[None, :, None, None]) / STD[None, :, None, None]
    # patchify: stride==kernel conv is a pure relayout + matmul (matmul in-kernel)
    g = IMG // PATCH
    p = x.reshape(b, 3, g, PATCH, g, PATCH)
    p = jnp.transpose(p, (0, 2, 4, 1, 3, 5)).reshape(b, NP, CP)
    patches = jnp.zeros((b, S_PAD, CP), jnp.float32).at[:, 1:1 + NP, :].set(p)

    # pad batch to a multiple of BT so each grid step processes a full block
    b_pad = ((b + BT - 1) // BT) * BT
    if b_pad != b:
        patches = jnp.pad(patches, ((0, b_pad - b), (0, 0), (0, 0)))

    z = run_clip_vit(patches, params)[:b]                   # [B, S_PAD, PROJ]

    # F.pad(mapper(last_hidden_state), seq -> max_length); pad rows already zero.
    if MAX_LEN >= S_PAD:
        z = jnp.pad(z, ((0, 0), (0, MAX_LEN - S_PAD), (0, 0)))
    else:
        z = z[:, :MAX_LEN, :]
    return z


def init_params(key):
    # NOTE: when loading real HF CLIP weights, nn.Linear stores [out, in] --
    # transpose wq/wk/wv/wo/fc1/fc2/mapper to the [in, out] layout used here.
    def nrm(k, shape, scale=0.02):
        return scale * jax.random.normal(k, shape, dtype=jnp.float32)

    ktop = jax.random.split(key, LAYERS + 5)
    w_patch = nrm(ktop[0], (CP, D)).astype(jnp.bfloat16)
    cls_emb = nrm(ktop[1], (D,))
    pos_emb = nrm(ktop[2], (S_REAL, D))
    emb = jnp.zeros((S_PAD, D), jnp.float32).at[:S_REAL].set(pos_emb).at[0].add(cls_emb)

    w_map = nrm(ktop[3], (D, PROJ)).astype(jnp.bfloat16)
    b_map = nrm(ktop[4], (PROJ,))
    head_vecs = (jnp.zeros((8, HV_W), jnp.float32)
                 .at[0, :D].set(1.0)            # pre_layrnorm gamma
                 .at[1, :D].set(0.0)            # pre_layrnorm beta
                 .at[2, :PROJ].set(b_map))      # mapper bias

    w_qkv, w_o, w_fc1, w_fc2, lvecs = [], [], [], [], []
    for li in range(LAYERS):
        lk = jax.random.split(ktop[5 + li], 12)
        wq, wk, wv = nrm(lk[0], (D, D)), nrm(lk[1], (D, D)), nrm(lk[2], (D, D))
        bq, bk, bv = nrm(lk[3], (D,)), nrm(lk[4], (D,)), nrm(lk[5], (D,))
        wo, bo = nrm(lk[6], (D, D)), nrm(lk[7], (D,))
        w1, b1 = nrm(lk[8], (D, FF)), nrm(lk[9], (FF,))
        w2, b2 = nrm(lk[10], (FF, D)), nrm(lk[11], (D,))

        w_qkv.append(jnp.concatenate([wq, wk, wv], axis=-1).astype(jnp.bfloat16))  # [D, 3D]
        w_o.append(wo.astype(jnp.bfloat16))                                        # [D, D]
        w_fc1.append(w1.astype(jnp.bfloat16))
        w_fc2.append(w2.astype(jnp.bfloat16))
        lvecs.append(jnp.zeros((8, VW), jnp.float32)
                     .at[0, :D].set(1.0)                        # ln1 gamma
                     .at[1, :D].set(0.0)                        # ln1 beta
                     .at[2, :D].set(1.0)                        # ln2 gamma
                     .at[3, :D].set(0.0)                        # ln2 beta
                     .at[4, :D].set(bo)                         # out-proj bias
                     .at[5, :FF].set(b1)                        # fc1 bias
                     .at[6, :D].set(b2)                         # fc2 bias
                     .at[7, :3 * D].set(jnp.concatenate([bq, bk, bv])))  # fused qkv bias

    return dict(
        w_patch=w_patch, emb=emb, head_vecs=head_vecs, w_map=w_map,
        w_qkv=jnp.stack(w_qkv), w_o=jnp.stack(w_o),
        w_fc1=jnp.stack(w_fc1), w_fc2=jnp.stack(w_fc2),
        lvecs=jnp.stack(lvecs))


if __name__ == "__main__":
    root = jax.random.PRNGKey(0)
    pkey, xkey = jax.random.split(root)
    params = init_params(pkey)

    batch = 2
    x = jax.random.uniform(xkey, (batch, 3, 40, 40), jnp.float32, -1.0, 1.0)

    z = jax.jit(clip_image_projector)(x, params)
    jax.block_until_ready(z)

    assert z.shape == (batch, MAX_LEN, PROJ) and z.dtype == jnp.float32
    assert bool(jnp.all(jnp.isfinite(z)))
    assert bool(jnp.all(z[:, S_REAL:, :] == 0.0))        # F.pad region is exact zeros
    print("KERNEL_OK")
</pallas_src>

<mosaic_0001>
module attributes {stable_mosaic.version = 11 : i64} {
  func.func @clip_vit_kernel(%arg0: i32, %arg1: i32, %arg2: memref<2x24x192xf32, #tpu.memory_space<vmem>>, %arg3: memref<8x256xf32, #tpu.memory_space<vmem>>, %arg4: memref<24x128xf32, #tpu.memory_space<vmem>>, %arg5: memref<192x128xbf16, #tpu.memory_space<vmem>>, %arg6: memref<1x128x384xbf16, #tpu.memory_space<vmem>>, %arg7: memref<1x128x128xbf16, #tpu.memory_space<vmem>>, %arg8: memref<1x128x256xbf16, #tpu.memory_space<vmem>>, %arg9: memref<1x256x128xbf16, #tpu.memory_space<vmem>>, %arg10: memref<1x8x384xf32, #tpu.memory_space<vmem>>, %arg11: memref<128x256xbf16, #tpu.memory_space<vmem>>, %arg12: memref<2x24x256xf32, #tpu.memory_space<vmem>>, %arg13: memref<48x128xf32, #tpu.memory_space<vmem>>) attributes {dimension_semantics = [#tpu.dimension_semantics<parallel>, #tpu.dimension_semantics<arbitrary>], iteration_bounds = array<i64: 1, 3>, scalar_prefetch = 0 : i64, scratch_operands = 1 : i64, tpu.core_type = #tpu.core_type<tc>, window_params = [{transform_indices = @transform_0, window_bounds = array<i64: 2, 24, 192>}, {pipeline_mode = #tpu.pipeline_mode<synchronous>, transform_indices = @transform_1, window_bounds = array<i64: 8, 256>}, {pipeline_mode = #tpu.pipeline_mode<synchronous>, transform_indices = @transform_2, window_bounds = array<i64: 24, 128>}, {pipeline_mode = #tpu.pipeline_mode<synchronous>, transform_indices = @transform_3, window_bounds = array<i64: 192, 128>}, {transform_indices = @transform_4, window_bounds = array<i64: 1, 128, 384>}, {transform_indices = @transform_5, window_bounds = array<i64: 1, 128, 128>}, {transform_indices = @transform_6, window_bounds = array<i64: 1, 128, 256>}, {transform_indices = @transform_7, window_bounds = array<i64: 1, 256, 128>}, {transform_indices = @transform_8, window_bounds = array<i64: 1, 8, 384>}, {pipeline_mode = #tpu.pipeline_mode<synchronous>, transform_indices = @transform_9, window_bounds = array<i64: 128, 256>}, {transform_indices = @transform_10, window_bounds = array<i64: 2, 24, 256>}]} {
    %c0_i32 = arith.constant 0 : i32
    %0 = arith.cmpi eq, %arg1, %c0_i32 : i32
    %1 = arith.extui %0 : i1 to i32
    %c0_i32_0 = arith.constant 0 : i32
    %2 = arith.cmpi ne, %1, %c0_i32_0 : i32
    scf.if %2 {
      %c0_97 = arith.constant 0 : index
      %c0_98 = arith.constant 0 : index
      %c0_99 = arith.constant 0 : index
      %284 = vector.load %arg2[%c0_97, %c0_98, %c0_99] : memref<2x24x192xf32, #tpu.memory_space<vmem>>, vector<2x24x192xf32>
      %285 = vector.shape_cast %284 : vector<2x24x192xf32> to vector<48x192xf32>
      %286 = arith.truncf %285 : vector<48x192xf32> to vector<48x192xbf16>
      %c0_100 = arith.constant 0 : index
      %c0_101 = arith.constant 0 : index
      %287 = vector.load %arg5[%c0_100, %c0_101] : memref<192x128xbf16, #tpu.memory_space<vmem>>, vector<192x128xbf16>
      %cst_102 = arith.constant dense<0.000000e+00> : vector<48x128xf32>
      %288 = tpu.matmul %286, %287, %cst_102 {dimension_numbers = #tpu.dot_dimension_numbers<[1], [0], [0], [1], [0, 0, 1, 1], [], []>} : vector<48x192xbf16>, vector<192x128xbf16>, vector<48x128xf32> -> vector<48x128xf32>
      %c0_103 = arith.constant 0 : index
      %c0_104 = arith.constant 0 : index
      %289 = vector.load %arg4[%c0_103, %c0_104] : memref<24x128xf32, #tpu.memory_space<vmem>>, vector<24x128xf32>
      %290 = tpu.concatenate %289, %289 in 0 : vector<24x128xf32>, vector<24x128xf32> -> vector<48x128xf32>
      %291 = arith.addf %288, %290 : vector<48x128xf32>
      %c0_105 = arith.constant 0 : index
      %c0_106 = arith.constant 0 : index
      %292 = vector.load %arg3[%c0_105, %c0_106] : memref<8x256xf32, #tpu.memory_space<vmem>>, vector<1x128xf32>
      %c1_107 = arith.constant 1 : index
      %c0_108 = arith.constant 0 : index
      %293 = vector.load %arg3[%c1_107, %c0_108] : memref<8x256xf32, #tpu.memory_space<vmem>>, vector<1x128xf32>
      %cst_109 = arith.constant dense<0.000000e+00> : vector<48xf32>
      %294 = vector.multi_reduction <add>, %291, %cst_109 [1] : vector<48x128xf32> to vector<48xf32>
      %295 = vector.shape_cast %294 : vector<48xf32> to vector<48x1xf32>
      %cst_110 = arith.constant 1.280000e+02 : f32
      %296 = vector.broadcast %cst_110 : f32 to vector<48x1xf32>
      %297 = arith.divf %295, %296 : vector<48x1xf32>
      %298 = vector.broadcast %297 : vector<48x1xf32> to vector<48x128xf32>
      %299 = arith.subf %291, %298 : vector<48x128xf32>
      %300 = arith.mulf %299, %299 : vector<48x128xf32>
      %cst_111 = arith.constant dense<0.000000e+00> : vector<48xf32>
      %301 = vector.multi_reduction <add>, %300, %cst_111 [1] : vector<48x128xf32> to vector<48xf32>
      %302 = vector.shape_cast %301 : vector<48xf32> to vector<48x1xf32>
      %cst_112 = arith.constant 1.280000e+02 : f32
      %303 = vector.broadcast %cst_112 : f32 to vector<48x1xf32>
      %304 = arith.divf %302, %303 : vector<48x1xf32>
      %305 = vector.broadcast %297 : vector<48x1xf32> to vector<48x128xf32>
      %306 = arith.subf %291, %305 : vector<48x128xf32>
      %cst_113 = arith.constant 9.99999974E-6 : f32
      %307 = vector.broadcast %cst_113 : f32 to vector<48x1xf32>
      %308 = arith.addf %304, %307 : vector<48x1xf32>
      %309 = math.rsqrt %308 : vector<48x1xf32>
      %310 = vector.broadcast %309 : vector<48x1xf32> to vector<48x128xf32>
      %311 = arith.mulf %306, %310 : vector<48x128xf32>
      %312 = vector.broadcast %292 : vector<1x128xf32> to vector<48x128xf32>
      %313 = arith.mulf %311, %312 : vector<48x128xf32>
      %314 = vector.broadcast %293 : vector<1x128xf32> to vector<48x128xf32>
      %315 = arith.addf %313, %314 : vector<48x128xf32>
      %c0_114 = arith.constant 0 : index
      %c0_115 = arith.constant 0 : index
      %316 = vector.load %arg13[%c0_114, %c0_115] : memref<48x128xf32, #tpu.memory_space<vmem>>, vector<48x128xf32>
      tpu.vector_store %arg13[%c0_114, %c0_115], %315 {strides = array<i32>} : memref<48x128xf32, #tpu.memory_space<vmem>>, vector<48x128xf32>,
    } else {
    }
    %c0 = arith.constant 0 : index
    %c0_1 = arith.constant 0 : index
    %3 = vector.load %arg13[%c0, %c0_1] : memref<48x128xf32, #tpu.memory_space<vmem>>, vector<48x128xf32>
    %c0_2 = arith.constant 0 : index
    %c0_3 = arith.constant 0 : index
    %c0_4 = arith.constant 0 : index
    %4 = vector.load %arg10[%c0_2, %c0_3, %c0_4] : memref<1x8x384xf32, #tpu.memory_space<vmem>>, vector<1x1x128xf32>
    %5 = vector.shape_cast %4 : vector<1x1x128xf32> to vector<1x128xf32>
    %c0_5 = arith.constant 0 : index
    %c1 = arith.constant 1 : index
    %c0_6 = arith.constant 0 : index
    %6 = vector.load %arg10[%c0_5, %c1, %c0_6] : memref<1x8x384xf32, #tpu.memory_space<vmem>>, vector<1x1x128xf32>
    %7 = vector.shape_cast %6 : vector<1x1x128xf32> to vector<1x128xf32>
    %cst = arith.constant dense<0.000000e+00> : vector<48xf32>
    %8 = vector.multi_reduction <add>, %3, %cst [1] : vector<48x128xf32> to vector<48xf32>
    %9 = vector.shape_cast %8 : vector<48xf32> to vector<48x1xf32>
    %cst_7 = arith.constant 1.280000e+02 : f32
    %10 = vector.broadcast %cst_7 : f32 to vector<48x1xf32>
    %11 = arith.divf %9, %10 : vector<48x1xf32>
    %12 = vector.broadcast %11 : vector<48x1xf32> to vector<48x128xf32>
    %13 = arith.subf %3, %12 : vector<48x128xf32>
    %14 = arith.mulf %13, %13 : vector<48x128xf32>
    %cst_8 = arith.constant dense<0.000000e+00> : vector<48xf32>
    %15 = vector.multi_reduction <add>, %14, %cst_8 [1] : vector<48x128xf32> to vector<48xf32>
    %16 = vector.shape_cast %15 : vector<48xf32> to vector<48x1xf32>
    %cst_9 = arith.constant 1.280000e+02 : f32
    %17 = vector.broadcast %cst_9 : f32 to vector<48x1xf32>
    %18 = arith.divf %16, %17 : vector<48x1xf32>
    %19 = vector.broadcast %11 : vector<48x1xf32> to vector<48x128xf32>
    %20 = arith.subf %3, %19 : vector<48x128xf32>
    %cst_10 = arith.constant 9.99999974E-6 : f32
    %21 = vector.broadcast %cst_10 : f32 to vector<48x1xf32>
    %22 = arith.addf %18, %21 : vector<48x1xf32>
    %23 = math.rsqrt %22 : vector<48x1xf32>
    %24 = vector.broadcast %23 : vector<48x1xf32> to vector<48x128xf32>
    %25 = arith.mulf %20, %24 : vector<48x128xf32>
    %26 = vector.broadcast %5 : vector<1x128xf32> to vector<48x128xf32>
    %27 = arith.mulf %25, %26 : vector<48x128xf32>
    %28 = vector.broadcast %7 : vector<1x128xf32> to vector<48x128xf32>
    %29 = arith.addf %27, %28 : vector<48x128xf32>
    %30 = arith.truncf %29 : vector<48x128xf32> to vector<48x128xbf16>
    %c0_11 = arith.constant 0 : index
    %c0_12 = arith.constant 0 : index
    %c0_13 = arith.constant 0 : index
    %31 = vector.load %arg6[%c0_11, %c0_12, %c0_13] : memref<1x128x384xbf16, #tpu.memory_space<vmem>>, vector<1x128x384xbf16>
    %32 = vector.shape_cast %31 : vector<1x128x384xbf16> to vector<128x384xbf16>
    %cst_14 = arith.constant dense<0.000000e+00> : vector<48x384xf32>
    %33 = tpu.matmul %30, %32, %cst_14 {dimension_numbers = #tpu.dot_dimension_numbers<[1], [0], [0], [1], [0, 0, 1, 1], [], []>} : vector<48x128xbf16>, vector<128x384xbf16>, vector<48x384xf32> -> vector<48x384xf32>
    %c0_15 = arith.constant 0 : index
    %c7 = arith.constant 7 : index
    %c0_16 = arith.constant 0 : index
    %34 = vector.load %arg10[%c0_15, %c7, %c0_16] : memref<1x8x384xf32, #tpu.memory_space<vmem>>, vector<1x1x384xf32>
    %35 = vector.shape_cast %34 : vector<1x1x384xf32> to vector<1x384xf32>
    %36 = vector.broadcast %35 : vector<1x384xf32> to vector<48x384xf32>
    %37 = arith.addf %33, %36 : vector<48x384xf32>
    %38 = tpu.iota {dimensions = array<i32: 1>} : vector<24x24xi32>
    %c17_i32 = arith.constant 17 : i32
    %39 = vector.broadcast %c17_i32 : i32 to vector<24x24xi32>
    %40 = arith.cmpi slt, %38, %39 : vector<24x24xi32>
    %41 = vector.extract_strided_slice %37 {offsets = [0, 0], sizes = [24, 32], strides = [1, 1]} : vector<48x384xf32> to vector<24x32xf32>
    %cst_17 = arith.constant 0.176776692 : f32
    %42 = vector.broadcast %cst_17 : f32 to vector<24x32xf32>
    %43 = arith.mulf %41, %42 : vector<24x32xf32>
    %44 = arith.truncf %43 : vector<24x32xf32> to vector<24x32xbf16>
    %45 = vector.extract_strided_slice %37 {offsets = [0, 128], sizes = [24, 32], strides = [1, 1]} : vector<48x384xf32> to vector<24x32xf32>
    %46 = arith.truncf %45 : vector<24x32xf32> to vector<24x32xbf16>
    %47 = vector.extract_strided_slice %37 {offsets = [0, 256], sizes = [24, 32], strides = [1, 1]} : vector<48x384xf32> to vector<24x32xf32>
    %48 = arith.truncf %47 : vector<24x32xf32> to vector<24x32xbf16>
    "tpu.trace_start"() <{level = 10 : i32, message = "qd,kd->qk"}> : () -> ()
    %cst_18 = arith.constant dense<0.000000e+00> : vector<24x24xf32>
    %49 = tpu.matmul %44, %46, %cst_18 {dimension_numbers = #tpu.dot_dimension_numbers<[1], [1], [0], [0], [0, 0, 1, 0], [], []>} : vector<24x32xbf16>, vector<24x32xbf16>, vector<24x24xf32> -> vector<24x24xf32>
    %cst_19 = arith.constant -1.000000e+09 : f32
    "tpu.trace_stop"() : () -> ()
    %50 = vector.broadcast %cst_19 : f32 to vector<24x24xf32>
    %51 = arith.select %40, %49, %50 : vector<24x24xi1>, vector<24x24xf32>
    %cst_20 = arith.constant dense<0xFF800000> : vector<24xf32>
    %52 = vector.multi_reduction <maximumf>, %51, %cst_20 [1] : vector<24x24xf32> to vector<24xf32>
    %53 = vector.shape_cast %52 : vector<24xf32> to vector<24x1xf32>
    %54 = vector.broadcast %53 : vector<24x1xf32> to vector<24x24xf32>
    %55 = arith.subf %51, %54 : vector<24x24xf32>
    %56 = math.exp %55 : vector<24x24xf32>
    %cst_21 = arith.constant dense<0.000000e+00> : vector<24xf32>
    %57 = vector.multi_reduction <add>, %56, %cst_21 [1] : vector<24x24xf32> to vector<24xf32>
    %58 = vector.shape_cast %57 : vector<24xf32> to vector<24x1xf32>
    %59 = vector.broadcast %58 : vector<24x1xf32> to vector<24x24xf32>
    %60 = arith.divf %56, %59 : vector<24x24xf32>
    %61 = arith.truncf %60 : vector<24x24xf32> to vector<24x24xbf16>
    %cst_22 = arith.constant dense<0.000000e+00> : vector<24x32xf32>
    %62 = tpu.matmul %61, %48, %cst_22 {dimension_numbers = #tpu.dot_dimension_numbers<[1], [0], [0], [1], [0, 0, 1, 1], [], []>} : vector<24x24xbf16>, vector<24x32xbf16>, vector<24x32xf32> -> vector<24x32xf32>
    %63 = vector.extract_strided_slice %37 {offsets = [0, 32], sizes = [24, 32], strides = [1, 1]} : vector<48x384xf32> to vector<24x32xf32>
    %cst_23 = arith.constant 0.176776692 : f32
    %64 = vector.broadcast %cst_23 : f32 to vector<24x32xf32>
    %65 = arith.mulf %63, %64 : vector<24x32xf32>
    %66 = arith.truncf %65 : vector<24x32xf32> to vector<24x32xbf16>
    %67 = vector.extract_strided_slice %37 {offsets = [0, 160], sizes = [24, 32], strides = [1, 1]} : vector<48x384xf32> to vector<24x32xf32>
    %68 = arith.truncf %67 : vector<24x32xf32> to vector<24x32xbf16>
    %69 = vector.extract_strided_slice %37 {offsets = [0, 288], sizes = [24, 32], strides = [1, 1]} : vector<48x384xf32> to vector<24x32xf32>
    %70 = arith.truncf %69 : vector<24x32xf32> to vector<24x32xbf16>
    "tpu.trace_start"() <{level = 10 : i32, message = "qd,kd->qk"}> : () -> ()
    %cst_24 = arith.constant dense<0.000000e+00> : vector<24x24xf32>
    %71 = tpu.matmul %66, %68, %cst_24 {dimension_numbers = #tpu.dot_dimension_numbers<[1], [1], [0], [0], [0, 0, 1, 0], [], []>} : vector<24x32xbf16>, vector<24x32xbf16>, vector<24x24xf32> -> vector<24x24xf32>
    %cst_25 = arith.constant -1.000000e+09 : f32
    "tpu.trace_stop"() : () -> ()
    %72 = vector.broadcast %cst_25 : f32 to vector<24x24xf32>
    %73 = arith.select %40, %71, %72 : vector<24x24xi1>, vector<24x24xf32>
    %cst_26 = arith.constant dense<0xFF800000> : vector<24xf32>
    %74 = vector.multi_reduction <maximumf>, %73, %cst_26 [1] : vector<24x24xf32> to vector<24xf32>
    %75 = vector.shape_cast %74 : vector<24xf32> to vector<24x1xf32>
    %76 = vector.broadcast %75 : vector<24x1xf32> to vector<24x24xf32>
    %77 = arith.subf %73, %76 : vector<24x24xf32>
    %78 = math.exp %77 : vector<24x24xf32>
    %cst_27 = arith.constant dense<0.000000e+00> : vector<24xf32>
    %79 = vector.multi_reduction <add>, %78, %cst_27 [1] : vector<24x24xf32> to vector<24xf32>
    %80 = vector.shape_cast %79 : vector<24xf32> to vector<24x1xf32>
    %81 = vector.broadcast %80 : vector<24x1xf32> to vector<24x24xf32>
    %82 = arith.divf %78, %81 : vector<24x24xf32>
    %83 = arith.truncf %82 : vector<24x24xf32> to vector<24x24xbf16>
    %cst_28 = arith.constant dense<0.000000e+00> : vector<24x32xf32>
    %84 = tpu.matmul %83, %70, %cst_28 {dimension_numbers = #tpu.dot_dimension_numbers<[1], [0], [0], [1], [0, 0, 1, 1], [], []>} : vector<24x24xbf16>, vector<24x32xbf16>, vector<24x32xf32> -> vector<24x32xf32>
    %85 = vector.extract_strided_slice %37 {offsets = [0, 64], sizes = [24, 32], strides = [1, 1]} : vector<48x384xf32> to vector<24x32xf32>
    %cst_29 = arith.constant 0.176776692 : f32
    %86 = vector.broadcast %cst_29 : f32 to vector<24x32xf32>
    %87 = arith.mulf %85, %86 : vector<24x32xf32>
    %88 = arith.truncf %87 : vector<24x32xf32> to vector<24x32xbf16>
    %89 = vector.extract_strided_slice %37 {offsets = [0, 192], sizes = [24, 32], strides = [1, 1]} : vector<48x384xf32> to vector<24x32xf32>
    %90 = arith.truncf %89 : vector<24x32xf32> to vector<24x32xbf16>
    %91 = vector.extract_strided_slice %37 {offsets = [0, 320], sizes = [24, 32], strides = [1, 1]} : vector<48x384xf32> to vector<24x32xf32>
    %92 = arith.truncf %91 : vector<24x32xf32> to vector<24x32xbf16>
    "tpu.trace_start"() <{level = 10 : i32, message = "qd,kd->qk"}> : () -> ()
    %cst_30 = arith.constant dense<0.000000e+00> : vector<24x24xf32>
    %93 = tpu.matmul %88, %90, %cst_30 {dimension_numbers = #tpu.dot_dimension_numbers<[1], [1], [0], [0], [0, 0, 1, 0], [], []>} : vector<24x32xbf16>, vector<24x32xbf16>, vector<24x24xf32> -> vector<24x24xf32>
    %cst_31 = arith.constant -1.000000e+09 : f32
    "tpu.trace_stop"() : () -> ()
    %94 = vector.broadcast %cst_31 : f32 to vector<24x24xf32>
    %95 = arith.select %40, %93, %94 : vector<24x24xi1>, vector<24x24xf32>
    %cst_32 = arith.constant dense<0xFF800000> : vector<24xf32>
    %96 = vector.multi_reduction <maximumf>, %95, %cst_32 [1] : vector<24x24xf32> to vector<24xf32>
    %97 = vector.shape_cast %96 : vector<24xf32> to vector<24x1xf32>
    %98 = vector.broadcast %97 : vector<24x1xf32> to vector<24x24xf32>
    %99 = arith.subf %95, %98 : vector<24x24xf32>
    %100 = math.exp %99 : vector<24x24xf32>
    %cst_33 = arith.constant dense<0.000000e+00> : vector<24xf32>
    %101 = vector.multi_reduction <add>, %100, %cst_33 [1] : vector<24x24xf32> to vector<24xf32>
    %102 = vector.shape_cast %101 : vector<24xf32> to vector<24x1xf32>
    %103 = vector.broadcast %102 : vector<24x1xf32> to vector<24x24xf32>
    %104 = arith.divf %100, %103 : vector<24x24xf32>
    %105 = arith.truncf %104 : vector<24x24xf32> to vector<24x24xbf16>
    %cst_34 = arith.constant dense<0.000000e+00> : vector<24x32xf32>
    %106 = tpu.matmul %105, %92, %cst_34 {dimension_numbers = #tpu.dot_dimension_numbers<[1], [0], [0], [1], [0, 0, 1, 1], [], []>} : vector<24x24xbf16>, vector<24x32xbf16>, vector<24x32xf32> -> vector<24x32xf32>
    %107 = vector.extract_strided_slice %37 {offsets = [0, 96], sizes = [24, 32], strides = [1, 1]} : vector<48x384xf32> to vector<24x32xf32>
    %cst_35 = arith.constant 0.176776692 : f32
    %108 = vector.broadcast %cst_35 : f32 to vector<24x32xf32>
    %109 = arith.mulf %107, %108 : vector<24x32xf32>
    %110 = arith.truncf %109 : vector<24x32xf32> to vector<24x32xbf16>
    %111 = vector.extract_strided_slice %37 {offsets = [0, 224], sizes = [24, 32], strides = [1, 1]} : vector<48x384xf32> to vector<24x32xf32>
    %112 = arith.truncf %111 : vector<24x32xf32> to vector<24x32xbf16>
    %113 = vector.extract_strided_slice %37 {offsets = [0, 352], sizes = [24, 32], strides = [1, 1]} : vector<48x384xf32> to vector<24x32xf32>
    %114 = arith.truncf %113 : vector<24x32xf32> to vector<24x32xbf16>
    "tpu.trace_start"() <{level = 10 : i32, message = "qd,kd->qk"}> : () -> ()
    %cst_36 = arith.constant dense<0.000000e+00> : vector<24x24xf32>
    %115 = tpu.matmul %110, %112, %cst_36 {dimension_numbers = #tpu.dot_dimension_numbers<[1], [1], [0], [0], [0, 0, 1, 0], [], []>} : vector<24x32xbf16>, vector<24x32xbf16>, vector<24x24xf32> -> vector<24x24xf32>
    %cst_37 = arith.constant -1.000000e+09 : f32
    "tpu.trace_stop"() : () -> ()
    %116 = vector.broadcast %cst_37 : f32 to vector<24x24xf32>
    %117 = arith.select %40, %115, %116 : vector<24x24xi1>, vector<24x24xf32>
    %cst_38 = arith.constant dense<0xFF800000> : vector<24xf32>
    %118 = vector.multi_reduction <maximumf>, %117, %cst_38 [1] : vector<24x24xf32> to vector<24xf32>
    %119 = vector.shape_cast %118 : vector<24xf32> to vector<24x1xf32>
    %120 = vector.broadcast %119 : vector<24x1xf32> to vector<24x24xf32>
    %121 = arith.subf %117, %120 : vector<24x24xf32>
    %122 = math.exp %121 : vector<24x24xf32>
    %cst_39 = arith.constant dense<0.000000e+00> : vector<24xf32>
    %123 = vector.multi_reduction <add>, %122, %cst_39 [1] : vector<24x24xf32> to vector<24xf32>
    %124 = vector.shape_cast %123 : vector<24xf32> to vector<24x1xf32>
    %125 = vector.broadcast %124 : vector<24x1xf32> to vector<24x24xf32>
    %126 = arith.divf %122, %125 : vector<24x24xf32>
    %127 = arith.truncf %126 : vector<24x24xf32> to vector<24x24xbf16>
    %cst_40 = arith.constant dense<0.000000e+00> : vector<24x32xf32>
    %128 = tpu.matmul %127, %114, %cst_40 {dimension_numbers = #tpu.dot_dimension_numbers<[1], [0], [0], [1], [0, 0, 1, 1], [], []>} : vector<24x24xbf16>, vector<24x32xbf16>, vector<24x32xf32> -> vector<24x32xf32>
    %129 = tpu.concatenate %62, %84, %106, %128 in 1 : vector<24x32xf32>, vector<24x32xf32>, vector<24x32xf32>, vector<24x32xf32> -> vector<24x128xf32>
    %130 = vector.extract_strided_slice %37 {offsets = [24, 0], sizes = [24, 32], strides = [1, 1]} : vector<48x384xf32> to vector<24x32xf32>
    %cst_41 = arith.constant 0.176776692 : f32
    %131 = vector.broadcast %cst_41 : f32 to vector<24x32xf32>
    %132 = arith.mulf %130, %131 : vector<24x32xf32>
    %133 = arith.truncf %132 : vector<24x32xf32> to vector<24x32xbf16>
    %134 = vector.extract_strided_slice %37 {offsets = [24, 128], sizes = [24, 32], strides = [1, 1]} : vector<48x384xf32> to vector<24x32xf32>
    %135 = arith.truncf %134 : vector<24x32xf32> to vector<24x32xbf16>
    %136 = vector.extract_strided_slice %37 {offsets = [24, 256], sizes = [24, 32], strides = [1, 1]} : vector<48x384xf32> to vector<24x32xf32>
    %137 = arith.truncf %136 : vector<24x32xf32> to vector<24x32xbf16>
    "tpu.trace_start"() <{level = 10 : i32, message = "qd,kd->qk"}> : () -> ()
    %cst_42 = arith.constant dense<0.000000e+00> : vector<24x24xf32>
    %138 = tpu.matmul %133, %135, %cst_42 {dimension_numbers = #tpu.dot_dimension_numbers<[1], [1], [0], [0], [0, 0, 1, 0], [], []>} : vector<24x32xbf16>, vector<24x32xbf16>, vector<24x24xf32> -> vector<24x24xf32>
    %cst_43 = arith.constant -1.000000e+09 : f32
    "tpu.trace_stop"() : () -> ()
    %139 = vector.broadcast %cst_43 : f32 to vector<24x24xf32>
    %140 = arith.select %40, %138, %139 : vector<24x24xi1>, vector<24x24xf32>
    %cst_44 = arith.constant dense<0xFF800000> : vector<24xf32>
    %141 = vector.multi_reduction <maximumf>, %140, %cst_44 [1] : vector<24x24xf32> to vector<24xf32>
    %142 = vector.shape_cast %141 : vector<24xf32> to vector<24x1xf32>
    %143 = vector.broadcast %142 : vector<24x1xf32> to vector<24x24xf32>
    %144 = arith.subf %140, %143 : vector<24x24xf32>
    %145 = math.exp %144 : vector<24x24xf32>
    %cst_45 = arith.constant dense<0.000000e+00> : vector<24xf32>
    %146 = vector.multi_reduction <add>, %145, %cst_45 [1] : vector<24x24xf32> to vector<24xf32>
    %147 = vector.shape_cast %146 : vector<24xf32> to vector<24x1xf32>
    %148 = vector.broadcast %147 : vector<24x1xf32> to vector<24x24xf32>
    %149 = arith.divf %145, %148 : vector<24x24xf32>
    %150 = arith.truncf %149 : vector<24x24xf32> to vector<24x24xbf16>
    %cst_46 = arith.constant dense<0.000000e+00> : vector<24x32xf32>
    %151 = tpu.matmul %150, %137, %cst_46 {dimension_numbers = #tpu.dot_dimension_numbers<[1], [0], [0], [1], [0, 0, 1, 1], [], []>} : vector<24x24xbf16>, vector<24x32xbf16>, vector<24x32xf32> -> vector<24x32xf32>
    %152 = vector.extract_strided_slice %37 {offsets = [24, 32], sizes = [24, 32], strides = [1, 1]} : vector<48x384xf32> to vector<24x32xf32>
    %cst_47 = arith.constant 0.176776692 : f32
    %153 = vector.broadcast %cst_47 : f32 to vector<24x32xf32>
    %154 = arith.mulf %152, %153 : vector<24x32xf32>
    %155 = arith.truncf %154 : vector<24x32xf32> to vector<24x32xbf16>
    %156 = vector.extract_strided_slice %37 {offsets = [24, 160], sizes = [24, 32], strides = [1, 1]} : vector<48x384xf32> to vector<24x32xf32>
    %157 = arith.truncf %156 : vector<24x32xf32> to vector<24x32xbf16>
    %158 = vector.extract_strided_slice %37 {offsets = [24, 288], sizes = [24, 32], strides = [1, 1]} : vector<48x384xf32> to vector<24x32xf32>
    %159 = arith.truncf %158 : vector<24x32xf32> to vector<24x32xbf16>
    "tpu.trace_start"() <{level = 10 : i32, message = "qd,kd->qk"}> : () -> ()
    %cst_48 = arith.constant dense<0.000000e+00> : vector<24x24xf32>
    %160 = tpu.matmul %155, %157, %cst_48 {dimension_numbers = #tpu.dot_dimension_numbers<[1], [1], [0], [0], [0, 0, 1, 0], [], []>} : vector<24x32xbf16>, vector<24x32xbf16>, vector<24x24xf32> -> vector<24x24xf32>
    %cst_49 = arith.constant -1.000000e+09 : f32
    "tpu.trace_stop"() : () -> ()
    %161 = vector.broadcast %cst_49 : f32 to vector<24x24xf32>
    %162 = arith.select %40, %160, %161 : vector<24x24xi1>, vector<24x24xf32>
    %cst_50 = arith.constant dense<0xFF800000> : vector<24xf32>
    %163 = vector.multi_reduction <maximumf>, %162, %cst_50 [1] : vector<24x24xf32> to vector<24xf32>
    %164 = vector.shape_cast %163 : vector<24xf32> to vector<24x1xf32>
    %165 = vector.broadcast %164 : vector<24x1xf32> to vector<24x24xf32>
    %166 = arith.subf %162, %165 : vector<24x24xf32>
    %167 = math.exp %166 : vector<24x24xf32>
    %cst_51 = arith.constant dense<0.000000e+00> : vector<24xf32>
    %168 = vector.multi_reduction <add>, %167, %cst_51 [1] : vector<24x24xf32> to vector<24xf32>
    %169 = vector.shape_cast %168 : vector<24xf32> to vector<24x1xf32>
    %170 = vector.broadcast %169 : vector<24x1xf32> to vector<24x24xf32>
    %171 = arith.divf %167, %170 : vector<24x24xf32>
    %172 = arith.truncf %171 : vector<24x24xf32> to vector<24x24xbf16>
    %cst_52 = arith.constant dense<0.000000e+00> : vector<24x32xf32>
    %173 = tpu.matmul %172, %159, %cst_52 {dimension_numbers = #tpu.dot_dimension_numbers<[1], [0], [0], [1], [0, 0, 1, 1], [], []>} : vector<24x24xbf16>, vector<24x32xbf16>, vector<24x32xf32> -> vector<24x32xf32>
    %174 = vector.extract_strided_slice %37 {offsets = [24, 64], sizes = [24, 32], strides = [1, 1]} : vector<48x384xf32> to vector<24x32xf32>
    %cst_53 = arith.constant 0.176776692 : f32
    %175 = vector.broadcast %cst_53 : f32 to vector<24x32xf32>
    %176 = arith.mulf %174, %175 : vector<24x32xf32>
    %177 = arith.truncf %176 : vector<24x32xf32> to vector<24x32xbf16>
    %178 = vector.extract_strided_slice %37 {offsets = [24, 192], sizes = [24, 32], strides = [1, 1]} : vector<48x384xf32> to vector<24x32xf32>
    %179 = arith.truncf %178 : vector<24x32xf32> to vector<24x32xbf16>
    %180 = vector.extract_strided_slice %37 {offsets = [24, 320], sizes = [24, 32], strides = [1, 1]} : vector<48x384xf32> to vector<24x32xf32>
    %181 = arith.truncf %180 : vector<24x32xf32> to vector<24x32xbf16>
    "tpu.trace_start"() <{level = 10 : i32, message = "qd,kd->qk"}> : () -> ()
    %cst_54 = arith.constant dense<0.000000e+00> : vector<24x24xf32>
    %182 = tpu.matmul %177, %179, %cst_54 {dimension_numbers = #tpu.dot_dimension_numbers<[1], [1], [0], [0], [0, 0, 1, 0], [], []>} : vector<24x32xbf16>, vector<24x32xbf16>, vector<24x24xf32> -> vector<24x24xf32>
    %cst_55 = arith.constant -1.000000e+09 : f32
    "tpu.trace_stop"() : () -> ()
    %183 = vector.broadcast %cst_55 : f32 to vector<24x24xf32>
    %184 = arith.select %40, %182, %183 : vector<24x24xi1>, vector<24x24xf32>
    %cst_56 = arith.constant dense<0xFF800000> : vector<24xf32>
    %185 = vector.multi_reduction <maximumf>, %184, %cst_56 [1] : vector<24x24xf32> to vector<24xf32>
    %186 = vector.shape_cast %185 : vector<24xf32> to vector<24x1xf32>
    %187 = vector.broadcast %186 : vector<24x1xf32> to vector<24x24xf32>
    %188 = arith.subf %184, %187 : vector<24x24xf32>
    %189 = math.exp %188 : vector<24x24xf32>
    %cst_57 = arith.constant dense<0.000000e+00> : vector<24xf32>
    %190 = vector.multi_reduction <add>, %189, %cst_57 [1] : vector<24x24xf32> to vector<24xf32>
    %191 = vector.shape_cast %190 : vector<24xf32> to vector<24x1xf32>
    %192 = vector.broadcast %191 : vector<24x1xf32> to vector<24x24xf32>
    %193 = arith.divf %189, %192 : vector<24x24xf32>
    %194 = arith.truncf %193 : vector<24x24xf32> to vector<24x24xbf16>
    %cst_58 = arith.constant dense<0.000000e+00> : vector<24x32xf32>
    %195 = tpu.matmul %194, %181, %cst_58 {dimension_numbers = #tpu.dot_dimension_numbers<[1], [0], [0], [1], [0, 0, 1, 1], [], []>} : vector<24x24xbf16>, vector<24x32xbf16>, vector<24x32xf32> -> vector<24x32xf32>
    %196 = vector.extract_strided_slice %37 {offsets = [24, 96], sizes = [24, 32], strides = [1, 1]} : vector<48x384xf32> to vector<24x32xf32>
    %cst_59 = arith.constant 0.176776692 : f32
    %197 = vector.broadcast %cst_59 : f32 to vector<24x32xf32>
    %198 = arith.mulf %196, %197 : vector<24x32xf32>
    %199 = arith.truncf %198 : vector<24x32xf32> to vector<24x32xbf16>
    %200 = vector.extract_strided_slice %37 {offsets = [24, 224], sizes = [24, 32], strides = [1, 1]} : vector<48x384xf32> to vector<24x32xf32>
    %201 = arith.truncf %200 : vector<24x32xf32> to vector<24x32xbf16>
    %202 = vector.extract_strided_slice %37 {offsets = [24, 352], sizes = [24, 32], strides = [1, 1]} : vector<48x384xf32> to vector<24x32xf32>
    %203 = arith.truncf %202 : vector<24x32xf32> to vector<24x32xbf16>
    "tpu.trace_start"() <{level = 10 : i32, message = "qd,kd->qk"}> : () -> ()
    %cst_60 = arith.constant dense<0.000000e+00> : vector<24x24xf32>
    %204 = tpu.matmul %199, %201, %cst_60 {dimension_numbers = #tpu.dot_dimension_numbers<[1], [1], [0], [0], [0, 0, 1, 0], [], []>} : vector<24x32xbf16>, vector<24x32xbf16>, vector<24x24xf32> -> vector<24x24xf32>
    %cst_61 = arith.constant -1.000000e+09 : f32
    "tpu.trace_stop"() : () -> ()
    %205 = vector.broadcast %cst_61 : f32 to vector<24x24xf32>
    %206 = arith.select %40, %204, %205 : vector<24x24xi1>, vector<24x24xf32>
    %cst_62 = arith.constant dense<0xFF800000> : vector<24xf32>
    %207 = vector.multi_reduction <maximumf>, %206, %cst_62 [1] : vector<24x24xf32> to vector<24xf32>
    %208 = vector.shape_cast %207 : vector<24xf32> to vector<24x1xf32>
    %209 = vector.broadcast %208 : vector<24x1xf32> to vector<24x24xf32>
    %210 = arith.subf %206, %209 : vector<24x24xf32>
    %211 = math.exp %210 : vector<24x24xf32>
    %cst_63 = arith.constant dense<0.000000e+00> : vector<24xf32>
    %212 = vector.multi_reduction <add>, %211, %cst_63 [1] : vector<24x24xf32> to vector<24xf32>
    %213 = vector.shape_cast %212 : vector<24xf32> to vector<24x1xf32>
    %214 = vector.broadcast %213 : vector<24x1xf32> to vector<24x24xf32>
    %215 = arith.divf %211, %214 : vector<24x24xf32>
    %216 = arith.truncf %215 : vector<24x24xf32> to vector<24x24xbf16>
    %cst_64 = arith.constant dense<0.000000e+00> : vector<24x32xf32>
    %217 = tpu.matmul %216, %203, %cst_64 {dimension_numbers = #tpu.dot_dimension_numbers<[1], [0], [0], [1], [0, 0, 1, 1], [], []>} : vector<24x24xbf16>, vector<24x32xbf16>, vector<24x32xf32> -> vector<24x32xf32>
    %218 = tpu.concatenate %151, %173, %195, %217 in 1 : vector<24x32xf32>, vector<24x32xf32>, vector<24x32xf32>, vector<24x32xf32> -> vector<24x128xf32>
    %219 = tpu.concatenate %129, %218 in 0 : vector<24x128xf32>, vector<24x128xf32> -> vector<48x128xf32>
    %220 = arith.truncf %219 : vector<48x128xf32> to vector<48x128xbf16>
    %c0_65 = arith.constant 0 : index
    %c0_66 = arith.constant 0 : index
    %c0_67 = arith.constant 0 : index
    %221 = vector.load %arg7[%c0_65, %c0_66, %c0_67] : memref<1x128x128xbf16, #tpu.memory_space<vmem>>, vector<1x128x128xbf16>
    %222 = vector.shape_cast %221 : vector<1x128x128xbf16> to vector<128x128xbf16>
    %cst_68 = arith.constant dense<0.000000e+00> : vector<48x128xf32>
    %223 = tpu.matmul %220, %222, %cst_68 {dimension_numbers = #tpu.dot_dimension_numbers<[1], [0], [0], [1], [0, 0, 1, 1], [], []>} : vector<48x128xbf16>, vector<128x128xbf16>, vector<48x128xf32> -> vector<48x128xf32>
    %c0_69 = arith.constant 0 : index
    %c4 = arith.constant 4 : index
    %c0_70 = arith.constant 0 : index
    %224 = vector.load %arg10[%c0_69, %c4, %c0_70] : memref<1x8x384xf32, #tpu.memory_space<vmem>>, vector<1x1x128xf32>
    %225 = vector.shape_cast %224 : vector<1x1x128xf32> to vector<1x128xf32>
    %226 = vector.broadcast %225 : vector<1x128xf32> to vector<48x128xf32>
    %227 = arith.addf %223, %226 : vector<48x128xf32>
    %228 = arith.addf %3, %227 : vector<48x128xf32>
    %c0_71 = arith.constant 0 : index
    %c2 = arith.constant 2 : index
    %c0_72 = arith.constant 0 : index
    %229 = vector.load %arg10[%c0_71, %c2, %c0_72] : memref<1x8x384xf32, #tpu.memory_space<vmem>>, vector<1x1x128xf32>
    %230 = vector.shape_cast %229 : vector<1x1x128xf32> to vector<1x128xf32>
    %c0_73 = arith.constant 0 : index
    %c3 = arith.constant 3 : index
    %c0_74 = arith.constant 0 : index
    %231 = vector.load %arg10[%c0_73, %c3, %c0_74] : memref<1x8x384xf32, #tpu.memory_space<vmem>>, vector<1x1x128xf32>
    %232 = vector.shape_cast %231 : vector<1x1x128xf32> to vector<1x128xf32>
    %cst_75 = arith.constant dense<0.000000e+00> : vector<48xf32>
    %233 = vector.multi_reduction <add>, %228, %cst_75 [1] : vector<48x128xf32> to vector<48xf32>
    %234 = vector.shape_cast %233 : vector<48xf32> to vector<48x1xf32>
    %cst_76 = arith.constant 1.280000e+02 : f32
    %235 = vector.broadcast %cst_76 : f32 to vector<48x1xf32>
    %236 = arith.divf %234, %235 : vector<48x1xf32>
    %237 = vector.broadcast %236 : vector<48x1xf32> to vector<48x128xf32>
    %238 = arith.subf %228, %237 : vector<48x128xf32>
    %239 = arith.mulf %238, %238 : vector<48x128xf32>
    %cst_77 = arith.constant dense<0.000000e+00> : vector<48xf32>
    %240 = vector.multi_reduction <add>, %239, %cst_77 [1] : vector<48x128xf32> to vector<48xf32>
    %241 = vector.shape_cast %240 : vector<48xf32> to vector<48x1xf32>
    %cst_78 = arith.constant 1.280000e+02 : f32
    %242 = vector.broadcast %cst_78 : f32 to vector<48x1xf32>
    %243 = arith.divf %241, %242 : vector<48x1xf32>
    %244 = vector.broadcast %236 : vector<48x1xf32> to vector<48x128xf32>
    %245 = arith.subf %228, %244 : vector<48x128xf32>
    %cst_79 = arith.constant 9.99999974E-6 : f32
    %246 = vector.broadcast %cst_79 : f32 to vector<48x1xf32>
    %247 = arith.addf %243, %246 : vector<48x1xf32>
    %248 = math.rsqrt %247 : vector<48x1xf32>
    %249 = vector.broadcast %248 : vector<48x1xf32> to vector<48x128xf32>
    %250 = arith.mulf %245, %249 : vector<48x128xf32>
    %251 = vector.broadcast %230 : vector<1x128xf32> to vector<48x128xf32>
    %252 = arith.mulf %250, %251 : vector<48x128xf32>
    %253 = vector.broadcast %232 : vector<1x128xf32> to vector<48x128xf32>
    %254 = arith.addf %252, %253 : vector<48x128xf32>
    %255 = arith.truncf %254 : vector<48x128xf32> to vector<48x128xbf16>
    %c0_80 = arith.constant 0 : index
    %c0_81 = arith.constant 0 : index
    %c0_82 = arith.constant 0 : index
    %256 = vector.load %arg8[%c0_80, %c0_81, %c0_82] : memref<1x128x256xbf16, #tpu.memory_space<vmem>>, vector<1x128x256xbf16>
    %257 = vector.shape_cast %256 : vector<1x128x256xbf16> to vector<128x256xbf16>
    %cst_83 = arith.constant dense<0.000000e+00> : vector<48x256xf32>
    %258 = tpu.matmul %255, %257, %cst_83 {dimension_numbers = #tpu.dot_dimension_numbers<[1], [0], [0], [1], [0, 0, 1, 1], [], []>} : vector<48x128xbf16>, vector<128x256xbf16>, vector<48x256xf32> -> vector<48x256xf32>
    %c0_84 = arith.constant 0 : index
    %c5 = arith.constant 5 : index
    %c0_85 = arith.constant 0 : index
    %259 = vector.load %arg10[%c0_84, %c5, %c0_85] : memref<1x8x384xf32, #tpu.memory_space<vmem>>, vector<1x1x256xf32>
    %260 = vector.shape_cast %259 : vector<1x1x256xf32> to vector<1x256xf32>
    %261 = vector.broadcast %260 : vector<1x256xf32> to vector<48x256xf32>
    %262 = arith.addf %258, %261 : vector<48x256xf32>
    %cst_86 = arith.constant 1.702000e+00 : f32
    %263 = vector.broadcast %cst_86 : f32 to vector<48x256xf32>
    %264 = arith.mulf %263, %262 : vector<48x256xf32>
    %265 = arith.negf %264 : vector<48x256xf32>
    %266 = math.exp %265 : vector<48x256xf32>
    %cst_87 = arith.constant 1.000000e+00 : f32
    %267 = vector.broadcast %cst_87 : f32 to vector<48x256xf32>
    %268 = arith.addf %267, %266 : vector<48x256xf32>
    %269 = arith.divf %267, %268 : vector<48x256xf32>
    %270 = arith.mulf %262, %269 : vector<48x256xf32>
    %271 = arith.truncf %270 : vector<48x256xf32> to vector<48x256xbf16>
    %c0_88 = arith.constant 0 : index
    %c0_89 = arith.constant 0 : index
    %c0_90 = arith.constant 0 : index
    %272 = vector.load %arg9[%c0_88, %c0_89, %c0_90] : memref<1x256x128xbf16, #tpu.memory_space<vmem>>, vector<1x256x128xbf16>
    %273 = vector.shape_cast %272 : vector<1x256x128xbf16> to vector<256x128xbf16>
    %cst_91 = arith.constant dense<0.000000e+00> : vector<48x128xf32>
    %274 = tpu.matmul %271, %273, %cst_91 {dimension_numbers = #tpu.dot_dimension_numbers<[1], [0], [0], [1], [0, 0, 1, 1], [], []>} : vector<48x256xbf16>, vector<256x128xbf16>, vector<48x128xf32> -> vector<48x128xf32>
    %c0_92 = arith.constant 0 : index
    %c6 = arith.constant 6 : index
    %c0_93 = arith.constant 0 : index
    %275 = vector.load %arg10[%c0_92, %c6, %c0_93] : memref<1x8x384xf32, #tpu.memory_space<vmem>>, vector<1x1x128xf32>
    %276 = vector.shape_cast %275 : vector<1x1x128xf32> to vector<1x128xf32>
    %277 = vector.broadcast %276 : vector<1x128xf32> to vector<48x128xf32>
    %278 = arith.addf %274, %277 : vector<48x128xf32>
    %279 = arith.addf %228, %278 : vector<48x128xf32>
    %c0_94 = arith.constant 0 : index
    %c0_95 = arith.constant 0 : index
    %280 = vector.load %arg13[%c0_94, %c0_95] : memref<48x128xf32, #tpu.memory_space<vmem>>, vector<48x128xf32>
    tpu.vector_store %arg13[%c0_94, %c0_95], %279 {strides = array<i32>} : memref<48x128xf32, #tpu.memory_space<vmem>>, vector<48x128xf32>,
    %c2_i32 = arith.constant 2 : i32
    %281 = arith.cmpi eq, %arg1, %c2_i32 : i32
    %282 = arith.extui %281 : i1 to i32
    %c0_i32_96 = arith.constant 0 : i32
    %283 = arith.cmpi ne, %282, %c0_i32_96 : i32
    scf.if %283 {
      %284 = arith.truncf %279 : vector<48x128xf32> to vector<48x128xbf16>
      %c0_97 = arith.constant 0 : index
      %c0_98 = arith.constant 0 : index
      %285 = vector.load %arg11[%c0_97, %c0_98] : memref<128x256xbf16, #tpu.memory_space<vmem>>, vector<128x256xbf16>
      %cst_99 = arith.constant dense<0.000000e+00> : vector<48x256xf32>
      %286 = tpu.matmul %284, %285, %cst_99 {dimension_numbers = #tpu.dot_dimension_numbers<[1], [0], [0], [1], [0, 0, 1, 1], [], []>} : vector<48x128xbf16>, vector<128x256xbf16>, vector<48x256xf32> -> vector<48x256xf32>
      %c2_100 = arith.constant 2 : index
      %c0_101 = arith.constant 0 : index
      %287 = vector.load %arg3[%c2_100, %c0_101] : memref<8x256xf32, #tpu.memory_space<vmem>>, vector<1x256xf32>
      %288 = vector.broadcast %287 : vector<1x256xf32> to vector<48x256xf32>
      %289 = arith.addf %286, %288 : vector<48x256xf32>
      %290 = vector.shape_cast %289 : vector<48x256xf32> to vector<2x24x256xf32>
      %291 = tpu.iota {dimensions = array<i32: 1>} : vector<2x24x256xi32>
      %c17_i32_102 = arith.constant 17 : i32
      %292 = vector.broadcast %c17_i32_102 : i32 to vector<2x24x256xi32>
      %293 = arith.cmpi slt, %291, %292 : vector<2x24x256xi32>
      %cst_103 = arith.constant 0.000000e+00 : f32
      %294 = vector.broadcast %cst_103 : f32 to vector<2x24x256xf32>
      %295 = arith.select %293, %290, %294 : vector<2x24x256xi1>, vector<2x24x256xf32>
      %c0_104 = arith.constant 0 : index
      %c0_105 = arith.constant 0 : index
      %c0_106 = arith.constant 0 : index
      %296 = vector.load %arg12[%c0_104, %c0_105, %c0_106] : memref<2x24x256xf32, #tpu.memory_space<vmem>>, vector<2x24x256xf32>
      tpu.vector_store %arg12[%c0_104, %c0_105, %c0_106], %295 {strides = array<i32>} : memref<2x24x256xf32, #tpu.memory_space<vmem>>, vector<2x24x256xf32>,
    } else {
    }
    return
  }
  func.func @transform_0(%arg0: i32, %arg1: i32) -> (i32, i32, i32) {
    %c0_i32 = arith.constant 0 : i32
    %c0_i32_0 = arith.constant 0 : i32
    %c0_i32_1 = arith.constant 0 : i32
    return %arg0, %c0_i32, %c0_i32_0 : i32, i32, i32
  }
  func.func @transform_1(%arg0: i32, %arg1: i32) -> (i32, i32) {
    %c0_i32 = arith.constant 0 : i32
    %c0_i32_0 = arith.constant 0 : i32
    %c0_i32_1 = arith.constant 0 : i32
    return %c0_i32, %c0_i32_0 : i32, i32
  }
  func.func @transform_2(%arg0: i32, %arg1: i32) -> (i32, i32) {
    %c0_i32 = arith.constant 0 : i32
    %c0_i32_0 = arith.constant 0 : i32
    %c0_i32_1 = arith.constant 0 : i32
    return %c0_i32, %c0_i32_0 : i32, i32
  }
  func.func @transform_3(%arg0: i32, %arg1: i32) -> (i32, i32) {
    %c0_i32 = arith.constant 0 : i32
    %c0_i32_0 = arith.constant 0 : i32
    %c0_i32_1 = arith.constant 0 : i32
    return %c0_i32, %c0_i32_0 : i32, i32
  }
  func.func @transform_4(%arg0: i32, %arg1: i32) -> (i32, i32, i32) {
    %c0_i32 = arith.constant 0 : i32
    %c0_i32_0 = arith.constant 0 : i32
    %c0_i32_1 = arith.constant 0 : i32
    return %arg1, %c0_i32, %c0_i32_0 : i32, i32, i32
  }
  func.func @transform_5(%arg0: i32, %arg1: i32) -> (i32, i32, i32) {
    %c0_i32 = arith.constant 0 : i32
    %c0_i32_0 = arith.constant 0 : i32
    %c0_i32_1 = arith.constant 0 : i32
    return %arg1, %c0_i32, %c0_i32_0 : i32, i32, i32
  }
  func.func @transform_6(%arg0: i32, %arg1: i32) -> (i32, i32, i32) {
    %c0_i32 = arith.constant 0 : i32
    %c0_i32_0 = arith.constant 0 : i32
    %c0_i32_1 = arith.constant 0 : i32
    return %arg1, %c0_i32, %c0_i32_0 : i32, i32, i32
  }
  func.func @transform_7(%arg0: i32, %arg1: i32) -> (i32, i32, i32) {
    %c0_i32 = arith.constant 0 : i32
    %c0_i32_0 = arith.constant 0 : i32
    %c0_i32_1 = arith.constant 0 : i32
    return %arg1, %c0_i32, %c0_i32_0 : i32, i32, i32
  }
  func.func @transform_8(%arg0: i32, %arg1: i32) -> (i32, i32, i32) {
    %c0_i32 = arith.constant 0 : i32
    %c0_i32_0 = arith.constant 0 : i32
    %c0_i32_1 = arith.constant 0 : i32
    return %arg1, %c0_i32, %c0_i32_0 : i32, i32, i32
  }
  func.func @transform_9(%arg0: i32, %arg1: i32) -> (i32, i32) {
    %c0_i32 = arith.constant 0 : i32
    %c0_i32_0 = arith.constant 0 : i32
    %c0_i32_1 = arith.constant 0 : i32
    return %c0_i32, %c0_i32_0 : i32, i32
  }
  func.func @transform_10(%arg0: i32, %arg1: i32) -> (i32, i32, i32) {
    %c0_i32 = arith.constant 0 : i32
    %c0_i32_0 = arith.constant 0 : i32
    %c0_i32_1 = arith.constant 0 : i32
    return %arg0, %c0_i32, %c0_i32_0 : i32, i32, i32
  }
}

</mosaic_0001>

<llo_original>
// kernel: clip_image_projector.1
$region0: #{clip_image_projector.1}
  #allocation0 [shape = 'u32[]', space=smem, size = 0x4, offset = 0x4, fixed_abs, tag = 'smem constant byte address 0x4 - core index']
  #allocation1 [shape = 'u32[144,128]{1,0:T(1,128)}', space=vmem, size = 0x12000, scoped, tag = 'internal scratch']
  #allocation2 [shape = 'f32[48,128]{1,0:T(8,128)}', space=vmem, size = 0x6000, scoped, tag = 'scratch operand']
  %s0 = inlined_call_operand.vmem [shape: f32[2,24,192], index: 0, kind: input, shape index: {}]
  %s1 = inlined_call_operand.vmem [shape: f32[8,256], index: 1, kind: input, shape index: {}]
  %s2 = inlined_call_operand.vmem [shape: f32[24,128], index: 2, kind: input, shape index: {}]
  %s3 = inlined_call_operand.vmem [shape: bf16[192,128], index: 3, kind: input, shape index: {}]
  %s4 = inlined_call_operand.vmem [shape: bf16[3,128,384], index: 4, kind: input, shape index: {}]
  %s5 = inlined_call_operand.vmem [shape: bf16[3,128,128], index: 5, kind: input, shape index: {}]
  %s6 = inlined_call_operand.vmem [shape: bf16[3,128,256], index: 6, kind: input, shape index: {}]
  %s7 = inlined_call_operand.vmem [shape: bf16[3,256,128], index: 7, kind: input, shape index: {}]
  %s8 = inlined_call_operand.vmem [shape: f32[3,8,384], index: 8, kind: input, shape index: {}]
  %s9 = inlined_call_operand.vmem [shape: bf16[128,256], index: 9, kind: input, shape index: {}]
  %s10 = inlined_call_operand.vmem [shape: f32[2,24,256], index: 10, kind: output, shape index: {}]
  %s11 = sld [smem:[#allocation0]]
  $region81: #{clip_image_projector.1} parent=0
    _
  %s13 = ssub.s32 1, %s11
  %s14 = scalar_select 0, %s13, %s11
  loop: start=0, step=1, limit=5
  $region2: #{clip_image_projector.1} parent=0 // loop_pre_header
    _
  $region3: #{clip_image_projector.1} parent=0 // loop_header
    %s16 = sphi 0, %s20
    %p17 = scmp.ge.s32.totalorder %s16, 5
    %s23 = sphi 0, %s35
    %s24 = sphi 0, %s31
    %s25 = sphi 0, %s23
    %s26 = sphi 0, %s24
    %s27 = sphi 0, %s25
    %s28 = sphi 0, %s26
    %s38 = sphi 0, %s40
    %s41 = sphi 0, %s38
    %s42 = sphi 0, %s41
    %s58 = sphi 0, %s42
    %s62 = sphi 0, %s62
    %s64 = sphi 0, %s62
    %s65 = sphi 0, %s64
    %s79 = sphi 0, %s65
    %s83 = sphi 0, %s83
    %s85 = sphi 0, %s83
    %s86 = sphi 0, %s85
    %s100 = sphi 0, %s86
    %s104 = sphi 0, %s104
    %s106 = sphi 0, %s104
    %s107 = sphi 0, %s106
    %s121 = sphi 0, %s107
    %s127 = sphi 0, %s129
    %s130 = sphi 0, %s127
    %s131 = sphi 0, %s130
    %s147 = sphi 0, %s131
    %s153 = sphi 0, %s155
    %s156 = sphi 0, %s153
    %s157 = sphi 0, %s156
    %s173 = sphi 0, %s157
    %s179 = sphi 0, %s181
    %s182 = sphi 0, %s179
    %s183 = sphi 0, %s182
    %s199 = sphi 0, %s183
    %s205 = sphi 0, %s207
    %s208 = sphi 0, %s205
    %s209 = sphi 0, %s208
    %s225 = sphi 0, %s209
    %s231 = sphi 0, %s233
    %s234 = sphi 0, %s231
    %s235 = sphi 0, %s234
    %s251 = sphi 0, %s235
    %s255 = sphi 0, %s255
    %s257 = sphi 0, %s255
    %s258 = sphi 0, %s257
    %s272 = sphi 0, %s258
    %s278 = sphi 0, %s280
    %s281 = sphi 0, %s278
    %s282 = sphi 0, %s281
    %s298 = sphi 0, %s282
  $region4: #{clip_image_projector.1} parent=0 // loop_header_branch
    %19 = sbr.rel (%p17) target = $region8
  $region5: #{clip_image_projector.1} parent=0 // loop_body
    %s21 = ssub.s32 %s16, 1
    %s22 = ssub.s32 %s16, 2
    %s29 = sadd.s32 1, %s24
    %p30 = scmp.ge.s32.totalorder %s29, 3
    %s31 = scalar_select %p30, 0, %s29
    %s32 = sadd.s32 1, %s23
    %s33 = scalar_select %p30, %s32, %s23
    %p34 = scmp.ge.s32.totalorder %s33, 1
    %s35 = scalar_select %p34, 0, %s33
    %s36 = ssub.s32 %s23, %s35
    %p37 = scmp.eq.s32.totalorder %s36, 0
    %s39 = sadd.s32 %s38, 1
    %s40 = scalar_select %p37, %s38, %s39
    %p43 = pneg %p37
    %p44 = scmp.eq.s32.totalorder %s16, 2
    %p45 = por %p43, %p44
    %p46 = scmp.ne.s32.totalorder %s38, %s41
    %p47 = scmp.eq.s32.totalorder %s16, 0
    %p48 = por %p46, %p47
    %p49 = scmp.ne.s32.totalorder %s38, %s41
    %p50 = scmp.eq.s32.totalorder %s21, 2
    %p51 = por %p49, %p50
    %p52 = scmp.ne.s32.totalorder %s41, %s42
    %p53 = scmp.eq.s32.totalorder %s21, 0
    %p54 = por %p52, %p53
    %p55 = scmp.ne.s32.totalorder %s41, %s42
    %p56 = scmp.eq.s32.totalorder %s22, 2
    %p57 = por %p55, %p56
    %p59 = scmp.ne.s32.totalorder %s42, %s58
    %p60 = scmp.eq.s32.totalorder %s22, 0
    %p61 = por %p59, %p60
    %s63 = sadd.s32 %s62, 1
    %p66 = scmp.eq.s32.totalorder %s16, 2
    %p67 = scmp.ne.s32.totalorder %s62, %s64
    %p68 = scmp.eq.s32.totalorder %s16, 0
    %p69 = por %p67, %p68
    %p70 = scmp.ne.s32.totalorder %s62, %s64
    %p71 = scmp.eq.s32.totalorder %s21, 2
    %p72 = por %p70, %p71
    %p73 = scmp.ne.s32.totalorder %s64, %s65
    %p74 = scmp.eq.s32.totalorder %s21, 0
    %p75 = por %p73, %p74
    %p76 = scmp.ne.s32.totalorder %s64, %s65
    %p77 = scmp.eq.s32.totalorder %s22, 2
    %p78 = por %p76, %p77
    %p80 = scmp.ne.s32.totalorder %s65, %s79
    %p81 = scmp.eq.s32.totalorder %s22, 0
    %p82 = por %p80, %p81
    %s84 = sadd.s32 %s83, 1
    %p87 = scmp.eq.s32.totalorder %s16, 2
    %p88 = scmp.ne.s32.totalorder %s83, %s85
    %p89 = scmp.eq.s32.totalorder %s16, 0
    %p90 = por %p88, %p89
    %p91 = scmp.ne.s32.totalorder %s83, %s85
    %p92 = scmp.eq.s32.totalorder %s21, 2
    %p93 = por %p91, %p92
    %p94 = scmp.ne.s32.totalorder %s85, %s86
    %p95 = scmp.eq.s32.totalorder %s21, 0
    %p96 = por %p94, %p95
    %p97 = scmp.ne.s32.totalorder %s85, %s86
    %p98 = scmp.eq.s32.totalorder %s22, 2
    %p99 = por %p97, %p98
    %p101 = scmp.ne.s32.totalorder %s86, %s100
    %p102 = scmp.eq.s32.totalorder %s22, 0
    %p103 = por %p101, %p102
    %s105 = sadd.s32 %s104, 1
    %p108 = scmp.eq.s32.totalorder %s16, 2
    %p109 = scmp.ne.s32.totalorder %s104, %s106
    %p110 = scmp.eq.s32.totalorder %s16, 0
    %p111 = por %p109, %p110
    %p112 = scmp.ne.s32.totalorder %s104, %s106
    %p113 = scmp.eq.s32.totalorder %s21, 2
    %p114 = por %p112, %p113
    %p115 = scmp.ne.s32.totalorder %s106, %s107
    %p116 = scmp.eq.s32.totalorder %s21, 0
    %p117 = por %p115, %p116
    %p118 = scmp.ne.s32.totalorder %s106, %s107
    %p119 = scmp.eq.s32.totalorder %s22, 2
    %p120 = por %p118, %p119
    %p122 = scmp.ne.s32.totalorder %s107, %s121
    %p123 = scmp.eq.s32.totalorder %s22, 0
    %p124 = por %p122, %p123
    %s125 = ssub.s32 %s24, %s31
    %p126 = scmp.eq.s32.totalorder %s125, 0
    %s128 = sadd.s32 %s127, 1
    %s129 = scalar_select %p126, %s127, %s128
    %p132 = pneg %p126
    %p133 = scmp.eq.s32.totalorder %s16, 2
    %p134 = por %p132, %p133
    %p135 = scmp.ne.s32.totalorder %s127, %s130
    %p136 = scmp.eq.s32.totalorder %s16, 0
    %p137 = por %p135, %p136
    %p138 = scmp.ne.s32.totalorder %s127, %s130
    %p139 = scmp.eq.s32.totalorder %s21, 2
    %p140 = por %p138, %p139
    %p141 = scmp.ne.s32.totalorder %s130, %s131
    %p142 = scmp.eq.s32.totalorder %s21, 0
    %p143 = por %p141, %p142
    %p144 = scmp.ne.s32.totalorder %s130, %s131
    %p145 = scmp.eq.s32.totalorder %s22, 2
    %p146 = por %p144, %p145
    %p148 = scmp.ne.s32.totalorder %s131, %s147
    %p149 = scmp.eq.s32.totalorder %s22, 0
    %p150 = por %p148, %p149
    %s151 = ssub.s32 %s24, %s31
    %p152 = scmp.eq.s32.totalorder %s151, 0
    %s154 = sadd.s32 %s153, 1
    %s155 = scalar_select %p152, %s153, %s154
    %p158 = pneg %p152
    %p159 = scmp.eq.s32.totalorder %s16, 2
    %p160 = por %p158, %p159
    %p161 = scmp.ne.s32.totalorder %s153, %s156
    %p162 = scmp.eq.s32.totalorder %s16, 0
    %p163 = por %p161, %p162
    %p164 = scmp.ne.s32.totalorder %s153, %s156
    %p165 = scmp.eq.s32.totalorder %s21, 2
    %p166 = por %p164, %p165
    %p167 = scmp.ne.s32.totalorder %s156, %s157
    %p168 = scmp.eq.s32.totalorder %s21, 0
    %p169 = por %p167, %p168
    %p170 = scmp.ne.s32.totalorder %s156, %s157
    %p171 = scmp.eq.s32.totalorder %s22, 2
    %p172 = por %p170, %p171
    %p174 = scmp.ne.s32.totalorder %s157, %s173
    %p175 = scmp.eq.s32.totalorder %s22, 0
    %p176 = por %p174, %p175
    %s177 = ssub.s32 %s24, %s31
    %p178 = scmp.eq.s32.totalorder %s177, 0
    %s180 = sadd.s32 %s179, 1
    %s181 = scalar_select %p178, %s179, %s180
    %p184 = pneg %p178
    %p185 = scmp.eq.s32.totalorder %s16, 2
    %p186 = por %p184, %p185
    %p187 = scmp.ne.s32.totalorder %s179, %s182
    %p188 = scmp.eq.s32.totalorder %s16, 0
    %p189 = por %p187, %p188
    %p190 = scmp.ne.s32.totalorder %s179, %s182
    %p191 = scmp.eq.s32.totalorder %s21, 2
    %p192 = por %p190, %p191
    %p193 = scmp.ne.s32.totalorder %s182, %s183
    %p194 = scmp.eq.s32.totalorder %s21, 0
    %p195 = por %p193, %p194
    %p196 = scmp.ne.s32.totalorder %s182, %s183
    %p197 = scmp.eq.s32.totalorder %s22, 2
    %p198 = por %p196, %p197
    %p200 = scmp.ne.s32.totalorder %s183, %s199
    %p201 = scmp.eq.s32.totalorder %s22, 0
    %p202 = por %p200, %p201
    %s203 = ssub.s32 %s24, %s31
    %p204 = scmp.eq.s32.totalorder %s203, 0
    %s206 = sadd.s32 %s205, 1
    %s207 = scalar_select %p204, %s205, %s206
    %p210 = pneg %p204
    %p211 = scmp.eq.s32.totalorder %s16, 2
    %p212 = por %p210, %p211
    %p213 = scmp.ne.s32.totalorder %s205, %s208
    %p214 = scmp.eq.s32.totalorder %s16, 0
    %p215 = por %p213, %p214
    %p216 = scmp.ne.s32.totalorder %s205, %s208
    %p217 = scmp.eq.s32.totalorder %s21, 2
    %p218 = por %p216, %p217
    %p219 = scmp.ne.s32.totalorder %s208, %s209
    %p220 = scmp.eq.s32.totalorder %s21, 0
    %p221 = por %p219, %p220
    %p222 = scmp.ne.s32.totalorder %s208, %s209
    %p223 = scmp.eq.s32.totalorder %s22, 2
    %p224 = por %p222, %p223
    %p226 = scmp.ne.s32.totalorder %s209, %s225
    %p227 = scmp.eq.s32.totalorder %s22, 0
    %p228 = por %p226, %p227
    %s229 = ssub.s32 %s24, %s31
    %p230 = scmp.eq.s32.totalorder %s229, 0
    %s232 = sadd.s32 %s231, 1
    %s233 = scalar_select %p230, %s231, %s232
    %p236 = pneg %p230
    %p237 = scmp.eq.s32.totalorder %s16, 2
    %p238 = por %p236, %p237
    %p239 = scmp.ne.s32.totalorder %s231, %s234
    %p240 = scmp.eq.s32.totalorder %s16, 0
    %p241 = por %p239, %p240
    %p242 = scmp.ne.s32.totalorder %s231, %s234
    %p243 = scmp.eq.s32.totalorder %s21, 2
    %p244 = por %p242, %p243
    %p245 = scmp.ne.s32.totalorder %s234, %s235
    %p246 = scmp.eq.s32.totalorder %s21, 0
    %p247 = por %p245, %p246
    %p248 = scmp.ne.s32.totalorder %s234, %s235
    %p249 = scmp.eq.s32.totalorder %s22, 2
    %p250 = por %p248, %p249
    %p252 = scmp.ne.s32.totalorder %s235, %s251
    %p253 = scmp.eq.s32.totalorder %s22, 0
    %p254 = por %p252, %p253
    %s256 = sadd.s32 %s255, 1
    %p259 = scmp.eq.s32.totalorder %s16, 2
    %p260 = scmp.ne.s32.totalorder %s255, %s257
    %p261 = scmp.eq.s32.totalorder %s16, 0
    %p262 = por %p260, %p261
    %p263 = scmp.ne.s32.totalorder %s255, %s257
    %p264 = scmp.eq.s32.totalorder %s21, 2
    %p265 = por %p263, %p264
    %p266 = scmp.ne.s32.totalorder %s257, %s258
    %p267 = scmp.eq.s32.totalorder %s21, 0
    %p268 = por %p266, %p267
    %p269 = scmp.ne.s32.totalorder %s257, %s258
    %p270 = scmp.eq.s32.totalorder %s22, 2
    %p271 = por %p269, %p270
    %p273 = scmp.ne.s32.totalorder %s258, %s272
    %p274 = scmp.eq.s32.totalorder %s22, 0
    %p275 = por %p273, %p274
    %s276 = ssub.s32 %s23, %s35
    %p277 = scmp.eq.s32.totalorder %s276, 0
    %s279 = sadd.s32 %s278, 1
    %s280 = scalar_select %p277, %s278, %s279
    %p283 = pneg %p277
    %p284 = scmp.eq.s32.totalorder %s16, 2
    %p285 = por %p283, %p284
    %p286 = scmp.ne.s32.totalorder %s278, %s281
    %p287 = scmp.eq.s32.totalorder %s16, 0
    %p288 = por %p286, %p287
    %p289 = scmp.ne.s32.totalorder %s278, %s281
    %p290 = scmp.eq.s32.totalorder %s21, 2
    %p291 = por %p289, %p290
    %p292 = scmp.ne.s32.totalorder %s281, %s282
    %p293 = scmp.eq.s32.totalorder %s21, 0
    %p294 = por %p292, %p293
    %p295 = scmp.ne.s32.totalorder %s281, %s282
    %p296 = scmp.eq.s32.totalorder %s22, 2
    %p297 = por %p295, %p296
    %p299 = scmp.ne.s32.totalorder %s282, %s298
    %p300 = scmp.eq.s32.totalorder %s22, 0
    %p301 = por %p299, %p300
    %p302 = scmp.le.s32.totalorder 1, %s16
    %p303 = scmp.lt.s32.totalorder %s16, 4
    %p304 = pnand %p302, %p303
    %p305 = pneg %p304
    // Predicated region
    $region9: #{clip_image_projector.1} parent=5 // pred_check
      _
    $region10: #{clip_image_projector.1} parent=5 // pred_check_branch
      %307 = sbr.rel (%p304) target = $region12
    $region11: #{clip_image_projector.1} parent=5 // pred_region
      %s308 = ssub.s32 %s16, 1
      // Predicated region
      $region13: #{clip_image_projector.1} parent=11 // pred_check
        %p309 = pneg %p54
      $region14: #{clip_image_projector.1} parent=11 // pred_check_branch
        %311 = sbr.rel (%p309) target = $region16
      $region15: #{clip_image_projector.1} parent=11 // pred_region
        %s312 = smul.u32 2, %s25
        %p313 = scmp.lt.s32.totalorder %s312, 1
        %s314 = scalar_select %p313, %s312, 1
        %s315 = smul.addr %s314, 6
        %s316 = smul.addr %s315, 8
        %s317 = scalar_lea.vmem %s0, %s316
        %s318 = smul.u32 2, %s25
      $region16: #{clip_image_projector.1} parent=11 // pred_fallthru
        _
      // Predicated region
      $region17: #{clip_image_projector.1} parent=11 // pred_check
        %p319 = pneg %p75
      $region18: #{clip_image_projector.1} parent=11 // pred_check_branch
        %321 = sbr.rel (%p319) target = $region20
      $region19: #{clip_image_projector.1} parent=11 // pred_region
        _
      $region20: #{clip_image_projector.1} parent=11 // pred_fallthru
        _
      // Predicated region
      $region21: #{clip_image_projector.1} parent=11 // pred_check
        %p322 = pneg %p96
      $region22: #{clip_image_projector.1} parent=11 // pred_check_branch
        %324 = sbr.rel (%p322) target = $region24
      $region23: #{clip_image_projector.1} parent=11 // pred_region
        _
      $region24: #{clip_image_projector.1} parent=11 // pred_fallthru
        _
      // Predicated region
      $region25: #{clip_image_projector.1} parent=11 // pred_check
        %p325 = pneg %p117
      $region26: #{clip_image_projector.1} parent=11 // pred_check_branch
        %327 = sbr.rel (%p325) target = $region28
      $region27: #{clip_image_projector.1} parent=11 // pred_region
        _
      $region28: #{clip_image_projector.1} parent=11 // pred_fallthru
        _
      // Predicated region
      $region29: #{clip_image_projector.1} parent=11 // pred_check
        %p328 = pneg %p268
      $region30: #{clip_image_projector.1} parent=11 // pred_check_branch
        %330 = sbr.rel (%p328) target = $region32
      $region31: #{clip_image_projector.1} parent=11 // pred_region
        _
      $region32: #{clip_image_projector.1} parent=11 // pred_fallthru
        _
    $region12: #{clip_image_projector.1} parent=5 // pred_fallthru
      _
    %p331 = scmp.lt.s32.totalorder %s16, 3
    // Predicated region
    $region33: #{clip_image_projector.1} parent=5 // pred_check
      %p332 = pneg %p331
    $region34: #{clip_image_projector.1} parent=5 // pred_check_branch
      %334 = sbr.rel (%p332) target = $region36
    $region35: #{clip_image_projector.1} parent=5 // pred_region
      // Predicated region
      $region37: #{clip_image_projector.1} parent=35 // pred_check
        %p335 = pneg %p137
      $region38: #{clip_image_projector.1} parent=35 // pred_check_branch
        %337 = sbr.rel (%p335) target = $region40
      $region39: #{clip_image_projector.1} parent=35 // pred_region
        %p338 = scmp.lt.s32.totalorder %s24, 2
        %s339 = scalar_select %p338, %s24, 2
        %s340 = smul.addr %s339, 48
        %s341 = smul.addr %s340, 4
        %s342 = scalar_lea.vmem %s4, %s341
      $region40: #{clip_image_projector.1} parent=35 // pred_fallthru
        _
      // Predicated region
      $region41: #{clip_image_projector.1} parent=35 // pred_check
        %p343 = pneg %p163
      $region42: #{clip_image_projector.1} parent=35 // pred_check_branch
        %345 = sbr.rel (%p343) target = $region44
      $region43: #{clip_image_projector.1} parent=35 // pred_region
        %p346 = scmp.lt.s32.totalorder %s24, 2
        %s347 = scalar_select %p346, %s24, 2
        %s348 = smul.addr %s347, 16
        %s349 = smul.addr %s348, 4
        %s350 = scalar_lea.vmem %s5, %s349
      $region44: #{clip_image_projector.1} parent=35 // pred_fallthru
        _
      // Predicated region
      $region45: #{clip_image_projector.1} parent=35 // pred_check
        %p351 = pneg %p189
      $region46: #{clip_image_projector.1} parent=35 // pred_check_branch
        %353 = sbr.rel (%p351) target = $region48
      $region47: #{clip_image_projector.1} parent=35 // pred_region
        %p354 = scmp.lt.s32.totalorder %s24, 2
        %s355 = scalar_select %p354, %s24, 2
        %s356 = smul.addr %s355, 32
        %s357 = smul.addr %s356, 4
        %s358 = scalar_lea.vmem %s6, %s357
      $region48: #{clip_image_projector.1} parent=35 // pred_fallthru
        _
      // Predicated region
      $region49: #{clip_image_projector.1} parent=35 // pred_check
        %p359 = pneg %p215
      $region50: #{clip_image_projector.1} parent=35 // pred_check_branch
        %361 = sbr.rel (%p359) target = $region52
      $region51: #{clip_image_projector.1} parent=35 // pred_region
        %p362 = scmp.lt.s32.totalorder %s24, 2
        %s363 = scalar_select %p362, %s24, 2
        %s364 = smul.addr %s363, 32
        %s365 = smul.addr %s364, 4
        %s366 = scalar_lea.vmem %s7, %s365
      $region52: #{clip_image_projector.1} parent=35 // pred_fallthru
        _
      // Predicated region
      $region53: #{clip_image_projector.1} parent=35 // pred_check
        %p367 = pneg %p241
      $region54: #{clip_image_projector.1} parent=35 // pred_check_branch
        %369 = sbr.rel (%p367) target = $region56
      $region55: #{clip_image_projector.1} parent=35 // pred_region
        %p370 = scmp.lt.s32.totalorder %s24, 2
        %s371 = scalar_select %p370, %s24, 2
        %s372 = smul.addr %s371, 3
        %s373 = smul.addr %s372, 8
        %s374 = scalar_lea.vmem %s8, %s373
      $region56: #{clip_image_projector.1} parent=35 // pred_fallthru
        _
    $region36: #{clip_image_projector.1} parent=5 // pred_fallthru
      _
    %p375 = scmp.le.s32.totalorder 1, %s16
    %p376 = scmp.lt.s32.totalorder %s16, 4
    %p377 = pnand %p375, %p376
    %p378 = pneg %p377
    // Predicated region
    $region57: #{clip_image_projector.1} parent=5 // pred_check
      _
    $region58: #{clip_image_projector.1} parent=5 // pred_check_branch
      %380 = sbr.rel (%p377) target = $region60
    $region59: #{clip_image_projector.1} parent=5 // pred_region
      %s381 = ssub.s32 %s16, 1
      %s382 = smul.u32 2, %s25
      %p383 = scmp.lt.s32.totalorder %s382, 1
      %s384 = scalar_select %p383, %s382, 1
      %s385 = smul.addr %s384, 6
      %s386 = smul.addr %s385, 8
      %s387 = scalar_lea.vmem %s0, %s386
      %p388 = pneg %p54
      %p389 = pneg %p51
      %p390 = pneg %p75
      %p391 = pneg %p72
      %p392 = pneg %p96
      %p393 = pneg %p93
      %p394 = pneg %p117
      %p395 = pneg %p114
      %p396 = scmp.lt.s32.totalorder %s26, 2
      %s397 = scalar_select %p396, %s26, 2
      %s398 = smul.addr %s397, 48
      %s399 = smul.addr %s398, 4
      %s400 = scalar_lea.vmem %s4, %s399
      %p401 = pneg %p143
      %p402 = pneg %p140
      %p403 = scmp.lt.s32.totalorder %s26, 2
      %s404 = scalar_select %p403, %s26, 2
      %s405 = smul.addr %s404, 16
      %s406 = smul.addr %s405, 4
      %s407 = scalar_lea.vmem %s5, %s406
      %p408 = pneg %p169
      %p409 = pneg %p166
      %p410 = scmp.lt.s32.totalorder %s26, 2
      %s411 = scalar_select %p410, %s26, 2
      %s412 = smul.addr %s411, 32
      %s413 = smul.addr %s412, 4
      %s414 = scalar_lea.vmem %s6, %s413
      %p415 = pneg %p195
      %p416 = pneg %p192
      %p417 = scmp.lt.s32.totalorder %s26, 2
      %s418 = scalar_select %p417, %s26, 2
      %s419 = smul.addr %s418, 32
      %s420 = smul.addr %s419, 4
      %s421 = scalar_lea.vmem %s7, %s420
      %p422 = pneg %p221
      %p423 = pneg %p218
      %p424 = scmp.lt.s32.totalorder %s26, 2
      %s425 = scalar_select %p424, %s26, 2
      %s426 = smul.addr %s425, 3
      %s427 = smul.addr %s426, 8
      %s428 = scalar_lea.vmem %s8, %s427
      %p429 = pneg %p247
      %p430 = pneg %p244
      %p431 = pneg %p268
      %p432 = pneg %p265
      %p433 = pneg %p294
      %p434 = pneg %p291
      %s435 = smul.u32 2, %s25
      %p436 = scmp.lt.s32.totalorder %s435, 1
      %s437 = scalar_select %p436, %s435, 1
      %s438 = smul.addr %s437, 6
      %s439 = smul.addr %s438, 8
      %s440 = scalar_lea.vmem %s10, %s439
      %s441 = smul.u32 2, %s25
      %p442 = scmp.lt.s32.totalorder %s441, 1
      %s443 = scalar_select %p442, %s441, 1
      %s444 = smul.addr %s443, 6
      %s445 = smul.addr %s444, 8
      %s446 = scalar_lea.vmem %s0, %s445
      %s447 = smul.u32 2, %s25
      %p448 = scmp.lt.s32.totalorder %s26, 2
      %s449 = scalar_select %p448, %s26, 2
      %s450 = smul.addr %s449, 48
      %s451 = smul.addr %s450, 4
      %s452 = scalar_lea.vmem %s4, %s451
      %p453 = scmp.lt.s32.totalorder %s26, 2
      %s454 = scalar_select %p453, %s26, 2
      %s455 = smul.addr %s454, 16
      %s456 = smul.addr %s455, 4
      %s457 = scalar_lea.vmem %s5, %s456
      %p458 = scmp.lt.s32.totalorder %s26, 2
      %s459 = scalar_select %p458, %s26, 2
      %s460 = smul.addr %s459, 32
      %s461 = smul.addr %s460, 4
      %s462 = scalar_lea.vmem %s6, %s461
      %p463 = scmp.lt.s32.totalorder %s26, 2
      %s464 = scalar_select %p463, %s26, 2
      %s465 = smul.addr %s464, 32
      %s466 = smul.addr %s465, 4
      %s467 = scalar_lea.vmem %s7, %s466
      %p468 = scmp.lt.s32.totalorder %s26, 2
      %s469 = scalar_select %p468, %s26, 2
      %s470 = smul.addr %s469, 3
      %s471 = smul.addr %s470, 8
      %s472 = scalar_lea.vmem %s8, %s471
      %s473 = smul.u32 2, %s25
      %p474 = scmp.lt.s32.totalorder %s473, 1
      %s475 = scalar_select %p474, %s473, 1
      %s476 = smul.addr %s475, 6
      %s477 = smul.addr %s476, 8
      %s478 = scalar_lea.vmem %s10, %s477
      %s479 = smul.u32 2, %s25
      %p481 = scmp.eq.s32.totalorder %s26, 0
      // Predicated region
      $region61: #{clip_image_projector.1} parent=59 // pred_check
        %p482 = pneg %p481
      $region62: #{clip_image_projector.1} parent=59 // pred_check_branch
        %484 = sbr.rel (%p482) target = $region64
      $region63: #{clip_image_projector.1} parent=59 // pred_region
        %v485 = vld [vmem:[%s446] sm:$0xff]
        %v486 = vld [vmem:[%s446 + $0x8] sm:$0xff]
        %v487 = vld [vmem:[%s446 + $0x10] sm:$0xff]
        %v488 = vld [vmem:[%s446 + $0x18] sm:$0xff]
        %v489 = vld [vmem:[%s446 + $0x20] sm:$0xff]
        %v490 = vld [vmem:[%s446 + $0x28] sm:$0xff]
        %v491 = vld [vmem:[%s446 + $0x30] sm:$0xff]
        %v492 = vld [vmem:[%s446 + $0x38] sm:$0xff]
        %v493 = vld [vmem:[%s446 + $0x40] sm:$0xff]
        %v494 = vld [vmem:[%s446 + $0x48] sm:$0xff]
        %v495 = vld [vmem:[%s446 + $0x50] sm:$0xff]
        %v496 = vld [vmem:[%s446 + $0x58] sm:$0xff]
        %v497 = vpack.c.bf16 %v487, %v485
        %v498 = vpack.c.bf16 %v488, %v486
        %v499 = vpack.c.bf16 %v491, %v489
        %v500 = vpack.c.bf16 %v492, %v490
        %v501 = vpack.c.bf16 %v495, %v493
        %v502 = vpack.c.bf16 %v496, %v494
        %v503 = vld [vmem:[%s3] sm:$0xf]
        %v504 = vld [vmem:[%s3 + $0x4] sm:$0xf]
        %v505 = vld [vmem:[%s3 + $0x8] sm:$0xf]
        %v506 = vld [vmem:[%s3 + $0xc] sm:$0xf]
        %v507 = vld [vmem:[%s3 + $0x10] sm:$0xf]
        %v508 = vld [vmem:[%s3 + $0x14] sm:$0xf]
        %v509 = vld [vmem:[%s3 + $0x18] sm:$0xf]
        %v510 = vld [vmem:[%s3 + $0x1c] sm:$0xf]
        %v511 = vld [vmem:[%s3 + $0x20] sm:$0xf]
        %v512 = vld [vmem:[%s3 + $0x24] sm:$0xf]
        %v513 = vld [vmem:[%s3 + $0x28] sm:$0xf]
        %v514 = vld [vmem:[%s3 + $0x2c] sm:$0xf]
        %v515 = vld [vmem:[%s3 + $0x30] sm:$0xf]
        %v516 = vld [vmem:[%s3 + $0x34] sm:$0xf]
        %v517 = vld [vmem:[%s3 + $0x38] sm:$0xf]
        %v518 = vld [vmem:[%s3 + $0x3c] sm:$0xf]
        %v519 = vld [vmem:[%s3 + $0x40] sm:$0xf]
        %v520 = vld [vmem:[%s3 + $0x44] sm:$0xf]
        %v521 = vld [vmem:[%s3 + $0x48] sm:$0xf]
        %v522 = vld [vmem:[%s3 + $0x4c] sm:$0xf]
        %v523 = vld [vmem:[%s3 + $0x50] sm:$0xf]
        %v524 = vld [vmem:[%s3 + $0x54] sm:$0xf]
        %v525 = vld [vmem:[%s3 + $0x58] sm:$0xf]
        %v526 = vld [vmem:[%s3 + $0x5c] sm:$0xf]
        %v527 = vld [vmem:[%s2] sm:$0xff]
        %v528 = vld [vmem:[%s2 + $0x8] sm:$0xff]
        %v529 = vld [vmem:[%s2 + $0x10] sm:$0xff]
        %v554 = vunpack.c.l.b16 %v503
        %v555 = vunpack.c.l.b16 %v504
        %v556 = vunpack.c.l.b16 %v505
        %v557 = vunpack.c.l.b16 %v506
        %v558 = vunpack.c.l.b16 %v507
        %v559 = vunpack.c.l.b16 %v508
        %v560 = vunpack.c.l.b16 %v509
        %v561 = vunpack.c.l.b16 %v510
        %v562 = vunpack.c.l.b16 %v511
        %v563 = vunpack.c.l.b16 %v512
        %v564 = vunpack.c.l.b16 %v513
        %v565 = vunpack.c.l.b16 %v514
        %v566 = vunpack.c.l.b16 %v515
        %v567 = vunpack.c.l.b16 %v516
        %v568 = vunpack.c.l.b16 %v517
        %v569 = vunpack.c.l.b16 %v518
        %v570 = vunpack.c.l.b16 %v519
        %v571 = vunpack.c.l.b16 %v520
        %v572 = vunpack.c.l.b16 %v521
        %v573 = vunpack.c.l.b16 %v522
        %v574 = vunpack.c.l.b16 %v523
        %v575 = vunpack.c.l.b16 %v524
        %v576 = vunpack.c.l.b16 %v525
        %v577 = vunpack.c.l.b16 %v526
        %v578 = vpack.c.b16 %v555, %v554
        %v579 = vpack.c.b16 %v557, %v556
        %v580 = vpack.c.b16 %v559, %v558
        %v581 = vpack.c.b16 %v561, %v560
        %v582 = vpack.c.b16 %v563, %v562
        %v583 = vpack.c.b16 %v565, %v564
        %v584 = vpack.c.b16 %v567, %v566
        %v585 = vpack.c.b16 %v569, %v568
        %v586 = vpack.c.b16 %v571, %v570
        %v587 = vpack.c.b16 %v573, %v572
        %v588 = vpack.c.b16 %v575, %v574
        %v589 = vpack.c.b16 %v577, %v576
        %vm602 = vcmask 523264
        %v604 = vsel %vm602, %v498, 0
        %v607 = vsel %vm602, %v500, 0
        %v610 = vsel %vm602, %v502, 0
        %612 = vmatprep.subr.bf16.mxu0 0
        %613 = vmatpush1.bf16.msra.mxu0 %v585
        %614 = vmatprep.subr.bf16.mxu0 0
        %615 = vmatpush1.bf16.msra.mxu0 %v584
        %616 = vmatprep.subr.bf16.mxu0 0
        %617 = vmatpush1.bf16.msra.mxu0 %v583
        %618 = vmatprep.subr.bf16.mxu0 0
        %619 = vmatpush1.bf16.msra.mxu0 %v582
        %620 = vmatprep.subr.bf16.mxu0 0
        %621 = vmatpush1.bf16.msra.mxu0 %v581
        %622 = vmatprep.subr.bf16.mxu0 0
        %623 = vmatpush1.bf16.msra.mxu0 %v580
        %624 = vmatprep.subr.bf16.mxu0 0
        %625 = vmatpush1.bf16.msra.mxu0 %v579
        %626 = vmatprep.subr.bf16.mxu0 0
        %627 = vmatpush1.bf16.msra.mxu0 %v578
        %628 = vmatprep.subr.bf16.mxu0 0
        %629 = vmatpush2.bf16.msra.mxu0 0
        %630 = vmatprep.subr.bf16.mxu0 0
        %631 = vmatpush2.bf16.msra.mxu0 0
        %632 = vmatprep.subr.bf16.mxu0 0
        %633 = vmatpush2.bf16.msra.mxu0 0
        %634 = vmatprep.subr.bf16.mxu0 0
        %635 = vmatpush2.bf16.msra.mxu0 0
        %636 = vmatprep.subr.bf16.mxu0 0
        %637 = vmatpush2.bf16.msra.mxu0 %v589
        %638 = vmatprep.subr.bf16.mxu0 0
        %639 = vmatpush2.bf16.msra.mxu0 %v588
        %640 = vmatprep.subr.bf16.mxu0 0
        %641 = vmatpush2.bf16.msra.mxu0 %v587
        %642 = vmatprep.subr.bf16.mxu0 0
        %643 = vmatpush2.bf16.msra.mxu0 %v586
        %644 = vmatprep.mubr.bf16.mxu0 %v604
        %645 = vmatmul.mubr.bf16.gmra.mxu0 %v497
        %v646 = vpop.f32.mrf.mxu0
        %v647 = vadd.f32 %v527, %v646
        %v648 = vpop.f32.mrf.mxu0
        %v649 = vpop.f32.mrf.mxu0
        %v650 = vadd.f32 %v528, %v649
        %v651 = vpop.f32.mrf.mxu0
        %652 = vmatprep.mubr.bf16.mxu0 %v607
        %653 = vmatmul.mubr.bf16.gmra.mxu0 %v499
        %v654 = vpop.f32.mrf.mxu0
        %v655 = vadd.f32 %v529, %v654
        %v656 = vpop.f32.mrf.mxu0
        %v657 = vpop.f32.mrf.mxu0
        %v658 = vadd.f32 %v527, %v657
        %v659 = vpop.f32.mrf.mxu0
        %660 = vmatprep.mubr.bf16.mxu0 %v610
        %661 = vmatmul.mubr.bf16.gmra.mxu0 %v501
        %v662 = vpop.f32.mrf.mxu0
        %v663 = vadd.f32 %v528, %v662
        %v664 = vpop.f32.mrf.mxu0
        %v665 = vpop.f32.mrf.mxu0
        %v666 = vadd.f32 %v529, %v665
        %v667 = vpop.f32.mrf.mxu0
        %668 = vdwg.mxu0
        %v669 = vld [vmem:[%s1] ss:$0 sm:$0xff]
        %v670 = vld [vmem:[%s1 + $0x1] ss:$0 sm:$0xff]
        %671 = vadd.xlane.f32.xlu0 %v647
        %v672 = vpop.xlane.xlu0 %671
        %673 = vadd.xlane.f32.xlu0 %v650
        %v674 = vpop.xlane.xlu0 %673
        %675 = vadd.xlane.f32.xlu0 %v655
        %v676 = vpop.xlane.xlu0 %675
        %677 = vadd.xlane.f32.xlu0 %v658
        %v678 = vpop.xlane.xlu0 %677
        %679 = vadd.xlane.f32.xlu0 %v663
        %v680 = vpop.xlane.xlu0 %679
        %681 = vadd.xlane.f32.xlu0 %v666
        %v682 = vpop.xlane.xlu0 %681
        %v683 = vrcp.pop 128.0
        %v684 = vmul.f32 %v672, %v683
        %v685 = vmul.f32 %v674, %v683
        %v686 = vmul.f32 %v676, %v683
        %v687 = vmul.f32 %v678, %v683
        %v688 = vmul.f32 %v680, %v683
        %v689 = vmul.f32 %v682, %v683
        %v690 = vsub.f32 %v647, %v684
        %v691 = vsub.f32 %v650, %v685
        %v692 = vsub.f32 %v655, %v686
        %v693 = vsub.f32 %v658, %v687
        %v694 = vsub.f32 %v663, %v688
        %v695 = vsub.f32 %v666, %v689
        %v696 = vmul.f32 %v690, %v690
        %v697 = vmul.f32 %v691, %v691
        %v698 = vmul.f32 %v692, %v692
        %v699 = vmul.f32 %v693, %v693
        %v700 = vmul.f32 %v694, %v694
        %v701 = vmul.f32 %v695, %v695
        %702 = vadd.xlane.f32.xlu0 %v696
        %v703 = vpop.xlane.xlu0 %702
        %704 = vadd.xlane.f32.xlu0 %v697
        %v705 = vpop.xlane.xlu0 %704
        %706 = vadd.xlane.f32.xlu0 %v698
        %v707 = vpop.xlane.xlu0 %706
        %708 = vadd.xlane.f32.xlu0 %v699
        %v709 = vpop.xlane.xlu0 %708
        %710 = vadd.xlane.f32.xlu0 %v700
        %v711 = vpop.xlane.xlu0 %710
        %712 = vadd.xlane.f32.xlu0 %v701
        %v713 = vpop.xlane.xlu0 %712
        %v714 = vmul.f32 %v703, %v683
        %v715 = vmul.f32 %v705, %v683
        %v716 = vmul.f32 %v707, %v683
        %v717 = vmul.f32 %v709, %v683
        %v718 = vmul.f32 %v711, %v683
        %v719 = vmul.f32 %v713, %v683
        %v720 = vadd.f32 %v714, 1e-05
        %v721 = vadd.f32 %v715, 1e-05
        %v722 = vadd.f32 %v716, 1e-05
        %v723 = vadd.f32 %v717, 1e-05
        %v724 = vadd.f32 %v718, 1e-05
        %v725 = vadd.f32 %v719, 1e-05
        %v726 = vrsqrt.pop %v720
        %v727 = vrsqrt.pop %v721
        %v728 = vrsqrt.pop %v722
        %v729 = vrsqrt.pop %v723
        %v730 = vrsqrt.pop %v724
        %v731 = vrsqrt.pop %v725
        %v732 = vmul.f32 %v690, %v726
        %v733 = vmul.f32 %v691, %v727
        %v734 = vmul.f32 %v692, %v728
        %v735 = vmul.f32 %v693, %v729
        %v736 = vmul.f32 %v694, %v730
        %v737 = vmul.f32 %v695, %v731
        %v738 = vmul.f32 %v732, %v669
        %v739 = vmul.f32 %v733, %v669
        %v740 = vmul.f32 %v734, %v669
        %v741 = vmul.f32 %v735, %v669
        %v742 = vmul.f32 %v736, %v669
        %v743 = vmul.f32 %v737, %v669
        %v744 = vadd.f32 %v738, %v670
        %v745 = vadd.f32 %v739, %v670
        %v746 = vadd.f32 %v740, %v670
        %v747 = vadd.f32 %v741, %v670
        %v748 = vadd.f32 %v742, %v670
        %v749 = vadd.f32 %v743, %v670
        %750 = vst [vmem:[#allocation2] sm:$0xff] %v744
        %751 = vst [vmem:[#allocation2 + $0x8] sm:$0xff] %v745
        %752 = vst [vmem:[#allocation2 + $0x10] sm:$0xff] %v746
        %753 = vst [vmem:[#allocation2 + $0x18] sm:$0xff] %v747
        %754 = vst [vmem:[#allocation2 + $0x20] sm:$0xff] %v748
        %755 = vst [vmem:[#allocation2 + $0x28] sm:$0xff] %v749
      $region64: #{clip_image_projector.1} parent=59 // pred_fallthru
        _
      %v756 = vld [vmem:[#allocation2] sm:$0xff]
      %v757 = vld [vmem:[#allocation2 + $0x8] sm:$0xff]
      %v758 = vld [vmem:[#allocation2 + $0x10] sm:$0xff]
      %v759 = vld [vmem:[#allocation2 + $0x18] sm:$0xff]
      %v760 = vld [vmem:[#allocation2 + $0x20] sm:$0xff]
      %v761 = vld [vmem:[#allocation2 + $0x28] sm:$0xff]
      %v762 = vld [vmem:[%s472] ss:$0 sm:$0xff]
      %v763 = vld [vmem:[%s472 + $0x1] ss:$0 sm:$0xff]
      %764 = vadd.xlane.f32.xlu0 %v756
      %v765 = vpop.xlane.xlu0 %764
      %766 = vadd.xlane.f32.xlu0 %v757
      %v767 = vpop.xlane.xlu0 %766
      %768 = vadd.xlane.f32.xlu0 %v758
      %v769 = vpop.xlane.xlu0 %768
      %770 = vadd.xlane.f32.xlu0 %v759
      %v771 = vpop.xlane.xlu0 %770
      %772 = vadd.xlane.f32.xlu0 %v760
      %v773 = vpop.xlane.xlu0 %772
      %774 = vadd.xlane.f32.xlu0 %v761
      %v775 = vpop.xlane.xlu0 %774
      %v776 = vrcp.pop 128.0
      %v777 = vmul.f32 %v765, %v776
      %v778 = vmul.f32 %v767, %v776
      %v779 = vmul.f32 %v769, %v776
      %v780 = vmul.f32 %v771, %v776
      %v781 = vmul.f32 %v773, %v776
      %v782 = vmul.f32 %v775, %v776
      %v783 = vsub.f32 %v756, %v777
      %v784 = vsub.f32 %v757, %v778
      %v785 = vsub.f32 %v758, %v779
      %v786 = vsub.f32 %v759, %v780
      %v787 = vsub.f32 %v760, %v781
      %v788 = vsub.f32 %v761, %v782
      %v789 = vmul.f32 %v783, %v783
      %v790 = vmul.f32 %v784, %v784
      %v791 = vmul.f32 %v785, %v785
      %v792 = vmul.f32 %v786, %v786
      %v793 = vmul.f32 %v787, %v787
      %v794 = vmul.f32 %v788, %v788
      %795 = vadd.xlane.f32.xlu0 %v789
      %v796 = vpop.xlane.xlu0 %795
      %797 = vadd.xlane.f32.xlu0 %v790
      %v798 = vpop.xlane.xlu0 %797
      %799 = vadd.xlane.f32.xlu0 %v791
      %v800 = vpop.xlane.xlu0 %799
      %801 = vadd.xlane.f32.xlu0 %v792
      %v802 = vpop.xlane.xlu0 %801
      %803 = vadd.xlane.f32.xlu0 %v793
      %v804 = vpop.xlane.xlu0 %803
      %805 = vadd.xlane.f32.xlu0 %v794
      %v806 = vpop.xlane.xlu0 %805
      %v807 = vmul.f32 %v796, %v776
      %v808 = vmul.f32 %v798, %v776
      %v809 = vmul.f32 %v800, %v776
      %v810 = vmul.f32 %v802, %v776
      %v811 = vmul.f32 %v804, %v776
      %v812 = vmul.f32 %v806, %v776
      %v813 = vadd.f32 %v807, 1e-05
      %v814 = vadd.f32 %v808, 1e-05
      %v815 = vadd.f32 %v809, 1e-05
      %v816 = vadd.f32 %v810, 1e-05
      %v817 = vadd.f32 %v811, 1e-05
      %v818 = vadd.f32 %v812, 1e-05
      %v819 = vrsqrt.pop %v813
      %v820 = vrsqrt.pop %v814
      %v821 = vrsqrt.pop %v815
      %v822 = vrsqrt.pop %v816
      %v823 = vrsqrt.pop %v817
      %v824 = vrsqrt.pop %v818
      %v825 = vmul.f32 %v783, %v819
      %v826 = vmul.f32 %v784, %v820
      %v827 = vmul.f32 %v785, %v821
      %v828 = vmul.f32 %v786, %v822
      %v829 = vmul.f32 %v787, %v823
      %v830 = vmul.f32 %v788, %v824
      %v831 = vmul.f32 %v825, %v762
      %v832 = vmul.f32 %v826, %v762
      %v833 = vmul.f32 %v827, %v762
      %v834 = vmul.f32 %v828, %v762
      %v835 = vmul.f32 %v829, %v762
      %v836 = vmul.f32 %v830, %v762
      %v837 = vadd.f32 %v831, %v763
      %v838 = vadd.f32 %v832, %v763
      %v839 = vadd.f32 %v833, %v763
      %v840 = vadd.f32 %v834, %v763
      %v841 = vadd.f32 %v835, %v763
      %v842 = vadd.f32 %v836, %v763
      %v843 = vpack.c.bf16 %v838, %v837
      %v844 = vpack.c.bf16 %v840, %v839
      %v845 = vpack.c.bf16 %v842, %v841
      %v846 = vld [vmem:[%s452] sm:$0xff]
      %v847 = vld [vmem:[%s452 + $0x8] sm:$0xf]
      %v848 = vld [vmem:[%s452 + $0xc] sm:$0xff]
      %v849 = vld [vmem:[%s452 + $0x14] sm:$0xf]
      %v850 = vld [vmem:[%s452 + $0x18] sm:$0xff]
      %v851 = vld [vmem:[%s452 + $0x20] sm:$0xf]
      %v852 = vld [vmem:[%s452 + $0x24] sm:$0xff]
      %v853 = vld [vmem:[%s452 + $0x2c] sm:$0xf]
      %v854 = vld [vmem:[%s452 + $0x30] sm:$0xff]
      %v855 = vld [vmem:[%s452 + $0x38] sm:$0xf]
      %v856 = vld [vmem:[%s452 + $0x3c] sm:$0xff]
      %v857 = vld [vmem:[%s452 + $0x44] sm:$0xf]
      %v858 = vld [vmem:[%s452 + $0x48] sm:$0xff]
      %v859 = vld [vmem:[%s452 + $0x50] sm:$0xf]
      %v860 = vld [vmem:[%s452 + $0x54] sm:$0xff]
      %v861 = vld [vmem:[%s452 + $0x5c] sm:$0xf]
      %v862 = vld [vmem:[%s452 + $0x60] sm:$0xff]
      %v863 = vld [vmem:[%s452 + $0x68] sm:$0xf]
      %v864 = vld [vmem:[%s452 + $0x6c] sm:$0xff]
      %v865 = vld [vmem:[%s452 + $0x74] sm:$0xf]
      %v866 = vld [vmem:[%s452 + $0x78] sm:$0xff]
      %v867 = vld [vmem:[%s452 + $0x80] sm:$0xf]
      %v868 = vld [vmem:[%s452 + $0x84] sm:$0xff]
      %v869 = vld [vmem:[%s452 + $0x8c] sm:$0xf]
      %v870 = vld [vmem:[%s452 + $0x90] sm:$0xff]
      %v871 = vld [vmem:[%s452 + $0x98] sm:$0xf]
      %v872 = vld [vmem:[%s452 + $0x9c] sm:$0xff]
      %v873 = vld [vmem:[%s452 + $0xa4] sm:$0xf]
      %v874 = vld [vmem:[%s452 + $0xa8] sm:$0xff]
      %v875 = vld [vmem:[%s452 + $0xb0] sm:$0xf]
      %v876 = vld [vmem:[%s452 + $0xb4] sm:$0xff]
      %v877 = vld [vmem:[%s452 + $0xbc] sm:$0xf]
      %s878 = scalar_lea.vmem %s472, 7
      %v879 = vld [vmem:[%s878] ss:$8 sm:$0x7]
      %v881 = vlaneseq
      %v882 = vshrl.u32 %v881, 7
      %v883 = vsub.s32 0, %v882
      %v884 = vrot.slane %v879, %v883
      %v885 = vlaneseq
      %v886 = vshrl.u32 %v885, 7
      %v887 = vsub.s32 1, %v886
      %v888 = vrot.slane %v879, %v887
      %v889 = vlaneseq
      %v890 = vshrl.u32 %v889, 7
      %v891 = vsub.s32 2, %v890
      %v892 = vrot.slane %v879, %v891
      %v928 = vunpack.c.l.b16 %v846
      %v929 = vunpack.c.h.b16 %v846
      %v930 = vunpack.c.l.b16 %v847
      %v931 = vunpack.c.l.b16 %v848
      %v932 = vunpack.c.h.b16 %v848
      %v933 = vunpack.c.l.b16 %v849
      %v934 = vunpack.c.l.b16 %v850
      %v935 = vunpack.c.h.b16 %v850
      %v936 = vunpack.c.l.b16 %v851
      %v937 = vunpack.c.l.b16 %v852
      %v938 = vunpack.c.h.b16 %v852
      %v939 = vunpack.c.l.b16 %v853
      %v940 = vunpack.c.l.b16 %v854
      %v941 = vunpack.c.h.b16 %v854
      %v942 = vunpack.c.l.b16 %v855
      %v943 = vunpack.c.l.b16 %v856
      %v944 = vunpack.c.h.b16 %v856
      %v945 = vunpack.c.l.b16 %v857
      %v946 = vunpack.c.l.b16 %v858
      %v947 = vunpack.c.h.b16 %v858
      %v948 = vunpack.c.l.b16 %v859
      %v949 = vunpack.c.l.b16 %v860
      %v950 = vunpack.c.h.b16 %v860
      %v951 = vunpack.c.l.b16 %v861
      %v952 = vunpack.c.l.b16 %v862
      %v953 = vunpack.c.h.b16 %v862
      %v954 = vunpack.c.l.b16 %v863
      %v955 = vunpack.c.l.b16 %v864
      %v956 = vunpack.c.h.b16 %v864
      %v957 = vunpack.c.l.b16 %v865
      %v958 = vunpack.c.l.b16 %v866
      %v959 = vunpack.c.h.b16 %v866
      %v960 = vunpack.c.l.b16 %v867
      %v961 = vunpack.c.l.b16 %v868
      %v962 = vunpack.c.h.b16 %v868
      %v963 = vunpack.c.l.b16 %v869
      %v964 = vunpack.c.l.b16 %v870
      %v965 = vunpack.c.h.b16 %v870
      %v966 = vunpack.c.l.b16 %v871
      %v967 = vunpack.c.l.b16 %v872
      %v968 = vunpack.c.h.b16 %v872
      %v969 = vunpack.c.l.b16 %v873
      %v970 = vunpack.c.l.b16 %v874
      %v971 = vunpack.c.h.b16 %v874
      %v972 = vunpack.c.l.b16 %v875
      %v973 = vunpack.c.l.b16 %v876
      %v974 = vunpack.c.h.b16 %v876
      %v975 = vunpack.c.l.b16 %v877
      %v976 = vpack.c.b16 %v931, %v928
      %v977 = vpack.c.b16 %v932, %v929
      %v978 = vpack.c.b16 %v933, %v930
      %v979 = vpack.c.b16 %v937, %v934
      %v980 = vpack.c.b16 %v938, %v935
      %v981 = vpack.c.b16 %v939, %v936
      %v982 = vpack.c.b16 %v943, %v940
      %v983 = vpack.c.b16 %v944, %v941
      %v984 = vpack.c.b16 %v945, %v942
      %v985 = vpack.c.b16 %v949, %v946
      %v986 = vpack.c.b16 %v950, %v947
      %v987 = vpack.c.b16 %v951, %v948
      %v988 = vpack.c.b16 %v955, %v952
      %v989 = vpack.c.b16 %v956, %v953
      %v990 = vpack.c.b16 %v957, %v954
      %v991 = vpack.c.b16 %v961, %v958
      %v992 = vpack.c.b16 %v962, %v959
      %v993 = vpack.c.b16 %v963, %v960
      %v994 = vpack.c.b16 %v967, %v964
      %v995 = vpack.c.b16 %v968, %v965
      %v996 = vpack.c.b16 %v969, %v966
      %v997 = vpack.c.b16 %v973, %v970
      %v998 = vpack.c.b16 %v974, %v971
      %v999 = vpack.c.b16 %v975, %v972
      %1024 = vmatprep.subr.bf16.mxu0 %v998
      %1025 = vmatpush1.bf16.msra.mxu0 %v997
      %1026 = vmatprep.subr.bf16.mxu0 %v995
      %1027 = vmatpush1.bf16.msra.mxu0 %v994
      %1028 = vmatprep.subr.bf16.mxu0 %v992
      %1029 = vmatpush1.bf16.msra.mxu0 %v991
      %1030 = vmatprep.subr.bf16.mxu0 %v989
      %1031 = vmatpush1.bf16.msra.mxu0 %v988
      %1032 = vmatprep.subr.bf16.mxu0 %v986
      %1033 = vmatpush1.bf16.msra.mxu0 %v985
      %1034 = vmatprep.subr.bf16.mxu0 %v983
      %1035 = vmatpush1.bf16.msra.mxu0 %v982
      %1036 = vmatprep.subr.bf16.mxu0 %v980
      %1037 = vmatpush1.bf16.msra.mxu0 %v979
      %1038 = vmatprep.subr.bf16.mxu0 %v977
      %1039 = vmatpush1.bf16.msra.mxu0 %v976
      %1040 = vmatprep.subr.bf16.mxu0 0
      %1041 = vmatpush2.bf16.msra.mxu0 0
      %1042 = vmatprep.subr.bf16.mxu0 0
      %1043 = vmatpush2.bf16.msra.mxu0 0
      %1044 = vmatprep.subr.bf16.mxu0 0
      %1045 = vmatpush2.bf16.msra.mxu0 0
      %1046 = vmatprep.subr.bf16.mxu0 0
      %1047 = vmatpush2.bf16.msra.mxu0 0
      %1048 = vmatprep.subr.bf16.mxu0 0
      %1049 = vmatpush2.bf16.msra.mxu0 0
      %1050 = vmatprep.subr.bf16.mxu0 0
      %1051 = vmatpush2.bf16.msra.mxu0 0
      %1052 = vmatprep.subr.bf16.mxu0 0
      %1053 = vmatpush2.bf16.msra.mxu0 0
      %1054 = vmatprep.subr.bf16.mxu0 0
      %1055 = vmatpush2.bf16.msra.mxu0 0
      %1056 = vmatprep.mubr.bf16.mxu0 0
      %1057 = vmatmul.mubr.bf16.gmra.mxu0 %v843
      %v1058 = vpop.f32.mrf.mxu0
      %v1059 = vadd.f32 %v884, %v1058
      %v1060 = vpop.f32.mrf.mxu0
      %v1061 = vadd.f32 %v888, %v1060
      %v1062 = vpop.f32.mrf.mxu0
      %v1063 = vadd.f32 %v884, %v1062
      %v1064 = vpop.f32.mrf.mxu0
      %v1065 = vadd.f32 %v888, %v1064
      %1066 = vmatprep.mubr.bf16.mxu0 0
      %1067 = vmatmul.mubr.bf16.gmra.mxu0 %v844
      %v1068 = vpop.f32.mrf.mxu0
      %v1069 = vadd.f32 %v884, %v1068
      %v1070 = vpop.f32.mrf.mxu0
      %v1071 = vadd.f32 %v888, %v1070
      %v1072 = vpop.f32.mrf.mxu0
      %v1073 = vadd.f32 %v884, %v1072
      %v1074 = vpop.f32.mrf.mxu0
      %v1075 = vadd.f32 %v888, %v1074
      %1076 = vmatprep.mubr.bf16.mxu0 0
      %1077 = vmatmul.mubr.bf16.gmra.mxu0 %v845
      %v1078 = vpop.f32.mrf.mxu0
      %v1079 = vadd.f32 %v884, %v1078
      %v1080 = vpop.f32.mrf.mxu0
      %v1081 = vadd.f32 %v888, %v1080
      %v1082 = vpop.f32.mrf.mxu0
      %v1083 = vadd.f32 %v884, %v1082
      %v1084 = vpop.f32.mrf.mxu0
      %v1085 = vadd.f32 %v888, %v1084
      %1086 = vdwg.mxu0
      %1087 = vmatprep.subr.bf16.mxu0 0
      %1088 = vmatpush1.bf16.msra.mxu0 %v999
      %1089 = vmatprep.subr.bf16.mxu0 0
      %1090 = vmatpush1.bf16.msra.mxu0 %v996
      %1091 = vmatprep.subr.bf16.mxu0 0
      %1092 = vmatpush1.bf16.msra.mxu0 %v993
      %1093 = vmatprep.subr.bf16.mxu0 0
      %1094 = vmatpush1.bf16.msra.mxu0 %v990
      %1095 = vmatprep.subr.bf16.mxu0 0
      %1096 = vmatpush1.bf16.msra.mxu0 %v987
      %1097 = vmatprep.subr.bf16.mxu0 0
      %1098 = vmatpush1.bf16.msra.mxu0 %v984
      %1099 = vmatprep.subr.bf16.mxu0 0
      %1100 = vmatpush1.bf16.msra.mxu0 %v981
      %1101 = vmatprep.subr.bf16.mxu0 0
      %1102 = vmatpush1.bf16.msra.mxu0 %v978
      %1103 = vmatprep.subr.bf16.mxu0 0
      %1104 = vmatpush2.bf16.msra.mxu0 0
      %1105 = vmatprep.subr.bf16.mxu0 0
      %1106 = vmatpush2.bf16.msra.mxu0 0
      %1107 = vmatprep.subr.bf16.mxu0 0
      %1108 = vmatpush2.bf16.msra.mxu0 0
      %1109 = vmatprep.subr.bf16.mxu0 0
      %1110 = vmatpush2.bf16.msra.mxu0 0
      %1111 = vmatprep.subr.bf16.mxu0 0
      %1112 = vmatpush2.bf16.msra.mxu0 0
      %1113 = vmatprep.subr.bf16.mxu0 0
      %1114 = vmatpush2.bf16.msra.mxu0 0
      %1115 = vmatprep.subr.bf16.mxu0 0
      %1116 = vmatpush2.bf16.msra.mxu0 0
      %1117 = vmatprep.subr.bf16.mxu0 0
      %1118 = vmatpush2.bf16.msra.mxu0 0
      %1119 = vmatprep.mubr.bf16.mxu0 0
      %1120 = vmatmul.mubr.bf16.gmra.mxu0 %v843
      %v1121 = vpop.f32.mrf.mxu0
      %v1122 = vadd.f32 %v892, %v1121
      %v1123 = vpop.f32.mrf.mxu0
      %v1124 = vpop.f32.mrf.mxu0
      %v1125 = vadd.f32 %v892, %v1124
      %v1126 = vpop.f32.mrf.mxu0
      %1127 = vmatprep.mubr.bf16.mxu0 0
      %1128 = vmatmul.mubr.bf16.gmra.mxu0 %v844
      %v1129 = vpop.f32.mrf.mxu0
      %v1130 = vadd.f32 %v892, %v1129
      %v1131 = vpop.f32.mrf.mxu0
      %v1132 = vpop.f32.mrf.mxu0
      %v1133 = vadd.f32 %v892, %v1132
      %v1134 = vpop.f32.mrf.mxu0
      %1135 = vmatprep.mubr.bf16.mxu0 0
      %1136 = vmatmul.mubr.bf16.gmra.mxu0 %v845
      %v1137 = vpop.f32.mrf.mxu0
      %v1138 = vadd.f32 %v892, %v1137
      %v1139 = vpop.f32.mrf.mxu0
      %v1140 = vpop.f32.mrf.mxu0
      %v1141 = vadd.f32 %v892, %v1140
      %v1142 = vpop.f32.mrf.mxu0
      %1143 = vdwg.mxu0
      %v1144 = vlaneseq
      %v1145 = vand.u32 %v1144, 127
      %vm1146 = vcmp.lt.s32.totalorder %v1145, 17
      %v1147 = vmul.f32 %v1059, 0.17677669
      %v1148 = vmul.f32 %v1063, 0.17677669
      %v1149 = vmul.f32 %v1069, 0.17677669
      %v1150 = vpack.c.bf16 %v1148, %v1147
      %v1151 = vpack.c.bf16 %v1149, %v1149
      %v1152 = vpack.c.bf16 %v1065, %v1061
      %v1153 = vpack.c.bf16 %v1071, %v1071
      %v1154 = vpack.c.bf16 %v1125, %v1122
      %v1155 = vpack.c.bf16 %v1130, %v1130
      %vm1156 = vcmask 261120
      %v1158 = vsel %vm1156, %v1150, 0
      %v1161 = vsel %vm1156, %v1151, 0
      %v1164 = vsel %vm1156, %v1152, 0
      %v1167 = vsel %vm1156, %v1153, 0
      %1169 = vmatprep.subr.bf16.mxu0 0
      %1170 = vmatpush1.bf16.xpose.msra.mxu0 0
      %1171 = vmatprep.subr.bf16.mxu0 0
      %1172 = vmatpush1.bf16.xpose.msra.mxu0 0
      %1173 = vmatprep.subr.bf16.mxu0 0
      %1174 = vmatpush1.bf16.xpose.msra.mxu0 0
      %1175 = vmatprep.subr.bf16.mxu0 0
      %1176 = vmatpush1.bf16.xpose.msra.mxu0 0
      %1177 = vmatprep.subr.bf16.mxu0 0
      %1178 = vmatpush1.bf16.xpose.msra.mxu0 0
      %1179 = vmatprep.subr.bf16.mxu0 0
      %1180 = vmatpush1.bf16.xpose.msra.mxu0 0
      %1181 = vmatprep.subr.bf16.mxu0 0
      %1182 = vmatpush1.bf16.xpose.msra.mxu0 %v1167
      %1183 = vmatprep.subr.bf16.mxu0 0
      %1184 = vmatpush1.bf16.xpose.msra.mxu0 %v1164
      %1185 = vmatprep.subr.bf16.mxu0 0
      %1186 = vmatpush2.bf16.xpose.msra.mxu0 0
      %1187 = vmatprep.subr.bf16.mxu0 0
      %1188 = vmatpush2.bf16.xpose.msra.mxu0 0
      %1189 = vmatprep.subr.bf16.mxu0 0
      %1190 = vmatpush2.bf16.xpose.msra.mxu0 0
      %1191 = vmatprep.subr.bf16.mxu0 0
      %1192 = vmatpush2.bf16.xpose.msra.mxu0 0
      %1193 = vmatprep.subr.bf16.mxu0 0
      %1194 = vmatpush2.bf16.xpose.msra.mxu0 0
      %1195 = vmatprep.subr.bf16.mxu0 0
      %1196 = vmatpush2.bf16.xpose.msra.mxu0 0
      %1197 = vmatprep.subr.bf16.mxu0 0
      %1198 = vmatpush2.bf16.xpose.msra.mxu0 0
      %1199 = vmatprep.subr.bf16.mxu0 0
      %1200 = vmatpush2.bf16.xpose.msra.mxu0 0
      %1201 = vmatprep.mubr.bf16.mxu0 0
      %1202 = vmatmul.mubr.bf16.gmra.mxu0 %v1158
      %v1203 = vpop.f32.mrf.mxu0
      %v1204 = vadd.f32 0.0, %v1203
      %v1205 = vpop.f32.mrf.mxu0
      %v1206 = vpop.f32.mrf.mxu0
      %v1207 = vadd.f32 0.0, %v1206
      %v1208 = vpop.f32.mrf.mxu0
      %1209 = vmatprep.mubr.bf16.mxu0 0
      %1210 = vmatmul.mubr.bf16.gmra.mxu0 %v1161
      %v1211 = vpop.f32.mrf.mxu0
      %v1212 = vadd.f32 0.0, %v1211
      %v1213 = vpop.f32.mrf.mxu0
      %v1214 = vpop.f32.mrf.mxu0
      %v1215 = vpop.f32.mrf.mxu0
      %1216 = vdwg.mxu0
      %v1217 = vsel %vm1146, %v1204, -1e+09
      %v1218 = vsel %vm1146, %v1207, -1e+09
      %v1219 = vsel %vm1146, %v1212, -1e+09
      %vm1220 = vcmask 195584
      %v1221 = vsel %vm1220, %v1217, -inf
      %1222 = vmax.xlane.f32.xlu0 %v1221
      %v1223 = vpop.xlane.xlu0 %1222
      %v1224 = vsel %vm1220, %v1218, -inf
      %1225 = vmax.xlane.f32.xlu0 %v1224
      %v1226 = vpop.xlane.xlu0 %1225
      %v1227 = vsel %vm1220, %v1219, -inf
      %1228 = vmax.xlane.f32.xlu0 %v1227
      %v1229 = vpop.xlane.xlu0 %1228
      %v1230 = vsub.f32 %v1217, %v1223
      %v1231 = vsub.f32 %v1218, %v1226
      %v1232 = vsub.f32 %v1219, %v1229
      %v1233 = vmul.f32 %v1230, 1.442695
      %v1234 = vpow.pop %v1233
      %v1235 = vmul.f32 %v1231, 1.442695
      %v1236 = vpow.pop %v1235
      %v1237 = vmul.f32 %v1232, 1.442695
      %v1238 = vpow.pop %v1237
      %v1239 = vsel %vm1220, %v1234, 0.0
      %1240 = vadd.xlane.f32.xlu0 %v1239
      %v1241 = vpop.xlane.xlu0 %1240
      %v1242 = vsel %vm1220, %v1236, 0.0
      %1243 = vadd.xlane.f32.xlu0 %v1242
      %v1244 = vpop.xlane.xlu0 %1243
      %v1245 = vsel %vm1220, %v1238, 0.0
      %1246 = vadd.xlane.f32.xlu0 %v1245
      %v1247 = vpop.xlane.xlu0 %1246
      %v1248 = vrcp.pop %v1241
      %v1249 = vmul.f32 %v1234, %v1248
      %v1250 = vrcp.pop %v1244
      %v1251 = vmul.f32 %v1236, %v1250
      %v1252 = vrcp.pop %v1247
      %v1253 = vmul.f32 %v1238, %v1252
      %v1254 = vpack.c.bf16 %v1251, %v1249
      %v1255 = vpack.c.bf16 %v1253, %v1253
      %v1257 = vsel %vm1220, %v1254, 0
      %v1260 = vsel %vm1220, %v1255, 0
      %vm1262 = vcmask 1043456
      %v1264 = vsel %vm1262, %v1155, 0
      %1266 = vmatprep.subr.bf16.mxu0 0
      %1267 = vmatpush1.bf16.msra.mxu0 0
      %1268 = vmatprep.subr.bf16.mxu0 0
      %1269 = vmatpush1.bf16.msra.mxu0 0
      %1270 = vmatprep.subr.bf16.mxu0 0
      %1271 = vmatpush1.bf16.msra.mxu0 0
      %1272 = vmatprep.subr.bf16.mxu0 0
      %1273 = vmatpush1.bf16.msra.mxu0 0
      %1274 = vmatprep.subr.bf16.mxu0 0
      %1275 = vmatpush1.bf16.msra.mxu0 0
      %1276 = vmatprep.subr.bf16.mxu0 0
      %1277 = vmatpush1.bf16.msra.mxu0 0
      %1278 = vmatprep.subr.bf16.mxu0 0
      %1279 = vmatpush1.bf16.msra.mxu0 %v1264
      %1280 = vmatprep.subr.bf16.mxu0 0
      %1281 = vmatpush1.bf16.msra.mxu0 %v1154
      %1282 = vmatprep.subr.bf16.mxu0 0
      %1283 = vmatpush2.bf16.msra.mxu0 0
      %1284 = vmatprep.subr.bf16.mxu0 0
      %1285 = vmatpush2.bf16.msra.mxu0 0
      %1286 = vmatprep.subr.bf16.mxu0 0
      %1287 = vmatpush2.bf16.msra.mxu0 0
      %1288 = vmatprep.subr.bf16.mxu0 0
      %1289 = vmatpush2.bf16.msra.mxu0 0
      %1290 = vmatprep.subr.bf16.mxu0 0
      %1291 = vmatpush2.bf16.msra.mxu0 0
      %1292 = vmatprep.subr.bf16.mxu0 0
      %1293 = vmatpush2.bf16.msra.mxu0 0
      %1294 = vmatprep.subr.bf16.mxu0 0
      %1295 = vmatpush2.bf16.msra.mxu0 0
      %1296 = vmatprep.subr.bf16.mxu0 0
      %1297 = vmatpush2.bf16.msra.mxu0 0
      %1298 = vmatprep.mubr.bf16.mxu0 0
      %1299 = vmatmul.mubr.bf16.gmra.mxu0 %v1257
      %v1300 = vpop.f32.mrf.mxu0
      %v1301 = vadd.f32 0.0, %v1300
      %v1302 = vpop.f32.mrf.mxu0
      %v1303 = vpop.f32.mrf.mxu0
      %v1304 = vadd.f32 0.0, %v1303
      %v1305 = vpop.f32.mrf.mxu0
      %1306 = vmatprep.mubr.bf16.mxu0 0
      %1307 = vmatmul.mubr.bf16.gmra.mxu0 %v1260
      %v1308 = vpop.f32.mrf.mxu0
      %v1309 = vadd.f32 0.0, %v1308
      %v1310 = vpop.f32.mrf.mxu0
      %v1311 = vpop.f32.mrf.mxu0
      %v1312 = vpop.f32.mrf.mxu0
      %1313 = vdwg.mxu0
      %1316 = vrot.lane.b32.xlu0 %v1150, 96
      %v1317 = vpop.permute.xlu0 %1316
      %1318 = vrot.lane.b32.xlu0 %v1151, 96
      %v1319 = vpop.permute.xlu0 %1318
      %1322 = vrot.lane.b32.xlu0 %v1152, 96
      %v1323 = vpop.permute.xlu0 %1322
      %1324 = vrot.lane.b32.xlu0 %v1153, 96
      %v1325 = vpop.permute.xlu0 %1324
      %v1327 = vsel %vm1156, %v1317, 0
      %v1330 = vsel %vm1156, %v1319, 0
      %v1333 = vsel %vm1156, %v1323, 0
      %v1336 = vsel %vm1156, %v1325, 0
      %1338 = vmatprep.subr.bf16.mxu0 0
      %1339 = vmatpush1.bf16.xpose.msra.mxu0 0
      %1340 = vmatprep.subr.bf16.mxu0 0
      %1341 = vmatpush1.bf16.xpose.msra.mxu0 0
      %1342 = vmatprep.subr.bf16.mxu0 0
      %1343 = vmatpush1.bf16.xpose.msra.mxu0 0
      %1344 = vmatprep.subr.bf16.mxu0 0
      %1345 = vmatpush1.bf16.xpose.msra.mxu0 0
      %1346 = vmatprep.subr.bf16.mxu0 0
      %1347 = vmatpush1.bf16.xpose.msra.mxu0 0
      %1348 = vmatprep.subr.bf16.mxu0 0
      %1349 = vmatpush1.bf16.xpose.msra.mxu0 0
      %1350 = vmatprep.subr.bf16.mxu0 0
      %1351 = vmatpush1.bf16.xpose.msra.mxu0 %v1336
      %1352 = vmatprep.subr.bf16.mxu0 0
      %1353 = vmatpush1.bf16.xpose.msra.mxu0 %v1333
      %1354 = vmatprep.subr.bf16.mxu0 0
      %1355 = vmatpush2.bf16.xpose.msra.mxu0 0
      %1356 = vmatprep.subr.bf16.mxu0 0
      %1357 = vmatpush2.bf16.xpose.msra.mxu0 0
      %1358 = vmatprep.subr.bf16.mxu0 0
      %1359 = vmatpush2.bf16.xpose.msra.mxu0 0
      %1360 = vmatprep.subr.bf16.mxu0 0
      %1361 = vmatpush2.bf16.xpose.msra.mxu0 0
      %1362 = vmatprep.subr.bf16.mxu0 0
      %1363 = vmatpush2.bf16.xpose.msra.mxu0 0
      %1364 = vmatprep.subr.bf16.mxu0 0
      %1365 = vmatpush2.bf16.xpose.msra.mxu0 0
      %1366 = vmatprep.subr.bf16.mxu0 0
      %1367 = vmatpush2.bf16.xpose.msra.mxu0 0
      %1368 = vmatprep.subr.bf16.mxu0 0
      %1369 = vmatpush2.bf16.xpose.msra.mxu0 0
      %1370 = vmatprep.mubr.bf16.mxu0 0
      %1371 = vmatmul.mubr.bf16.gmra.mxu0 %v1327
      %v1372 = vpop.f32.mrf.mxu0
      %v1373 = vadd.f32 0.0, %v1372
      %v1374 = vpop.f32.mrf.mxu0
      %v1375 = vpop.f32.mrf.mxu0
      %v1376 = vadd.f32 0.0, %v1375
      %v1377 = vpop.f32.mrf.mxu0
      %1378 = vmatprep.mubr.bf16.mxu0 0
      %1379 = vmatmul.mubr.bf16.gmra.mxu0 %v1330
      %v1380 = vpop.f32.mrf.mxu0
      %v1381 = vadd.f32 0.0, %v1380
      %v1382 = vpop.f32.mrf.mxu0
      %v1383 = vpop.f32.mrf.mxu0
      %v1384 = vpop.f32.mrf.mxu0
      %1385 = vdwg.mxu0
      %v1386 = vsel %vm1146, %v1373, -1e+09
      %v1387 = vsel %vm1146, %v1376, -1e+09
      %v1388 = vsel %vm1146, %v1381, -1e+09
      %v1389 = vsel %vm1220, %v1386, -inf
      %1390 = vmax.xlane.f32.xlu0 %v1389
      %v1391 = vpop.xlane.xlu0 %1390
      %v1392 = vsel %vm1220, %v1387, -inf
      %1393 = vmax.xlane.f32.xlu0 %v1392
      %v1394 = vpop.xlane.xlu0 %1393
      %v1395 = vsel %vm1220, %v1388, -inf
      %1396 = vmax.xlane.f32.xlu0 %v1395
      %v1397 = vpop.xlane.xlu0 %1396
      %v1398 = vsub.f32 %v1386, %v1391
      %v1399 = vsub.f32 %v1387, %v1394
      %v1400 = vsub.f32 %v1388, %v1397
      %v1401 = vmul.f32 %v1398, 1.442695
      %v1402 = vpow.pop %v1401
      %v1403 = vmul.f32 %v1399, 1.442695
      %v1404 = vpow.pop %v1403
      %v1405 = vmul.f32 %v1400, 1.442695
      %v1406 = vpow.pop %v1405
      %v1407 = vsel %vm1220, %v1402, 0.0
      %1408 = vadd.xlane.f32.xlu0 %v1407
      %v1409 = vpop.xlane.xlu0 %1408
      %v1410 = vsel %vm1220, %v1404, 0.0
      %1411 = vadd.xlane.f32.xlu0 %v1410
      %v1412 = vpop.xlane.xlu0 %1411
      %v1413 = vsel %vm1220, %v1406, 0.0
      %1414 = vadd.xlane.f32.xlu0 %v1413
      %v1415 = vpop.xlane.xlu0 %1414
      %v1416 = vrcp.pop %v1409
      %v1417 = vmul.f32 %v1402, %v1416
      %v1418 = vrcp.pop %v1412
      %v1419 = vmul.f32 %v1404, %v1418
      %v1420 = vrcp.pop %v1415
      %v1421 = vmul.f32 %v1406, %v1420
      %v1422 = vpack.c.bf16 %v1419, %v1417
      %v1423 = vpack.c.bf16 %v1421, %v1421
      %1426 = vrot.lane.b32.xlu0 %v1154, 96
      %v1427 = vpop.permute.xlu0 %1426
      %1428 = vrot.lane.b32.xlu0 %v1155, 96
      %v1429 = vpop.permute.xlu0 %1428
      %v1432 = vsel %vm1220, %v1422, 0
      %v1435 = vsel %vm1220, %v1423, 0
      %v1438 = vsel %vm1262, %v1429, 0
      %1440 = vmatprep.subr.bf16.mxu0 0
      %1441 = vmatpush1.bf16.msra.mxu0 0
      %1442 = vmatprep.subr.bf16.mxu0 0
      %1443 = vmatpush1.bf16.msra.mxu0 0
      %1444 = vmatprep.subr.bf16.mxu0 0
      %1445 = vmatpush1.bf16.msra.mxu0 0
      %1446 = vmatprep.subr.bf16.mxu0 0
      %1447 = vmatpush1.bf16.msra.mxu0 0
      %1448 = vmatprep.subr.bf16.mxu0 0
      %1449 = vmatpush1.bf16.msra.mxu0 0
      %1450 = vmatprep.subr.bf16.mxu0 0
      %1451 = vmatpush1.bf16.msra.mxu0 0
      %1452 = vmatprep.subr.bf16.mxu0 0
      %1453 = vmatpush1.bf16.msra.mxu0 %v1438
      %1454 = vmatprep.subr.bf16.mxu0 0
      %1455 = vmatpush1.bf16.msra.mxu0 %v1427
      %1456 = vmatprep.subr.bf16.mxu0 0
      %1457 = vmatpush2.bf16.msra.mxu0 0
      %1458 = vmatprep.subr.bf16.mxu0 0
      %1459 = vmatpush2.bf16.msra.mxu0 0
      %1460 = vmatprep.subr.bf16.mxu0 0
      %1461 = vmatpush2.bf16.msra.mxu0 0
      %1462 = vmatprep.subr.bf16.mxu0 0
      %1463 = vmatpush2.bf16.msra.mxu0 0
      %1464 = vmatprep.subr.bf16.mxu0 0
      %1465 = vmatpush2.bf16.msra.mxu0 0
      %1466 = vmatprep.subr.bf16.mxu0 0
      %1467 = vmatpush2.bf16.msra.mxu0 0
      %1468 = vmatprep.subr.bf16.mxu0 0
      %1469 = vmatpush2.bf16.msra.mxu0 0
      %1470 = vmatprep.subr.bf16.mxu0 0
      %1471 = vmatpush2.bf16.msra.mxu0 0
      %1472 = vmatprep.mubr.bf16.mxu0 0
      %1473 = vmatmul.mubr.bf16.gmra.mxu0 %v1432
      %v1474 = vpop.f32.mrf.mxu0
      %v1475 = vadd.f32 0.0, %v1474
      %v1476 = vpop.f32.mrf.mxu0
      %v1477 = vpop.f32.mrf.mxu0
      %v1478 = vadd.f32 0.0, %v1477
      %v1479 = vpop.f32.mrf.mxu0
      %1480 = vmatprep.mubr.bf16.mxu0 0
      %1481 = vmatmul.mubr.bf16.gmra.mxu0 %v1435
      %v1482 = vpop.f32.mrf.mxu0
      %v1483 = vadd.f32 0.0, %v1482
      %v1484 = vpop.f32.mrf.mxu0
      %v1485 = vpop.f32.mrf.mxu0
      %v1486 = vpop.f32.mrf.mxu0
      %1487 = vdwg.mxu0
      %1488 = vrot.lane.b32.xlu0 %v1150, 64
      %v1489 = vpop.permute.xlu0 %1488
      %1490 = vrot.lane.b32.xlu0 %v1151, 64
      %v1491 = vpop.permute.xlu0 %1490
      %1492 = vrot.lane.b32.xlu0 %v1152, 64
      %v1493 = vpop.permute.xlu0 %1492
      %1494 = vrot.lane.b32.xlu0 %v1153, 64
      %v1495 = vpop.permute.xlu0 %1494
      %v1497 = vsel %vm1156, %v1489, 0
      %v1500 = vsel %vm1156, %v1491, 0
      %v1503 = vsel %vm1156, %v1493, 0
      %v1506 = vsel %vm1156, %v1495, 0
      %1508 = vmatprep.subr.bf16.mxu0 0
      %1509 = vmatpush1.bf16.xpose.msra.mxu0 0
      %1510 = vmatprep.subr.bf16.mxu0 0
      %1511 = vmatpush1.bf16.xpose.msra.mxu0 0
      %1512 = vmatprep.subr.bf16.mxu0 0
      %1513 = vmatpush1.bf16.xpose.msra.mxu0 0
      %1514 = vmatprep.subr.bf16.mxu0 0
      %1515 = vmatpush1.bf16.xpose.msra.mxu0 0
      %1516 = vmatprep.subr.bf16.mxu0 0
      %1517 = vmatpush1.bf16.xpose.msra.mxu0 0
      %1518 = vmatprep.subr.bf16.mxu0 0
      %1519 = vmatpush1.bf16.xpose.msra.mxu0 0
      %1520 = vmatprep.subr.bf16.mxu0 0
      %1521 = vmatpush1.bf16.xpose.msra.mxu0 %v1506
      %1522 = vmatprep.subr.bf16.mxu0 0
      %1523 = vmatpush1.bf16.xpose.msra.mxu0 %v1503
      %1524 = vmatprep.subr.bf16.mxu0 0
      %1525 = vmatpush2.bf16.xpose.msra.mxu0 0
      %1526 = vmatprep.subr.bf16.mxu0 0
      %1527 = vmatpush2.bf16.xpose.msra.mxu0 0
      %1528 = vmatprep.subr.bf16.mxu0 0
      %1529 = vmatpush2.bf16.xpose.msra.mxu0 0
      %1530 = vmatprep.subr.bf16.mxu0 0
      %1531 = vmatpush2.bf16.xpose.msra.mxu0 0
      %1532 = vmatprep.subr.bf16.mxu0 0
      %1533 = vmatpush2.bf16.xpose.msra.mxu0 0
      %1534 = vmatprep.subr.bf16.mxu0 0
      %1535 = vmatpush2.bf16.xpose.msra.mxu0 0
      %1536 = vmatprep.subr.bf16.mxu0 0
      %1537 = vmatpush2.bf16.xpose.msra.mxu0 0
      %1538 = vmatprep.subr.bf16.mxu0 0
      %1539 = vmatpush2.bf16.xpose.msra.mxu0 0
      %1540 = vmatprep.mubr.bf16.mxu0 0
      %1541 = vmatmul.mubr.bf16.gmra.mxu0 %v1497
      %v1542 = vpop.f32.mrf.mxu0
      %v1543 = vadd.f32 0.0, %v1542
      %v1544 = vpop.f32.mrf.mxu0
      %v1545 = vpop.f32.mrf.mxu0
      %v1546 = vadd.f32 0.0, %v1545
      %v1547 = vpop.f32.mrf.mxu0
      %1548 = vmatprep.mubr.bf16.mxu0 0
      %1549 = vmatmul.mubr.bf16.gmra.mxu0 %v1500
      %v1550 = vpop.f32.mrf.mxu0
      %v1551 = vadd.f32 0.0, %v1550
      %v1552 = vpop.f32.mrf.mxu0
      %v1553 = vpop.f32.mrf.mxu0
      %v1554 = vpop.f32.mrf.mxu0
      %1555 = vdwg.mxu0
      %v1556 = vsel %vm1146, %v1543, -1e+09
      %v1557 = vsel %vm1146, %v1546, -1e+09
      %v1558 = vsel %vm1146, %v1551, -1e+09
      %v1559 = vsel %vm1220, %v1556, -inf
      %1560 = vmax.xlane.f32.xlu0 %v1559
      %v1561 = vpop.xlane.xlu0 %1560
      %v1562 = vsel %vm1220, %v1557, -inf
      %1563 = vmax.xlane.f32.xlu0 %v1562
      %v1564 = vpop.xlane.xlu0 %1563
      %v1565 = vsel %vm1220, %v1558, -inf
      %1566 = vmax.xlane.f32.xlu0 %v1565
      %v1567 = vpop.xlane.xlu0 %1566
      %v1568 = vsub.f32 %v1556, %v1561
      %v1569 = vsub.f32 %v1557, %v1564
      %v1570 = vsub.f32 %v1558, %v1567
      %v1571 = vmul.f32 %v1568, 1.442695
      %v1572 = vpow.pop %v1571
      %v1573 = vmul.f32 %v1569, 1.442695
      %v1574 = vpow.pop %v1573
      %v1575 = vmul.f32 %v1570, 1.442695
      %v1576 = vpow.pop %v1575
      %v1577 = vsel %vm1220, %v1572, 0.0
      %1578 = vadd.xlane.f32.xlu0 %v1577
      %v1579 = vpop.xlane.xlu0 %1578
      %v1580 = vsel %vm1220, %v1574, 0.0
      %1581 = vadd.xlane.f32.xlu0 %v1580
      %v1582 = vpop.xlane.xlu0 %1581
      %v1583 = vsel %vm1220, %v1576, 0.0
      %1584 = vadd.xlane.f32.xlu0 %v1583
      %v1585 = vpop.xlane.xlu0 %1584
      %v1586 = vrcp.pop %v1579
      %v1587 = vmul.f32 %v1572, %v1586
      %v1588 = vrcp.pop %v1582
      %v1589 = vmul.f32 %v1574, %v1588
      %v1590 = vrcp.pop %v1585
      %v1591 = vmul.f32 %v1576, %v1590
      %v1592 = vpack.c.bf16 %v1589, %v1587
      %v1593 = vpack.c.bf16 %v1591, %v1591
      %1594 = vrot.lane.b32.xlu0 %v1154, 64
      %v1595 = vpop.permute.xlu0 %1594
      %1596 = vrot.lane.b32.xlu0 %v1155, 64
      %v1597 = vpop.permute.xlu0 %1596
      %v1600 = vsel %vm1220, %v1592, 0
      %v1603 = vsel %vm1220, %v1593, 0
      %v1606 = vsel %vm1262, %v1597, 0
      %1608 = vmatprep.subr.bf16.mxu0 0
      %1609 = vmatpush1.bf16.msra.mxu0 0
      %1610 = vmatprep.subr.bf16.mxu0 0
      %1611 = vmatpush1.bf16.msra.mxu0 0
      %1612 = vmatprep.subr.bf16.mxu0 0
      %1613 = vmatpush1.bf16.msra.mxu0 0
      %1614 = vmatprep.subr.bf16.mxu0 0
      %1615 = vmatpush1.bf16.msra.mxu0 0
      %1616 = vmatprep.subr.bf16.mxu0 0
      %1617 = vmatpush1.bf16.msra.mxu0 0
      %1618 = vmatprep.subr.bf16.mxu0 0
      %1619 = vmatpush1.bf16.msra.mxu0 0
      %1620 = vmatprep.subr.bf16.mxu0 0
      %1621 = vmatpush1.bf16.msra.mxu0 %v1606
      %1622 = vmatprep.subr.bf16.mxu0 0
      %1623 = vmatpush1.bf16.msra.mxu0 %v1595
      %1624 = vmatprep.subr.bf16.mxu0 0
      %1625 = vmatpush2.bf16.msra.mxu0 0
      %1626 = vmatprep.subr.bf16.mxu0 0
      %1627 = vmatpush2.bf16.msra.mxu0 0
      %1628 = vmatprep.subr.bf16.mxu0 0
      %1629 = vmatpush2.bf16.msra.mxu0 0
      %1630 = vmatprep.subr.bf16.mxu0 0
      %1631 = vmatpush2.bf16.msra.mxu0 0
      %1632 = vmatprep.subr.bf16.mxu0 0
      %1633 = vmatpush2.bf16.msra.mxu0 0
      %1634 = vmatprep.subr.bf16.mxu0 0
      %1635 = vmatpush2.bf16.msra.mxu0 0
      %1636 = vmatprep.subr.bf16.mxu0 0
      %1637 = vmatpush2.bf16.msra.mxu0 0
      %1638 = vmatprep.subr.bf16.mxu0 0
      %1639 = vmatpush2.bf16.msra.mxu0 0
      %1640 = vmatprep.mubr.bf16.mxu0 0
      %1641 = vmatmul.mubr.bf16.gmra.mxu0 %v1600
      %v1642 = vpop.f32.mrf.mxu0
      %v1643 = vadd.f32 0.0, %v1642
      %v1644 = vpop.f32.mrf.mxu0
      %v1645 = vpop.f32.mrf.mxu0
      %v1646 = vadd.f32 0.0, %v1645
      %v1647 = vpop.f32.mrf.mxu0
      %1648 = vmatprep.mubr.bf16.mxu0 0
      %1649 = vmatmul.mubr.bf16.gmra.mxu0 %v1603
      %v1650 = vpop.f32.mrf.mxu0
      %v1651 = vadd.f32 0.0, %v1650
      %v1652 = vpop.f32.mrf.mxu0
      %v1653 = vpop.f32.mrf.mxu0
      %v1654 = vpop.f32.mrf.mxu0
      %1655 = vdwg.mxu0
      %1656 = vrot.lane.b32.xlu0 %v1150, 32
      %v1657 = vpop.permute.xlu0 %1656
      %1658 = vrot.lane.b32.xlu0 %v1151, 32
      %v1659 = vpop.permute.xlu0 %1658
      %1660 = vrot.lane.b32.xlu0 %v1152, 32
      %v1661 = vpop.permute.xlu0 %1660
      %1662 = vrot.lane.b32.xlu0 %v1153, 32
      %v1663 = vpop.permute.xlu0 %1662
      %v1665 = vsel %vm1156, %v1657, 0
      %v1668 = vsel %vm1156, %v1659, 0
      %v1671 = vsel %vm1156, %v1661, 0
      %v1674 = vsel %vm1156, %v1663, 0
      %1676 = vmatprep.subr.bf16.mxu0 0
      %1677 = vmatpush1.bf16.xpose.msra.mxu0 0
      %1678 = vmatprep.subr.bf16.mxu0 0
      %1679 = vmatpush1.bf16.xpose.msra.mxu0 0
      %1680 = vmatprep.subr.bf16.mxu0 0
      %1681 = vmatpush1.bf16.xpose.msra.mxu0 0
      %1682 = vmatprep.subr.bf16.mxu0 0
      %1683 = vmatpush1.bf16.xpose.msra.mxu0 0
      %1684 = vmatprep.subr.bf16.mxu0 0
      %1685 = vmatpush1.bf16.xpose.msra.mxu0 0
      %1686 = vmatprep.subr.bf16.mxu0 0
      %1687 = vmatpush1.bf16.xpose.msra.mxu0 0
      %1688 = vmatprep.subr.bf16.mxu0 0
      %1689 = vmatpush1.bf16.xpose.msra.mxu0 %v1674
      %1690 = vmatprep.subr.bf16.mxu0 0
      %1691 = vmatpush1.bf16.xpose.msra.mxu0 %v1671
      %1692 = vmatprep.subr.bf16.mxu0 0
      %1693 = vmatpush2.bf16.xpose.msra.mxu0 0
      %1694 = vmatprep.subr.bf16.mxu0 0
      %1695 = vmatpush2.bf16.xpose.msra.mxu0 0
      %1696 = vmatprep.subr.bf16.mxu0 0
      %1697 = vmatpush2.bf16.xpose.msra.mxu0 0
      %1698 = vmatprep.subr.bf16.mxu0 0
      %1699 = vmatpush2.bf16.xpose.msra.mxu0 0
      %1700 = vmatprep.subr.bf16.mxu0 0
      %1701 = vmatpush2.bf16.xpose.msra.mxu0 0
      %1702 = vmatprep.subr.bf16.mxu0 0
      %1703 = vmatpush2.bf16.xpose.msra.mxu0 0
      %1704 = vmatprep.subr.bf16.mxu0 0
      %1705 = vmatpush2.bf16.xpose.msra.mxu0 0
      %1706 = vmatprep.subr.bf16.mxu0 0
      %1707 = vmatpush2.bf16.xpose.msra.mxu0 0
      %1708 = vmatprep.mubr.bf16.mxu0 0
      %1709 = vmatmul.mubr.bf16.gmra.mxu0 %v1665
      %v1710 = vpop.f32.mrf.mxu0
      %v1711 = vadd.f32 0.0, %v1710
      %v1712 = vpop.f32.mrf.mxu0
      %v1713 = vpop.f32.mrf.mxu0
      %v1714 = vadd.f32 0.0, %v1713
      %v1715 = vpop.f32.mrf.mxu0
      %1716 = vmatprep.mubr.bf16.mxu0 0
      %1717 = vmatmul.mubr.bf16.gmra.mxu0 %v1668
      %v1718 = vpop.f32.mrf.mxu0
      %v1719 = vadd.f32 0.0, %v1718
      %v1720 = vpop.f32.mrf.mxu0
      %v1721 = vpop.f32.mrf.mxu0
      %v1722 = vpop.f32.mrf.mxu0
      %1723 = vdwg.mxu0
      %v1724 = vsel %vm1146, %v1711, -1e+09
      %v1725 = vsel %vm1146, %v1714, -1e+09
      %v1726 = vsel %vm1146, %v1719, -1e+09
      %v1727 = vsel %vm1220, %v1724, -inf
      %1728 = vmax.xlane.f32.xlu0 %v1727
      %v1729 = vpop.xlane.xlu0 %1728
      %v1730 = vsel %vm1220, %v1725, -inf
      %1731 = vmax.xlane.f32.xlu0 %v1730
      %v1732 = vpop.xlane.xlu0 %1731
      %v1733 = vsel %vm1220, %v1726, -inf
      %1734 = vmax.xlane.f32.xlu0 %v1733
      %v1735 = vpop.xlane.xlu0 %1734
      %v1736 = vsub.f32 %v1724, %v1729
      %v1737 = vsub.f32 %v1725, %v1732
      %v1738 = vsub.f32 %v1726, %v1735
      %v1739 = vmul.f32 %v1736, 1.442695
      %v1740 = vpow.pop %v1739
      %v1741 = vmul.f32 %v1737, 1.442695
      %v1742 = vpow.pop %v1741
      %v1743 = vmul.f32 %v1738, 1.442695
      %v1744 = vpow.pop %v1743
      %v1745 = vsel %vm1220, %v1740, 0.0
      %1746 = vadd.xlane.f32.xlu0 %v1745
      %v1747 = vpop.xlane.xlu0 %1746
      %v1748 = vsel %vm1220, %v1742, 0.0
      %1749 = vadd.xlane.f32.xlu0 %v1748
      %v1750 = vpop.xlane.xlu0 %1749
      %v1751 = vsel %vm1220, %v1744, 0.0
      %1752 = vadd.xlane.f32.xlu0 %v1751
      %v1753 = vpop.xlane.xlu0 %1752
      %v1754 = vrcp.pop %v1747
      %v1755 = vmul.f32 %v1740, %v1754
      %v1756 = vrcp.pop %v1750
      %v1757 = vmul.f32 %v1742, %v1756
      %v1758 = vrcp.pop %v1753
      %v1759 = vmul.f32 %v1744, %v1758
      %v1760 = vpack.c.bf16 %v1757, %v1755
      %v1761 = vpack.c.bf16 %v1759, %v1759
      %1762 = vrot.lane.b32.xlu0 %v1154, 32
      %v1763 = vpop.permute.xlu0 %1762
      %1764 = vrot.lane.b32.xlu0 %v1155, 32
      %v1765 = vpop.permute.xlu0 %1764
      %v1768 = vsel %vm1220, %v1760, 0
      %v1771 = vsel %vm1220, %v1761, 0
      %v1774 = vsel %vm1262, %v1765, 0
      %1776 = vmatprep.subr.bf16.mxu0 0
      %1777 = vmatpush1.bf16.msra.mxu0 0
      %1778 = vmatprep.subr.bf16.mxu0 0
      %1779 = vmatpush1.bf16.msra.mxu0 0
      %1780 = vmatprep.subr.bf16.mxu0 0
      %1781 = vmatpush1.bf16.msra.mxu0 0
      %1782 = vmatprep.subr.bf16.mxu0 0
      %1783 = vmatpush1.bf16.msra.mxu0 0
      %1784 = vmatprep.subr.bf16.mxu0 0
      %1785 = vmatpush1.bf16.msra.mxu0 0
      %1786 = vmatprep.subr.bf16.mxu0 0
      %1787 = vmatpush1.bf16.msra.mxu0 0
      %1788 = vmatprep.subr.bf16.mxu0 0
      %1789 = vmatpush1.bf16.msra.mxu0 %v1774
      %1790 = vmatprep.subr.bf16.mxu0 0
      %1791 = vmatpush1.bf16.msra.mxu0 %v1763
      %1792 = vmatprep.subr.bf16.mxu0 0
      %1793 = vmatpush2.bf16.msra.mxu0 0
      %1794 = vmatprep.subr.bf16.mxu0 0
      %1795 = vmatpush2.bf16.msra.mxu0 0
      %1796 = vmatprep.subr.bf16.mxu0 0
      %1797 = vmatpush2.bf16.msra.mxu0 0
      %1798 = vmatprep.subr.bf16.mxu0 0
      %1799 = vmatpush2.bf16.msra.mxu0 0
      %1800 = vmatprep.subr.bf16.mxu0 0
      %1801 = vmatpush2.bf16.msra.mxu0 0
      %1802 = vmatprep.subr.bf16.mxu0 0
      %1803 = vmatpush2.bf16.msra.mxu0 0
      %1804 = vmatprep.subr.bf16.mxu0 0
      %1805 = vmatpush2.bf16.msra.mxu0 0
      %1806 = vmatprep.subr.bf16.mxu0 0
      %1807 = vmatpush2.bf16.msra.mxu0 0
      %1808 = vmatprep.mubr.bf16.mxu0 0
      %1809 = vmatmul.mubr.bf16.gmra.mxu0 %v1768
      %v1810 = vpop.f32.mrf.mxu0
      %v1811 = vadd.f32 0.0, %v1810
      %v1812 = vpop.f32.mrf.mxu0
      %v1813 = vpop.f32.mrf.mxu0
      %v1814 = vadd.f32 0.0, %v1813
      %v1815 = vpop.f32.mrf.mxu0
      %1816 = vmatprep.mubr.bf16.mxu0 0
      %1817 = vmatmul.mubr.bf16.gmra.mxu0 %v1771
      %v1818 = vpop.f32.mrf.mxu0
      %v1819 = vadd.f32 0.0, %v1818
      %v1820 = vpop.f32.mrf.mxu0
      %v1821 = vpop.f32.mrf.mxu0
      %v1822 = vpop.f32.mrf.mxu0
      %1823 = vdwg.mxu0
      %1827 = vrot.lane.b32.xlu0 %v1475, 32
      %v1828 = vpop.permute.xlu0 %1827
      %1829 = vrot.lane.b32.xlu0 %v1478, 32
      %v1830 = vpop.permute.xlu0 %1829
      %1831 = vrot.lane.b32.xlu0 %v1483, 32
      %v1832 = vpop.permute.xlu0 %1831
      %1839 = vrot.lane.b32.xlu0 %v1643, 64
      %v1840 = vpop.permute.xlu0 %1839
      %1841 = vrot.lane.b32.xlu0 %v1646, 64
      %v1842 = vpop.permute.xlu0 %1841
      %1843 = vrot.lane.b32.xlu0 %v1651, 64
      %v1844 = vpop.permute.xlu0 %1843
      %1851 = vrot.lane.b32.xlu0 %v1811, 96
      %v1852 = vpop.permute.xlu0 %1851
      %1853 = vrot.lane.b32.xlu0 %v1814, 96
      %v1854 = vpop.permute.xlu0 %1853
      %1855 = vrot.lane.b32.xlu0 %v1819, 96
      %v1856 = vpop.permute.xlu0 %1855
      %v1860 = vsel %vm1156, %v1301, %v1828
      %v1861 = vsel %vm1156, %v1304, %v1830
      %v1862 = vsel %vm1156, %v1309, %v1832
      %vm1863 = vcmask 523264
      %v1864 = vsel %vm1863, %v1860, %v1840
      %v1865 = vsel %vm1863, %v1861, %v1842
      %v1866 = vsel %vm1863, %v1862, %v1844
      %vm1867 = vcmask 785408
      %v1868 = vsel %vm1867, %v1864, %v1852
      %v1869 = vsel %vm1867, %v1865, %v1854
      %v1870 = vsel %vm1867, %v1866, %v1856
      %v1871 = vmul.f32 %v1073, 0.17677669
      %v1872 = vmul.f32 %v1079, 0.17677669
      %v1873 = vmul.f32 %v1083, 0.17677669
      %v1874 = vpack.c.bf16 %v1872, %v1871
      %v1875 = vpack.c.bf16 %v1873, %v1873
      %v1876 = vpack.c.bf16 %v1081, %v1075
      %v1877 = vpack.c.bf16 %v1085, %v1085
      %v1878 = vpack.c.bf16 %v1138, %v1133
      %v1879 = vpack.c.bf16 %v1141, %v1141
      %v1881 = vsel %vm1156, %v1874, 0
      %v1884 = vsel %vm1156, %v1875, 0
      %v1887 = vsel %vm1156, %v1876, 0
      %v1890 = vsel %vm1156, %v1877, 0
      %1892 = vmatprep.subr.bf16.mxu0 0
      %1893 = vmatpush1.bf16.xpose.msra.mxu0 0
      %1894 = vmatprep.subr.bf16.mxu0 0
      %1895 = vmatpush1.bf16.xpose.msra.mxu0 0
      %1896 = vmatprep.subr.bf16.mxu0 0
      %1897 = vmatpush1.bf16.xpose.msra.mxu0 0
      %1898 = vmatprep.subr.bf16.mxu0 0
      %1899 = vmatpush1.bf16.xpose.msra.mxu0 0
      %1900 = vmatprep.subr.bf16.mxu0 0
      %1901 = vmatpush1.bf16.xpose.msra.mxu0 0
      %1902 = vmatprep.subr.bf16.mxu0 0
      %1903 = vmatpush1.bf16.xpose.msra.mxu0 0
      %1904 = vmatprep.subr.bf16.mxu0 0
      %1905 = vmatpush1.bf16.xpose.msra.mxu0 %v1890
      %1906 = vmatprep.subr.bf16.mxu0 0
      %1907 = vmatpush1.bf16.xpose.msra.mxu0 %v1887
      %1908 = vmatprep.subr.bf16.mxu0 0
      %1909 = vmatpush2.bf16.xpose.msra.mxu0 0
      %1910 = vmatprep.subr.bf16.mxu0 0
      %1911 = vmatpush2.bf16.xpose.msra.mxu0 0
      %1912 = vmatprep.subr.bf16.mxu0 0
      %1913 = vmatpush2.bf16.xpose.msra.mxu0 0
      %1914 = vmatprep.subr.bf16.mxu0 0
      %1915 = vmatpush2.bf16.xpose.msra.mxu0 0
      %1916 = vmatprep.subr.bf16.mxu0 0
      %1917 = vmatpush2.bf16.xpose.msra.mxu0 0
      %1918 = vmatprep.subr.bf16.mxu0 0
      %1919 = vmatpush2.bf16.xpose.msra.mxu0 0
      %1920 = vmatprep.subr.bf16.mxu0 0
      %1921 = vmatpush2.bf16.xpose.msra.mxu0 0
      %1922 = vmatprep.subr.bf16.mxu0 0
      %1923 = vmatpush2.bf16.xpose.msra.mxu0 0
      %1924 = vmatprep.mubr.bf16.mxu0 0
      %1925 = vmatmul.mubr.bf16.gmra.mxu0 %v1881
      %v1926 = vpop.f32.mrf.mxu0
      %v1927 = vadd.f32 0.0, %v1926
      %v1928 = vpop.f32.mrf.mxu0
      %v1929 = vpop.f32.mrf.mxu0
      %v1930 = vadd.f32 0.0, %v1929
      %v1931 = vpop.f32.mrf.mxu0
      %1932 = vmatprep.mubr.bf16.mxu0 0
      %1933 = vmatmul.mubr.bf16.gmra.mxu0 %v1884
      %v1934 = vpop.f32.mrf.mxu0
      %v1935 = vadd.f32 0.0, %v1934
      %v1936 = vpop.f32.mrf.mxu0
      %v1937 = vpop.f32.mrf.mxu0
      %v1938 = vpop.f32.mrf.mxu0
      %1939 = vdwg.mxu0
      %v1940 = vsel %vm1146, %v1927, -1e+09
      %v1941 = vsel %vm1146, %v1930, -1e+09
      %v1942 = vsel %vm1146, %v1935, -1e+09
      %v1943 = vsel %vm1220, %v1940, -inf
      %1944 = vmax.xlane.f32.xlu0 %v1943
      %v1945 = vpop.xlane.xlu0 %1944
      %v1946 = vsel %vm1220, %v1941, -inf
      %1947 = vmax.xlane.f32.xlu0 %v1946
      %v1948 = vpop.xlane.xlu0 %1947
      %v1949 = vsel %vm1220, %v1942, -inf
      %1950 = vmax.xlane.f32.xlu0 %v1949
      %v1951 = vpop.xlane.xlu0 %1950
      %v1952 = vsub.f32 %v1940, %v1945
      %v1953 = vsub.f32 %v1941, %v1948
      %v1954 = vsub.f32 %v1942, %v1951
      %v1955 = vmul.f32 %v1952, 1.442695
      %v1956 = vpow.pop %v1955
      %v1957 = vmul.f32 %v1953, 1.442695
      %v1958 = vpow.pop %v1957
      %v1959 = vmul.f32 %v1954, 1.442695
      %v1960 = vpow.pop %v1959
      %v1961 = vsel %vm1220, %v1956, 0.0
      %1962 = vadd.xlane.f32.xlu0 %v1961
      %v1963 = vpop.xlane.xlu0 %1962
      %v1964 = vsel %vm1220, %v1958, 0.0
      %1965 = vadd.xlane.f32.xlu0 %v1964
      %v1966 = vpop.xlane.xlu0 %1965
      %v1967 = vsel %vm1220, %v1960, 0.0
      %1968 = vadd.xlane.f32.xlu0 %v1967
      %v1969 = vpop.xlane.xlu0 %1968
      %v1970 = vrcp.pop %v1963
      %v1971 = vmul.f32 %v1956, %v1970
      %v1972 = vrcp.pop %v1966
      %v1973 = vmul.f32 %v1958, %v1972
      %v1974 = vrcp.pop %v1969
      %v1975 = vmul.f32 %v1960, %v1974
      %v1976 = vpack.c.bf16 %v1973, %v1971
      %v1977 = vpack.c.bf16 %v1975, %v1975
      %v1979 = vsel %vm1220, %v1976, 0
      %v1982 = vsel %vm1220, %v1977, 0
      %v1985 = vsel %vm1262, %v1879, 0
      %1987 = vmatprep.subr.bf16.mxu0 0
      %1988 = vmatpush1.bf16.msra.mxu0 0
      %1989 = vmatprep.subr.bf16.mxu0 0
      %1990 = vmatpush1.bf16.msra.mxu0 0
      %1991 = vmatprep.subr.bf16.mxu0 0
      %1992 = vmatpush1.bf16.msra.mxu0 0
      %1993 = vmatprep.subr.bf16.mxu0 0
      %1994 = vmatpush1.bf16.msra.mxu0 0
      %1995 = vmatprep.subr.bf16.mxu0 0
      %1996 = vmatpush1.bf16.msra.mxu0 0
      %1997 = vmatprep.subr.bf16.mxu0 0
      %1998 = vmatpush1.bf16.msra.mxu0 0
      %1999 = vmatprep.subr.bf16.mxu0 0
      %2000 = vmatpush1.bf16.msra.mxu0 %v1985
      %2001 = vmatprep.subr.bf16.mxu0 0
      %2002 = vmatpush1.bf16.msra.mxu0 %v1878
      %2003 = vmatprep.subr.bf16.mxu0 0
      %2004 = vmatpush2.bf16.msra.mxu0 0
      %2005 = vmatprep.subr.bf16.mxu0 0
      %2006 = vmatpush2.bf16.msra.mxu0 0
      %2007 = vmatprep.subr.bf16.mxu0 0
      %2008 = vmatpush2.bf16.msra.mxu0 0
      %2009 = vmatprep.subr.bf16.mxu0 0
      %2010 = vmatpush2.bf16.msra.mxu0 0
      %2011 = vmatprep.subr.bf16.mxu0 0
      %2012 = vmatpush2.bf16.msra.mxu0 0
      %2013 = vmatprep.subr.bf16.mxu0 0
      %2014 = vmatpush2.bf16.msra.mxu0 0
      %2015 = vmatprep.subr.bf16.mxu0 0
      %2016 = vmatpush2.bf16.msra.mxu0 0
      %2017 = vmatprep.subr.bf16.mxu0 0
      %2018 = vmatpush2.bf16.msra.mxu0 0
      %2019 = vmatprep.mubr.bf16.mxu0 0
      %2020 = vmatmul.mubr.bf16.gmra.mxu0 %v1979
      %v2021 = vpop.f32.mrf.mxu0
      %v2022 = vadd.f32 0.0, %v2021
      %v2023 = vpop.f32.mrf.mxu0
      %v2024 = vpop.f32.mrf.mxu0
      %v2025 = vadd.f32 0.0, %v2024
      %v2026 = vpop.f32.mrf.mxu0
      %2027 = vmatprep.mubr.bf16.mxu0 0
      %2028 = vmatmul.mubr.bf16.gmra.mxu0 %v1982
      %v2029 = vpop.f32.mrf.mxu0
      %v2030 = vadd.f32 0.0, %v2029
      %v2031 = vpop.f32.mrf.mxu0
      %v2032 = vpop.f32.mrf.mxu0
      %v2033 = vpop.f32.mrf.mxu0
      %2034 = vdwg.mxu0
      %2037 = vrot.lane.b32.xlu0 %v1874, 96
      %v2038 = vpop.permute.xlu0 %2037
      %2039 = vrot.lane.b32.xlu0 %v1875, 96
      %v2040 = vpop.permute.xlu0 %2039
      %2043 = vrot.lane.b32.xlu0 %v1876, 96
      %v2044 = vpop.permute.xlu0 %2043
      %2045 = vrot.lane.b32.xlu0 %v1877, 96
      %v2046 = vpop.permute.xlu0 %2045
      %v2048 = vsel %vm1156, %v2038, 0
      %v2051 = vsel %vm1156, %v2040, 0
      %v2054 = vsel %vm1156, %v2044, 0
      %v2057 = vsel %vm1156, %v2046, 0
      %2059 = vmatprep.subr.bf16.mxu0 0
      %2060 = vmatpush1.bf16.xpose.msra.mxu0 0
      %2061 = vmatprep.subr.bf16.mxu0 0
      %2062 = vmatpush1.bf16.xpose.msra.mxu0 0
      %2063 = vmatprep.subr.bf16.mxu0 0
      %2064 = vmatpush1.bf16.xpose.msra.mxu0 0
      %2065 = vmatprep.subr.bf16.mxu0 0
      %2066 = vmatpush1.bf16.xpose.msra.mxu0 0
      %2067 = vmatprep.subr.bf16.mxu0 0
      %2068 = vmatpush1.bf16.xpose.msra.mxu0 0
      %2069 = vmatprep.subr.bf16.mxu0 0
      %2070 = vmatpush1.bf16.xpose.msra.mxu0 0
      %2071 = vmatprep.subr.bf16.mxu0 0
      %2072 = vmatpush1.bf16.xpose.msra.mxu0 %v2057
      %2073 = vmatprep.subr.bf16.mxu0 0
      %2074 = vmatpush1.bf16.xpose.msra.mxu0 %v2054
      %2075 = vmatprep.subr.bf16.mxu0 0
      %2076 = vmatpush2.bf16.xpose.msra.mxu0 0
      %2077 = vmatprep.subr.bf16.mxu0 0
      %2078 = vmatpush2.bf16.xpose.msra.mxu0 0
      %2079 = vmatprep.subr.bf16.mxu0 0
      %2080 = vmatpush2.bf16.xpose.msra.mxu0 0
      %2081 = vmatprep.subr.bf16.mxu0 0
      %2082 = vmatpush2.bf16.xpose.msra.mxu0 0
      %2083 = vmatprep.subr.bf16.mxu0 0
      %2084 = vmatpush2.bf16.xpose.msra.mxu0 0
      %2085 = vmatprep.subr.bf16.mxu0 0
      %2086 = vmatpush2.bf16.xpose.msra.mxu0 0
      %2087 = vmatprep.subr.bf16.mxu0 0
      %2088 = vmatpush2.bf16.xpose.msra.mxu0 0
      %2089 = vmatprep.subr.bf16.mxu0 0
      %2090 = vmatpush2.bf16.xpose.msra.mxu0 0
      %2091 = vmatprep.mubr.bf16.mxu0 0
      %2092 = vmatmul.mubr.bf16.gmra.mxu0 %v2048
      %v2093 = vpop.f32.mrf.mxu0
      %v2094 = vadd.f32 0.0, %v2093
      %v2095 = vpop.f32.mrf.mxu0
      %v2096 = vpop.f32.mrf.mxu0
      %v2097 = vadd.f32 0.0, %v2096
      %v2098 = vpop.f32.mrf.mxu0
      %2099 = vmatprep.mubr.bf16.mxu0 0
      %2100 = vmatmul.mubr.bf16.gmra.mxu0 %v2051
      %v2101 = vpop.f32.mrf.mxu0
      %v2102 = vadd.f32 0.0, %v2101
      %v2103 = vpop.f32.mrf.mxu0
      %v2104 = vpop.f32.mrf.mxu0
      %v2105 = vpop.f32.mrf.mxu0
      %2106 = vdwg.mxu0
      %v2107 = vsel %vm1146, %v2094, -1e+09
      %v2108 = vsel %vm1146, %v2097, -1e+09
      %v2109 = vsel %vm1146, %v2102, -1e+09
      %v2110 = vsel %vm1220, %v2107, -inf
      %2111 = vmax.xlane.f32.xlu0 %v2110
      %v2112 = vpop.xlane.xlu0 %2111
      %v2113 = vsel %vm1220, %v2108, -inf
      %2114 = vmax.xlane.f32.xlu0 %v2113
      %v2115 = vpop.xlane.xlu0 %2114
      %v2116 = vsel %vm1220, %v2109, -inf
      %2117 = vmax.xlane.f32.xlu0 %v2116
      %v2118 = vpop.xlane.xlu0 %2117
      %v2119 = vsub.f32 %v2107, %v2112
      %v2120 = vsub.f32 %v2108, %v2115
      %v2121 = vsub.f32 %v2109, %v2118
      %v2122 = vmul.f32 %v2119, 1.442695
      %v2123 = vpow.pop %v2122
      %v2124 = vmul.f32 %v2120, 1.442695
      %v2125 = vpow.pop %v2124
      %v2126 = vmul.f32 %v2121, 1.442695
      %v2127 = vpow.pop %v2126
      %v2128 = vsel %vm1220, %v2123, 0.0
      %2129 = vadd.xlane.f32.xlu0 %v2128
      %v2130 = vpop.xlane.xlu0 %2129
      %v2131 = vsel %vm1220, %v2125, 0.0
      %2132 = vadd.xlane.f32.xlu0 %v2131
      %v2133 = vpop.xlane.xlu0 %2132
      %v2134 = vsel %vm1220, %v2127, 0.0
      %2135 = vadd.xlane.f32.xlu0 %v2134
      %v2136 = vpop.xlane.xlu0 %2135
      %v2137 = vrcp.pop %v2130
      %v2138 = vmul.f32 %v2123, %v2137
      %v2139 = vrcp.pop %v2133
      %v2140 = vmul.f32 %v2125, %v2139
      %v2141 = vrcp.pop %v2136
      %v2142 = vmul.f32 %v2127, %v2141
      %v2143 = vpack.c.bf16 %v2140, %v2138
      %v2144 = vpack.c.bf16 %v2142, %v2142
      %2147 = vrot.lane.b32.xlu0 %v1878, 96
      %v2148 = vpop.permute.xlu0 %2147
      %2149 = vrot.lane.b32.xlu0 %v1879, 96
      %v2150 = vpop.permute.xlu0 %2149
      %v2153 = vsel %vm1220, %v2143, 0
      %v2156 = vsel %vm1220, %v2144, 0
      %v2159 = vsel %vm1262, %v2150, 0
      %2161 = vmatprep.subr.bf16.mxu0 0
      %2162 = vmatpush1.bf16.msra.mxu0 0
      %2163 = vmatprep.subr.bf16.mxu0 0
      %2164 = vmatpush1.bf16.msra.mxu0 0
      %2165 = vmatprep.subr.bf16.mxu0 0
      %2166 = vmatpush1.bf16.msra.mxu0 0
      %2167 = vmatprep.subr.bf16.mxu0 0
      %2168 = vmatpush1.bf16.msra.mxu0 0
      %2169 = vmatprep.subr.bf16.mxu0 0
      %2170 = vmatpush1.bf16.msra.mxu0 0
      %2171 = vmatprep.subr.bf16.mxu0 0
      %2172 = vmatpush1.bf16.msra.mxu0 0
      %2173 = vmatprep.subr.bf16.mxu0 0
      %2174 = vmatpush1.bf16.msra.mxu0 %v2159
      %2175 = vmatprep.subr.bf16.mxu0 0
      %2176 = vmatpush1.bf16.msra.mxu0 %v2148
      %2177 = vmatprep.subr.bf16.mxu0 0
      %2178 = vmatpush2.bf16.msra.mxu0 0
      %2179 = vmatprep.subr.bf16.mxu0 0
      %2180 = vmatpush2.bf16.msra.mxu0 0
      %2181 = vmatprep.subr.bf16.mxu0 0
      %2182 = vmatpush2.bf16.msra.mxu0 0
      %2183 = vmatprep.subr.bf16.mxu0 0
      %2184 = vmatpush2.bf16.msra.mxu0 0
      %2185 = vmatprep.subr.bf16.mxu0 0
      %2186 = vmatpush2.bf16.msra.mxu0 0
      %2187 = vmatprep.subr.bf16.mxu0 0
      %2188 = vmatpush2.bf16.msra.mxu0 0
      %2189 = vmatprep.subr.bf16.mxu0 0
      %2190 = vmatpush2.bf16.msra.mxu0 0
      %2191 = vmatprep.subr.bf16.mxu0 0
      %2192 = vmatpush2.bf16.msra.mxu0 0
      %2193 = vmatprep.mubr.bf16.mxu0 0
      %2194 = vmatmul.mubr.bf16.gmra.mxu0 %v2153
      %v2195 = vpop.f32.mrf.mxu0
      %v2196 = vadd.f32 0.0, %v2195
      %v2197 = vpop.f32.mrf.mxu0
      %v2198 = vpop.f32.mrf.mxu0
      %v2199 = vadd.f32 0.0, %v2198
      %v2200 = vpop.f32.mrf.mxu0
      %2201 = vmatprep.mubr.bf16.mxu0 0
      %2202 = vmatmul.mubr.bf16.gmra.mxu0 %v2156
      %v2203 = vpop.f32.mrf.mxu0
      %v2204 = vadd.f32 0.0, %v2203
      %v2205 = vpop.f32.mrf.mxu0
      %v2206 = vpop.f32.mrf.mxu0
      %v2207 = vpop.f32.mrf.mxu0
      %2208 = vdwg.mxu0
      %2209 = vrot.lane.b32.xlu0 %v1874, 64
      %v2210 = vpop.permute.xlu0 %2209
      %2211 = vrot.lane.b32.xlu0 %v1875, 64
      %v2212 = vpop.permute.xlu0 %2211
      %2213 = vrot.lane.b32.xlu0 %v1876, 64
      %v2214 = vpop.permute.xlu0 %2213
      %2215 = vrot.lane.b32.xlu0 %v1877, 64
      %v2216 = vpop.permute.xlu0 %2215
      %v2218 = vsel %vm1156, %v2210, 0
      %v2221 = vsel %vm1156, %v2212, 0
      %v2224 = vsel %vm1156, %v2214, 0
      %v2227 = vsel %vm1156, %v2216, 0
      %2229 = vmatprep.subr.bf16.mxu0 0
      %2230 = vmatpush1.bf16.xpose.msra.mxu0 0
      %2231 = vmatprep.subr.bf16.mxu0 0
      %2232 = vmatpush1.bf16.xpose.msra.mxu0 0
      %2233 = vmatprep.subr.bf16.mxu0 0
      %2234 = vmatpush1.bf16.xpose.msra.mxu0 0
      %2235 = vmatprep.subr.bf16.mxu0 0
      %2236 = vmatpush1.bf16.xpose.msra.mxu0 0
      %2237 = vmatprep.subr.bf16.mxu0 0
      %2238 = vmatpush1.bf16.xpose.msra.mxu0 0
      %2239 = vmatprep.subr.bf16.mxu0 0
      %2240 = vmatpush1.bf16.xpose.msra.mxu0 0
      %2241 = vmatprep.subr.bf16.mxu0 0
      %2242 = vmatpush1.bf16.xpose.msra.mxu0 %v2227
      %2243 = vmatprep.subr.bf16.mxu0 0
      %2244 = vmatpush1.bf16.xpose.msra.mxu0 %v2224
      %2245 = vmatprep.subr.bf16.mxu0 0
      %2246 = vmatpush2.bf16.xpose.msra.mxu0 0
      %2247 = vmatprep.subr.bf16.mxu0 0
      %2248 = vmatpush2.bf16.xpose.msra.mxu0 0
      %2249 = vmatprep.subr.bf16.mxu0 0
      %2250 = vmatpush2.bf16.xpose.msra.mxu0 0
      %2251 = vmatprep.subr.bf16.mxu0 0
      %2252 = vmatpush2.bf16.xpose.msra.mxu0 0
      %2253 = vmatprep.subr.bf16.mxu0 0
      %2254 = vmatpush2.bf16.xpose.msra.mxu0 0
      %2255 = vmatprep.subr.bf16.mxu0 0
      %2256 = vmatpush2.bf16.xpose.msra.mxu0 0
      %2257 = vmatprep.subr.bf16.mxu0 0
      %2258 = vmatpush2.bf16.xpose.msra.mxu0 0
      %2259 = vmatprep.subr.bf16.mxu0 0
      %2260 = vmatpush2.bf16.xpose.msra.mxu0 0
      %2261 = vmatprep.mubr.bf16.mxu0 0
      %2262 = vmatmul.mubr.bf16.gmra.mxu0 %v2218
      %v2263 = vpop.f32.mrf.mxu0
      %v2264 = vadd.f32 0.0, %v2263
      %v2265 = vpop.f32.mrf.mxu0
      %v2266 = vpop.f32.mrf.mxu0
      %v2267 = vadd.f32 0.0, %v2266
      %v2268 = vpop.f32.mrf.mxu0
      %2269 = vmatprep.mubr.bf16.mxu0 0
      %2270 = vmatmul.mubr.bf16.gmra.mxu0 %v2221
      %v2271 = vpop.f32.mrf.mxu0
      %v2272 = vadd.f32 0.0, %v2271
      %v2273 = vpop.f32.mrf.mxu0
      %v2274 = vpop.f32.mrf.mxu0
      %v2275 = vpop.f32.mrf.mxu0
      %2276 = vdwg.mxu0
      %v2277 = vsel %vm1146, %v2264, -1e+09
      %v2278 = vsel %vm1146, %v2267, -1e+09
      %v2279 = vsel %vm1146, %v2272, -1e+09
      %v2280 = vsel %vm1220, %v2277, -inf
      %2281 = vmax.xlane.f32.xlu0 %v2280
      %v2282 = vpop.xlane.xlu0 %2281
      %v2283 = vsel %vm1220, %v2278, -inf
      %2284 = vmax.xlane.f32.xlu0 %v2283
      %v2285 = vpop.xlane.xlu0 %2284
      %v2286 = vsel %vm1220, %v2279, -inf
      %2287 = vmax.xlane.f32.xlu0 %v2286
      %v2288 = vpop.xlane.xlu0 %2287
      %v2289 = vsub.f32 %v2277, %v2282
      %v2290 = vsub.f32 %v2278, %v2285
      %v2291 = vsub.f32 %v2279, %v2288
      %v2292 = vmul.f32 %v2289, 1.442695
      %v2293 = vpow.pop %v2292
      %v2294 = vmul.f32 %v2290, 1.442695
      %v2295 = vpow.pop %v2294
      %v2296 = vmul.f32 %v2291, 1.442695
      %v2297 = vpow.pop %v2296
      %v2298 = vsel %vm1220, %v2293, 0.0
      %2299 = vadd.xlane.f32.xlu0 %v2298
      %v2300 = vpop.xlane.xlu0 %2299
      %v2301 = vsel %vm1220, %v2295, 0.0
      %2302 = vadd.xlane.f32.xlu0 %v2301
      %v2303 = vpop.xlane.xlu0 %2302
      %v2304 = vsel %vm1220, %v2297, 0.0
      %2305 = vadd.xlane.f32.xlu0 %v2304
      %v2306 = vpop.xlane.xlu0 %2305
      %v2307 = vrcp.pop %v2300
      %v2308 = vmul.f32 %v2293, %v2307
      %v2309 = vrcp.pop %v2303
      %v2310 = vmul.f32 %v2295, %v2309
      %v2311 = vrcp.pop %v2306
      %v2312 = vmul.f32 %v2297, %v2311
      %v2313 = vpack.c.bf16 %v2310, %v2308
      %v2314 = vpack.c.bf16 %v2312, %v2312
      %2315 = vrot.lane.b32.xlu0 %v1878, 64
      %v2316 = vpop.permute.xlu0 %2315
      %2317 = vrot.lane.b32.xlu0 %v1879, 64
      %v2318 = vpop.permute.xlu0 %2317
      %v2321 = vsel %vm1220, %v2313, 0
      %v2324 = vsel %vm1220, %v2314, 0
      %v2327 = vsel %vm1262, %v2318, 0
      %2329 = vmatprep.subr.bf16.mxu0 0
      %2330 = vmatpush1.bf16.msra.mxu0 0
      %2331 = vmatprep.subr.bf16.mxu0 0
      %2332 = vmatpush1.bf16.msra.mxu0 0
      %2333 = vmatprep.subr.bf16.mxu0 0
      %2334 = vmatpush1.bf16.msra.mxu0 0
      %2335 = vmatprep.subr.bf16.mxu0 0
      %2336 = vmatpush1.bf16.msra.mxu0 0
      %2337 = vmatprep.subr.bf16.mxu0 0
      %2338 = vmatpush1.bf16.msra.mxu0 0
      %2339 = vmatprep.subr.bf16.mxu0 0
      %2340 = vmatpush1.bf16.msra.mxu0 0
      %2341 = vmatprep.subr.bf16.mxu0 0
      %2342 = vmatpush1.bf16.msra.mxu0 %v2327
      %2343 = vmatprep.subr.bf16.mxu0 0
      %2344 = vmatpush1.bf16.msra.mxu0 %v2316
      %2345 = vmatprep.subr.bf16.mxu0 0
      %2346 = vmatpush2.bf16.msra.mxu0 0
      %2347 = vmatprep.subr.bf16.mxu0 0
      %2348 = vmatpush2.bf16.msra.mxu0 0
      %2349 = vmatprep.subr.bf16.mxu0 0
      %2350 = vmatpush2.bf16.msra.mxu0 0
      %2351 = vmatprep.subr.bf16.mxu0 0
      %2352 = vmatpush2.bf16.msra.mxu0 0
      %2353 = vmatprep.subr.bf16.mxu0 0
      %2354 = vmatpush2.bf16.msra.mxu0 0
      %2355 = vmatprep.subr.bf16.mxu0 0
      %2356 = vmatpush2.bf16.msra.mxu0 0
      %2357 = vmatprep.subr.bf16.mxu0 0
      %2358 = vmatpush2.bf16.msra.mxu0 0
      %2359 = vmatprep.subr.bf16.mxu0 0
      %2360 = vmatpush2.bf16.msra.mxu0 0
      %2361 = vmatprep.mubr.bf16.mxu0 0
      %2362 = vmatmul.mubr.bf16.gmra.mxu0 %v2321
      %v2363 = vpop.f32.mrf.mxu0
      %v2364 = vadd.f32 0.0, %v2363
      %v2365 = vpop.f32.mrf.mxu0
      %v2366 = vpop.f32.mrf.mxu0
      %v2367 = vadd.f32 0.0, %v2366
      %v2368 = vpop.f32.mrf.mxu0
      %2369 = vmatprep.mubr.bf16.mxu0 0
      %2370 = vmatmul.mubr.bf16.gmra.mxu0 %v2324
      %v2371 = vpop.f32.mrf.mxu0
      %v2372 = vadd.f32 0.0, %v2371
      %v2373 = vpop.f32.mrf.mxu0
      %v2374 = vpop.f32.mrf.mxu0
      %v2375 = vpop.f32.mrf.mxu0
      %2376 = vdwg.mxu0
      %2377 = vrot.lane.b32.xlu0 %v1874, 32
      %v2378 = vpop.permute.xlu0 %2377
      %2379 = vrot.lane.b32.xlu0 %v1875, 32
      %v2380 = vpop.permute.xlu0 %2379
      %2381 = vrot.lane.b32.xlu0 %v1876, 32
      %v2382 = vpop.permute.xlu0 %2381
      %2383 = vrot.lane.b32.xlu0 %v1877, 32
      %v2384 = vpop.permute.xlu0 %2383
      %v2386 = vsel %vm1156, %v2378, 0
      %v2389 = vsel %vm1156, %v2380, 0
      %v2392 = vsel %vm1156, %v2382, 0
      %v2395 = vsel %vm1156, %v2384, 0
      %2397 = vmatprep.subr.bf16.mxu0 0
      %2398 = vmatpush1.bf16.xpose.msra.mxu0 0
      %2399 = vmatprep.subr.bf16.mxu0 0
      %2400 = vmatpush1.bf16.xpose.msra.mxu0 0
      %2401 = vmatprep.subr.bf16.mxu0 0
      %2402 = vmatpush1.bf16.xpose.msra.mxu0 0
      %2403 = vmatprep.subr.bf16.mxu0 0
      %2404 = vmatpush1.bf16.xpose.msra.mxu0 0
      %2405 = vmatprep.subr.bf16.mxu0 0
      %2406 = vmatpush1.bf16.xpose.msra.mxu0 0
      %2407 = vmatprep.subr.bf16.mxu0 0
      %2408 = vmatpush1.bf16.xpose.msra.mxu0 0
      %2409 = vmatprep.subr.bf16.mxu0 0
      %2410 = vmatpush1.bf16.xpose.msra.mxu0 %v2395
      %2411 = vmatprep.subr.bf16.mxu0 0
      %2412 = vmatpush1.bf16.xpose.msra.mxu0 %v2392
      %2413 = vmatprep.subr.bf16.mxu0 0
      %2414 = vmatpush2.bf16.xpose.msra.mxu0 0
      %2415 = vmatprep.subr.bf16.mxu0 0
      %2416 = vmatpush2.bf16.xpose.msra.mxu0 0
      %2417 = vmatprep.subr.bf16.mxu0 0
      %2418 = vmatpush2.bf16.xpose.msra.mxu0 0
      %2419 = vmatprep.subr.bf16.mxu0 0
      %2420 = vmatpush2.bf16.xpose.msra.mxu0 0
      %2421 = vmatprep.subr.bf16.mxu0 0
      %2422 = vmatpush2.bf16.xpose.msra.mxu0 0
      %2423 = vmatprep.subr.bf16.mxu0 0
      %2424 = vmatpush2.bf16.xpose.msra.mxu0 0
      %2425 = vmatprep.subr.bf16.mxu0 0
      %2426 = vmatpush2.bf16.xpose.msra.mxu0 0
      %2427 = vmatprep.subr.bf16.mxu0 0
      %2428 = vmatpush2.bf16.xpose.msra.mxu0 0
      %2429 = vmatprep.mubr.bf16.mxu0 0
      %2430 = vmatmul.mubr.bf16.gmra.mxu0 %v2386
      %v2431 = vpop.f32.mrf.mxu0
      %v2432 = vadd.f32 0.0, %v2431
      %v2433 = vpop.f32.mrf.mxu0
      %v2434 = vpop.f32.mrf.mxu0
      %v2435 = vadd.f32 0.0, %v2434
      %v2436 = vpop.f32.mrf.mxu0
      %2437 = vmatprep.mubr.bf16.mxu0 0
      %2438 = vmatmul.mubr.bf16.gmra.mxu0 %v2389
      %v2439 = vpop.f32.mrf.mxu0
      %v2440 = vadd.f32 0.0, %v2439
      %v2441 = vpop.f32.mrf.mxu0
      %v2442 = vpop.f32.mrf.mxu0
      %v2443 = vpop.f32.mrf.mxu0
      %2444 = vdwg.mxu0
      %v2445 = vsel %vm1146, %v2432, -1e+09
      %v2446 = vsel %vm1146, %v2435, -1e+09
      %v2447 = vsel %vm1146, %v2440, -1e+09
      %v2448 = vsel %vm1220, %v2445, -inf
      %2449 = vmax.xlane.f32.xlu0 %v2448
      %v2450 = vpop.xlane.xlu0 %2449
      %v2451 = vsel %vm1220, %v2446, -inf
      %2452 = vmax.xlane.f32.xlu0 %v2451
      %v2453 = vpop.xlane.xlu0 %2452
      %v2454 = vsel %vm1220, %v2447, -inf
      %2455 = vmax.xlane.f32.xlu0 %v2454
      %v2456 = vpop.xlane.xlu0 %2455
      %v2457 = vsub.f32 %v2445, %v2450
      %v2458 = vsub.f32 %v2446, %v2453
      %v2459 = vsub.f32 %v2447, %v2456
      %v2460 = vmul.f32 %v2457, 1.442695
      %v2461 = vpow.pop %v2460
      %v2462 = vmul.f32 %v2458, 1.442695
      %v2463 = vpow.pop %v2462
      %v2464 = vmul.f32 %v2459, 1.442695
      %v2465 = vpow.pop %v2464
      %v2466 = vsel %vm1220, %v2461, 0.0
      %2467 = vadd.xlane.f32.xlu0 %v2466
      %v2468 = vpop.xlane.xlu0 %2467
      %v2469 = vsel %vm1220, %v2463, 0.0
      %2470 = vadd.xlane.f32.xlu0 %v2469
      %v2471 = vpop.xlane.xlu0 %2470
      %v2472 = vsel %vm1220, %v2465, 0.0
      %2473 = vadd.xlane.f32.xlu0 %v2472
      %v2474 = vpop.xlane.xlu0 %2473
      %v2475 = vrcp.pop %v2468
      %v2476 = vmul.f32 %v2461, %v2475
      %v2477 = vrcp.pop %v2471
      %v2478 = vmul.f32 %v2463, %v2477
      %v2479 = vrcp.pop %v2474
      %v2480 = vmul.f32 %v2465, %v2479
      %v2481 = vpack.c.bf16 %v2478, %v2476
      %v2482 = vpack.c.bf16 %v2480, %v2480
      %2483 = vrot.lane.b32.xlu0 %v1878, 32
      %v2484 = vpop.permute.xlu0 %2483
      %2485 = vrot.lane.b32.xlu0 %v1879, 32
      %v2486 = vpop.permute.xlu0 %2485
      %v2489 = vsel %vm1220, %v2481, 0
      %v2492 = vsel %vm1220, %v2482, 0
      %v2495 = vsel %vm1262, %v2486, 0
      %2497 = vmatprep.subr.bf16.mxu0 0
      %2498 = vmatpush1.bf16.msra.mxu0 0
      %2499 = vmatprep.subr.bf16.mxu0 0
      %2500 = vmatpush1.bf16.msra.mxu0 0
      %2501 = vmatprep.subr.bf16.mxu0 0
      %2502 = vmatpush1.bf16.msra.mxu0 0
      %2503 = vmatprep.subr.bf16.mxu0 0
      %2504 = vmatpush1.bf16.msra.mxu0 0
      %2505 = vmatprep.subr.bf16.mxu0 0
      %2506 = vmatpush1.bf16.msra.mxu0 0
      %2507 = vmatprep.subr.bf16.mxu0 0
      %2508 = vmatpush1.bf16.msra.mxu0 0
      %2509 = vmatprep.subr.bf16.mxu0 0
      %2510 = vmatpush1.bf16.msra.mxu0 %v2495
      %2511 = vmatprep.subr.bf16.mxu0 0
      %2512 = vmatpush1.bf16.msra.mxu0 %v2484
      %2513 = vmatprep.subr.bf16.mxu0 0
      %2514 = vmatpush2.bf16.msra.mxu0 0
      %2515 = vmatprep.subr.bf16.mxu0 0
      %2516 = vmatpush2.bf16.msra.mxu0 0
      %2517 = vmatprep.subr.bf16.mxu0 0
      %2518 = vmatpush2.bf16.msra.mxu0 0
      %2519 = vmatprep.subr.bf16.mxu0 0
      %2520 = vmatpush2.bf16.msra.mxu0 0
      %2521 = vmatprep.subr.bf16.mxu0 0
      %2522 = vmatpush2.bf16.msra.mxu0 0
      %2523 = vmatprep.subr.bf16.mxu0 0
      %2524 = vmatpush2.bf16.msra.mxu0 0
      %2525 = vmatprep.subr.bf16.mxu0 0
      %2526 = vmatpush2.bf16.msra.mxu0 0
      %2527 = vmatprep.subr.bf16.mxu0 0
      %2528 = vmatpush2.bf16.msra.mxu0 0
      %2529 = vmatprep.mubr.bf16.mxu0 0
      %2530 = vmatmul.mubr.bf16.gmra.mxu0 %v2489
      %v2531 = vpop.f32.mrf.mxu0
      %v2532 = vadd.f32 0.0, %v2531
      %v2533 = vpop.f32.mrf.mxu0
      %v2534 = vpop.f32.mrf.mxu0
      %v2535 = vadd.f32 0.0, %v2534
      %v2536 = vpop.f32.mrf.mxu0
      %2537 = vmatprep.mubr.bf16.mxu0 0
      %2538 = vmatmul.mubr.bf16.gmra.mxu0 %v2492
      %v2539 = vpop.f32.mrf.mxu0
      %v2540 = vadd.f32 0.0, %v2539
      %v2541 = vpop.f32.mrf.mxu0
      %v2542 = vpop.f32.mrf.mxu0
      %v2543 = vpop.f32.mrf.mxu0
      %2544 = vdwg.mxu0
      %2548 = vrot.lane.b32.xlu0 %v2196, 32
      %v2549 = vpop.permute.xlu0 %2548
      %2550 = vrot.lane.b32.xlu0 %v2199, 32
      %v2551 = vpop.permute.xlu0 %2550
      %2552 = vrot.lane.b32.xlu0 %v2204, 32
      %v2553 = vpop.permute.xlu0 %2552
      %2560 = vrot.lane.b32.xlu0 %v2364, 64
      %v2561 = vpop.permute.xlu0 %2560
      %2562 = vrot.lane.b32.xlu0 %v2367, 64
      %v2563 = vpop.permute.xlu0 %2562
      %2564 = vrot.lane.b32.xlu0 %v2372, 64
      %v2565 = vpop.permute.xlu0 %2564
      %2572 = vrot.lane.b32.xlu0 %v2532, 96
      %v2573 = vpop.permute.xlu0 %2572
      %2574 = vrot.lane.b32.xlu0 %v2535, 96
      %v2575 = vpop.permute.xlu0 %2574
      %2576 = vrot.lane.b32.xlu0 %v2540, 96
      %v2577 = vpop.permute.xlu0 %2576
      %v2581 = vsel %vm1156, %v2022, %v2549
      %v2582 = vsel %vm1156, %v2025, %v2551
      %v2583 = vsel %vm1156, %v2030, %v2553
      %v2584 = vsel %vm1863, %v2581, %v2561
      %v2585 = vsel %vm1863, %v2582, %v2563
      %v2586 = vsel %vm1863, %v2583, %v2565
      %v2587 = vsel %vm1867, %v2584, %v2573
      %v2588 = vsel %vm1867, %v2585, %v2575
      %v2589 = vsel %vm1867, %v2586, %v2577
      %v2590 = vpack.c.bf16 %v1869, %v1868
      %v2591 = vpack.c.bf16 %v2587, %v1870
      %v2592 = vpack.c.bf16 %v2589, %v2588
      %v2593 = vld [vmem:[%s457] sm:$0xf]
      %v2594 = vld [vmem:[%s457 + $0x4] sm:$0xf]
      %v2595 = vld [vmem:[%s457 + $0x8] sm:$0xf]
      %v2596 = vld [vmem:[%s457 + $0xc] sm:$0xf]
      %v2597 = vld [vmem:[%s457 + $0x10] sm:$0xf]
      %v2598 = vld [vmem:[%s457 + $0x14] sm:$0xf]
      %v2599 = vld [vmem:[%s457 + $0x18] sm:$0xf]
      %v2600 = vld [vmem:[%s457 + $0x1c] sm:$0xf]
      %v2601 = vld [vmem:[%s457 + $0x20] sm:$0xf]
      %v2602 = vld [vmem:[%s457 + $0x24] sm:$0xf]
      %v2603 = vld [vmem:[%s457 + $0x28] sm:$0xf]
      %v2604 = vld [vmem:[%s457 + $0x2c] sm:$0xf]
      %v2605 = vld [vmem:[%s457 + $0x30] sm:$0xf]
      %v2606 = vld [vmem:[%s457 + $0x34] sm:$0xf]
      %v2607 = vld [vmem:[%s457 + $0x38] sm:$0xf]
      %v2608 = vld [vmem:[%s457 + $0x3c] sm:$0xf]
      %v2609 = vld [vmem:[%s472 + $0x4] ss:$0 sm:$0xff]
      %v2626 = vunpack.c.l.b16 %v2593
      %v2627 = vunpack.c.l.b16 %v2594
      %v2628 = vunpack.c.l.b16 %v2595
      %v2629 = vunpack.c.l.b16 %v2596
      %v2630 = vunpack.c.l.b16 %v2597
      %v2631 = vunpack.c.l.b16 %v2598
      %v2632 = vunpack.c.l.b16 %v2599
      %v2633 = vunpack.c.l.b16 %v2600
      %v2634 = vunpack.c.l.b16 %v2601
      %v2635 = vunpack.c.l.b16 %v2602
      %v2636 = vunpack.c.l.b16 %v2603
      %v2637 = vunpack.c.l.b16 %v2604
      %v2638 = vunpack.c.l.b16 %v2605
      %v2639 = vunpack.c.l.b16 %v2606
      %v2640 = vunpack.c.l.b16 %v2607
      %v2641 = vunpack.c.l.b16 %v2608
      %v2642 = vpack.c.b16 %v2627, %v2626
      %v2643 = vpack.c.b16 %v2629, %v2628
      %v2644 = vpack.c.b16 %v2631, %v2630
      %v2645 = vpack.c.b16 %v2633, %v2632
      %v2646 = vpack.c.b16 %v2635, %v2634
      %v2647 = vpack.c.b16 %v2637, %v2636
      %v2648 = vpack.c.b16 %v2639, %v2638
      %v2649 = vpack.c.b16 %v2641, %v2640
      %2658 = vmatprep.subr.bf16.mxu0 0
      %2659 = vmatpush1.bf16.msra.mxu0 %v2649
      %2660 = vmatprep.subr.bf16.mxu0 0
      %2661 = vmatpush1.bf16.msra.mxu0 %v2648
      %2662 = vmatprep.subr.bf16.mxu0 0
      %2663 = vmatpush1.bf16.msra.mxu0 %v2647
      %2664 = vmatprep.subr.bf16.mxu0 0
      %2665 = vmatpush1.bf16.msra.mxu0 %v2646
      %2666 = vmatprep.subr.bf16.mxu0 0
      %2667 = vmatpush1.bf16.msra.mxu0 %v2645
      %2668 = vmatprep.subr.bf16.mxu0 0
      %2669 = vmatpush1.bf16.msra.mxu0 %v2644
      %2670 = vmatprep.subr.bf16.mxu0 0
      %2671 = vmatpush1.bf16.msra.mxu0 %v2643
      %2672 = vmatprep.subr.bf16.mxu0 0
      %2673 = vmatpush1.bf16.msra.mxu0 %v2642
      %2674 = vmatprep.subr.bf16.mxu0 0
      %2675 = vmatpush2.bf16.msra.mxu0 0
      %2676 = vmatprep.subr.bf16.mxu0 0
      %2677 = vmatpush2.bf16.msra.mxu0 0
      %2678 = vmatprep.subr.bf16.mxu0 0
      %2679 = vmatpush2.bf16.msra.mxu0 0
      %2680 = vmatprep.subr.bf16.mxu0 0
      %2681 = vmatpush2.bf16.msra.mxu0 0
      %2682 = vmatprep.subr.bf16.mxu0 0
      %2683 = vmatpush2.bf16.msra.mxu0 0
      %2684 = vmatprep.subr.bf16.mxu0 0
      %2685 = vmatpush2.bf16.msra.mxu0 0
      %2686 = vmatprep.subr.bf16.mxu0 0
      %2687 = vmatpush2.bf16.msra.mxu0 0
      %2688 = vmatprep.subr.bf16.mxu0 0
      %2689 = vmatpush2.bf16.msra.mxu0 0
      %2690 = vmatprep.mubr.bf16.mxu0 0
      %2691 = vmatmul.mubr.bf16.gmra.mxu0 %v2590
      %v2692 = vpop.f32.mrf.mxu0
      %v2693 = vadd.f32 %v2609, %v2692
      %v2694 = vpop.f32.mrf.mxu0
      %v2695 = vpop.f32.mrf.mxu0
      %v2696 = vadd.f32 %v2609, %v2695
      %v2697 = vpop.f32.mrf.mxu0
      %2698 = vmatprep.mubr.bf16.mxu0 0
      %2699 = vmatmul.mubr.bf16.gmra.mxu0 %v2591
      %v2700 = vpop.f32.mrf.mxu0
      %v2701 = vadd.f32 %v2609, %v2700
      %v2702 = vpop.f32.mrf.mxu0
      %v2703 = vpop.f32.mrf.mxu0
      %v2704 = vadd.f32 %v2609, %v2703
      %v2705 = vpop.f32.mrf.mxu0
      %2706 = vmatprep.mubr.bf16.mxu0 0
      %2707 = vmatmul.mubr.bf16.gmra.mxu0 %v2592
      %v2708 = vpop.f32.mrf.mxu0
      %v2709 = vadd.f32 %v2609, %v2708
      %v2710 = vpop.f32.mrf.mxu0
      %v2711 = vpop.f32.mrf.mxu0
      %v2712 = vadd.f32 %v2609, %v2711
      %v2713 = vpop.f32.mrf.mxu0
      %2714 = vdwg.mxu0
      %v2715 = vadd.f32 %v756, %v2693
      %v2716 = vadd.f32 %v757, %v2696
      %v2717 = vadd.f32 %v758, %v2701
      %v2718 = vadd.f32 %v759, %v2704
      %v2719 = vadd.f32 %v760, %v2709
      %v2720 = vadd.f32 %v761, %v2712
      %v2721 = vld [vmem:[%s472 + $0x2] ss:$0 sm:$0xff]
      %v2722 = vld [vmem:[%s472 + $0x3] ss:$0 sm:$0xff]
      %2723 = vadd.xlane.f32.xlu0 %v2715
      %v2724 = vpop.xlane.xlu0 %2723
      %2725 = vadd.xlane.f32.xlu0 %v2716
      %v2726 = vpop.xlane.xlu0 %2725
      %2727 = vadd.xlane.f32.xlu0 %v2717
      %v2728 = vpop.xlane.xlu0 %2727
      %2729 = vadd.xlane.f32.xlu0 %v2718
      %v2730 = vpop.xlane.xlu0 %2729
      %2731 = vadd.xlane.f32.xlu0 %v2719
      %v2732 = vpop.xlane.xlu0 %2731
      %2733 = vadd.xlane.f32.xlu0 %v2720
      %v2734 = vpop.xlane.xlu0 %2733
      %v2735 = vmul.f32 %v2724, %v776
      %v2736 = vmul.f32 %v2726, %v776
      %v2737 = vmul.f32 %v2728, %v776
      %v2738 = vmul.f32 %v2730, %v776
      %v2739 = vmul.f32 %v2732, %v776
      %v2740 = vmul.f32 %v2734, %v776
      %v2741 = vsub.f32 %v2715, %v2735
      %v2742 = vsub.f32 %v2716, %v2736
      %v2743 = vsub.f32 %v2717, %v2737
      %v2744 = vsub.f32 %v2718, %v2738
      %v2745 = vsub.f32 %v2719, %v2739
      %v2746 = vsub.f32 %v2720, %v2740
      %v2747 = vmul.f32 %v2741, %v2741
      %v2748 = vmul.f32 %v2742, %v2742
      %v2749 = vmul.f32 %v2743, %v2743
      %v2750 = vmul.f32 %v2744, %v2744
      %v2751 = vmul.f32 %v2745, %v2745
      %v2752 = vmul.f32 %v2746, %v2746
      %2753 = vadd.xlane.f32.xlu0 %v2747
      %v2754 = vpop.xlane.xlu0 %2753
      %2755 = vadd.xlane.f32.xlu0 %v2748
      %v2756 = vpop.xlane.xlu0 %2755
      %2757 = vadd.xlane.f32.xlu0 %v2749
      %v2758 = vpop.xlane.xlu0 %2757
      %2759 = vadd.xlane.f32.xlu0 %v2750
      %v2760 = vpop.xlane.xlu0 %2759
      %2761 = vadd.xlane.f32.xlu0 %v2751
      %v2762 = vpop.xlane.xlu0 %2761
      %2763 = vadd.xlane.f32.xlu0 %v2752
      %v2764 = vpop.xlane.xlu0 %2763
      %v2765 = vmul.f32 %v2754, %v776
      %v2766 = vmul.f32 %v2756, %v776
      %v2767 = vmul.f32 %v2758, %v776
      %v2768 = vmul.f32 %v2760, %v776
      %v2769 = vmul.f32 %v2762, %v776
      %v2770 = vmul.f32 %v2764, %v776
      %v2771 = vadd.f32 %v2765, 1e-05
      %v2772 = vadd.f32 %v2766, 1e-05
      %v2773 = vadd.f32 %v2767, 1e-05
      %v2774 = vadd.f32 %v2768, 1e-05
      %v2775 = vadd.f32 %v2769, 1e-05
      %v2776 = vadd.f32 %v2770, 1e-05
      %v2777 = vrsqrt.pop %v2771
      %v2778 = vrsqrt.pop %v2772
      %v2779 = vrsqrt.pop %v2773
      %v2780 = vrsqrt.pop %v2774
      %v2781 = vrsqrt.pop %v2775
      %v2782 = vrsqrt.pop %v2776
      %v2783 = vmul.f32 %v2741, %v2777
      %v2784 = vmul.f32 %v2742, %v2778
      %v2785 = vmul.f32 %v2743, %v2779
      %v2786 = vmul.f32 %v2744, %v2780
      %v2787 = vmul.f32 %v2745, %v2781
      %v2788 = vmul.f32 %v2746, %v2782
      %v2789 = vmul.f32 %v2783, %v2721
      %v2790 = vmul.f32 %v2784, %v2721
      %v2791 = vmul.f32 %v2785, %v2721
      %v2792 = vmul.f32 %v2786, %v2721
      %v2793 = vmul.f32 %v2787, %v2721
      %v2794 = vmul.f32 %v2788, %v2721
      %v2795 = vadd.f32 %v2789, %v2722
      %v2796 = vadd.f32 %v2790, %v2722
      %v2797 = vadd.f32 %v2791, %v2722
      %v2798 = vadd.f32 %v2792, %v2722
      %v2799 = vadd.f32 %v2793, %v2722
      %v2800 = vadd.f32 %v2794, %v2722
      %v2801 = vpack.c.bf16 %v2796, %v2795
      %v2802 = vpack.c.bf16 %v2798, %v2797
      %v2803 = vpack.c.bf16 %v2800, %v2799
      %v2804 = vld [vmem:[%s462] sm:$0xff]
      %v2805 = vld [vmem:[%s462 + $0x8] sm:$0xff]
      %v2806 = vld [vmem:[%s462 + $0x10] sm:$0xff]
      %v2807 = vld [vmem:[%s462 + $0x18] sm:$0xff]
      %v2808 = vld [vmem:[%s462 + $0x20] sm:$0xff]
      %v2809 = vld [vmem:[%s462 + $0x28] sm:$0xff]
      %v2810 = vld [vmem:[%s462 + $0x30] sm:$0xff]
      %v2811 = vld [vmem:[%s462 + $0x38] sm:$0xff]
      %v2812 = vld [vmem:[%s462 + $0x40] sm:$0xff]
      %v2813 = vld [vmem:[%s462 + $0x48] sm:$0xff]
      %v2814 = vld [vmem:[%s462 + $0x50] sm:$0xff]
      %v2815 = vld [vmem:[%s462 + $0x58] sm:$0xff]
      %v2816 = vld [vmem:[%s462 + $0x60] sm:$0xff]
      %v2817 = vld [vmem:[%s462 + $0x68] sm:$0xff]
      %v2818 = vld [vmem:[%s462 + $0x70] sm:$0xff]
      %v2819 = vld [vmem:[%s462 + $0x78] sm:$0xff]
      %s2820 = scalar_lea.vmem %s472, 5
      %v2821 = vld [vmem:[%s2820] ss:$8 sm:$0x3]
      %v2823 = vlaneseq
      %v2824 = vshrl.u32 %v2823, 7
      %v2825 = vsub.s32 0, %v2824
      %v2826 = vrot.slane %v2821, %v2825
      %v2827 = vlaneseq
      %v2828 = vshrl.u32 %v2827, 7
      %v2829 = vsub.s32 1, %v2828
      %v2830 = vrot.slane %v2821, %v2829
      %v2849 = vunpack.c.l.b16 %v2804
      %v2850 = vunpack.c.h.b16 %v2804
      %v2851 = vunpack.c.l.b16 %v2805
      %v2852 = vunpack.c.h.b16 %v2805
      %v2853 = vunpack.c.l.b16 %v2806
      %v2854 = vunpack.c.h.b16 %v2806
      %v2855 = vunpack.c.l.b16 %v2807
      %v2856 = vunpack.c.h.b16 %v2807
      %v2857 = vunpack.c.l.b16 %v2808
      %v2858 = vunpack.c.h.b16 %v2808
      %v2859 = vunpack.c.l.b16 %v2809
      %v2860 = vunpack.c.h.b16 %v2809
      %v2861 = vunpack.c.l.b16 %v2810
      %v2862 = vunpack.c.h.b16 %v2810
      %v2863 = vunpack.c.l.b16 %v2811
      %v2864 = vunpack.c.h.b16 %v2811
      %v2865 = vunpack.c.l.b16 %v2812
      %v2866 = vunpack.c.h.b16 %v2812
      %v2867 = vunpack.c.l.b16 %v2813
      %v2868 = vunpack.c.h.b16 %v2813
      %v2869 = vunpack.c.l.b16 %v2814
      %v2870 = vunpack.c.h.b16 %v2814
      %v2871 = vunpack.c.l.b16 %v2815
      %v2872 = vunpack.c.h.b16 %v2815
      %v2873 = vunpack.c.l.b16 %v2816
      %v2874 = vunpack.c.h.b16 %v2816
      %v2875 = vunpack.c.l.b16 %v2817
      %v2876 = vunpack.c.h.b16 %v2817
      %v2877 = vunpack.c.l.b16 %v2818
      %v2878 = vunpack.c.h.b16 %v2818
      %v2879 = vunpack.c.l.b16 %v2819
      %v2880 = vunpack.c.h.b16 %v2819
      %v2881 = vpack.c.b16 %v2851, %v2849
      %v2882 = vpack.c.b16 %v2852, %v2850
      %v2883 = vpack.c.b16 %v2855, %v2853
      %v2884 = vpack.c.b16 %v2856, %v2854
      %v2885 = vpack.c.b16 %v2859, %v2857
      %v2886 = vpack.c.b16 %v2860, %v2858
      %v2887 = vpack.c.b16 %v2863, %v2861
      %v2888 = vpack.c.b16 %v2864, %v2862
      %v2889 = vpack.c.b16 %v2867, %v2865
      %v2890 = vpack.c.b16 %v2868, %v2866
      %v2891 = vpack.c.b16 %v2871, %v2869
      %v2892 = vpack.c.b16 %v2872, %v2870
      %v2893 = vpack.c.b16 %v2875, %v2873
      %v2894 = vpack.c.b16 %v2876, %v2874
      %v2895 = vpack.c.b16 %v2879, %v2877
      %v2896 = vpack.c.b16 %v2880, %v2878
      %2913 = vmatprep.subr.bf16.mxu0 %v2896
      %2914 = vmatpush1.bf16.msra.mxu0 %v2895
      %2915 = vmatprep.subr.bf16.mxu0 %v2894
      %2916 = vmatpush1.bf16.msra.mxu0 %v2893
      %2917 = vmatprep.subr.bf16.mxu0 %v2892
      %2918 = vmatpush1.bf16.msra.mxu0 %v2891
      %2919 = vmatprep.subr.bf16.mxu0 %v2890
      %2920 = vmatpush1.bf16.msra.mxu0 %v2889
      %2921 = vmatprep.subr.bf16.mxu0 %v2888
      %2922 = vmatpush1.bf16.msra.mxu0 %v2887
      %2923 = vmatprep.subr.bf16.mxu0 %v2886
      %2924 = vmatpush1.bf16.msra.mxu0 %v2885
      %2925 = vmatprep.subr.bf16.mxu0 %v2884
      %2926 = vmatpush1.bf16.msra.mxu0 %v2883
      %2927 = vmatprep.subr.bf16.mxu0 %v2882
      %2928 = vmatpush1.bf16.msra.mxu0 %v2881
      %2929 = vmatprep.subr.bf16.mxu0 0
      %2930 = vmatpush2.bf16.msra.mxu0 0
      %2931 = vmatprep.subr.bf16.mxu0 0
      %2932 = vmatpush2.bf16.msra.mxu0 0
      %2933 = vmatprep.subr.bf16.mxu0 0
      %2934 = vmatpush2.bf16.msra.mxu0 0
      %2935 = vmatprep.subr.bf16.mxu0 0
      %2936 = vmatpush2.bf16.msra.mxu0 0
      %2937 = vmatprep.subr.bf16.mxu0 0
      %2938 = vmatpush2.bf16.msra.mxu0 0
      %2939 = vmatprep.subr.bf16.mxu0 0
      %2940 = vmatpush2.bf16.msra.mxu0 0
      %2941 = vmatprep.subr.bf16.mxu0 0
      %2942 = vmatpush2.bf16.msra.mxu0 0
      %2943 = vmatprep.subr.bf16.mxu0 0
      %2944 = vmatpush2.bf16.msra.mxu0 0
      %2945 = vmatprep.mubr.bf16.mxu0 0
      %2946 = vmatmul.mubr.bf16.gmra.mxu0 %v2801
      %v2947 = vpop.f32.mrf.mxu0
      %v2948 = vadd.f32 %v2826, %v2947
      %v2949 = vpop.f32.mrf.mxu0
      %v2950 = vadd.f32 %v2830, %v2949
      %v2951 = vpop.f32.mrf.mxu0
      %v2952 = vadd.f32 %v2826, %v2951
      %v2953 = vpop.f32.mrf.mxu0
      %v2954 = vadd.f32 %v2830, %v2953
      %2955 = vmatprep.mubr.bf16.mxu0 0
      %2956 = vmatmul.mubr.bf16.gmra.mxu0 %v2802
      %v2957 = vpop.f32.mrf.mxu0
      %v2958 = vadd.f32 %v2826, %v2957
      %v2959 = vpop.f32.mrf.mxu0
      %v2960 = vadd.f32 %v2830, %v2959
      %v2961 = vpop.f32.mrf.mxu0
      %v2962 = vadd.f32 %v2826, %v2961
      %v2963 = vpop.f32.mrf.mxu0
      %v2964 = vadd.f32 %v2830, %v2963
      %2965 = vmatprep.mubr.bf16.mxu0 0
      %2966 = vmatmul.mubr.bf16.gmra.mxu0 %v2803
      %v2967 = vpop.f32.mrf.mxu0
      %v2968 = vadd.f32 %v2826, %v2967
      %v2969 = vpop.f32.mrf.mxu0
      %v2970 = vadd.f32 %v2830, %v2969
      %v2971 = vpop.f32.mrf.mxu0
      %v2972 = vadd.f32 %v2826, %v2971
      %v2973 = vpop.f32.mrf.mxu0
      %v2974 = vadd.f32 %v2830, %v2973
      %2975 = vdwg.mxu0
      %v2976 = vmul.f32 %v2948, 1.702
      %v2977 = vmul.f32 %v2950, 1.702
      %v2978 = vmul.f32 %v2952, 1.702
      %v2979 = vmul.f32 %v2954, 1.702
      %v2980 = vmul.f32 %v2958, 1.702
      %v2981 = vmul.f32 %v2960, 1.702
      %v2982 = vmul.f32 %v2962, 1.702
      %v2983 = vmul.f32 %v2964, 1.702
      %v2984 = vmul.f32 %v2968, 1.702
      %v2985 = vmul.f32 %v2970, 1.702
      %v2986 = vmul.f32 %v2972, 1.702
      %v2987 = vmul.f32 %v2974, 1.702
      %v2988 = vxor.u32 %v2976, 2147483648
      %v2989 = vxor.u32 %v2977, 2147483648
      %v2990 = vxor.u32 %v2978, 2147483648
      %v2991 = vxor.u32 %v2979, 2147483648
      %v2992 = vxor.u32 %v2980, 2147483648
      %v2993 = vxor.u32 %v2981, 2147483648
      %v2994 = vxor.u32 %v2982, 2147483648
      %v2995 = vxor.u32 %v2983, 2147483648
      %v2996 = vxor.u32 %v2984, 2147483648
      %v2997 = vxor.u32 %v2985, 2147483648
      %v2998 = vxor.u32 %v2986, 2147483648
      %v2999 = vxor.u32 %v2987, 2147483648
      %v3000 = vmul.f32 %v2988, 1.442695
      %v3001 = vpow.pop %v3000
      %v3002 = vmul.f32 %v2989, 1.442695
      %v3003 = vpow.pop %v3002
      %v3004 = vmul.f32 %v2990, 1.442695
      %v3005 = vpow.pop %v3004
      %v3006 = vmul.f32 %v2991, 1.442695
      %v3007 = vpow.pop %v3006
      %v3008 = vmul.f32 %v2992, 1.442695
      %v3009 = vpow.pop %v3008
      %v3010 = vmul.f32 %v2993, 1.442695
      %v3011 = vpow.pop %v3010
      %v3012 = vmul.f32 %v2994, 1.442695
      %v3013 = vpow.pop %v3012
      %v3014 = vmul.f32 %v2995, 1.442695
      %v3015 = vpow.pop %v3014
      %v3016 = vmul.f32 %v2996, 1.442695
      %v3017 = vpow.pop %v3016
      %v3018 = vmul.f32 %v2997, 1.442695
      %v3019 = vpow.pop %v3018
      %v3020 = vmul.f32 %v2998, 1.442695
      %v3021 = vpow.pop %v3020
      %v3022 = vmul.f32 %v2999, 1.442695
      %v3023 = vpow.pop %v3022
      %v3024 = vadd.f32 %v3001, 1.0
      %v3025 = vadd.f32 %v3003, 1.0
      %v3026 = vadd.f32 %v3005, 1.0
      %v3027 = vadd.f32 %v3007, 1.0
      %v3028 = vadd.f32 %v3009, 1.0
      %v3029 = vadd.f32 %v3011, 1.0
      %v3030 = vadd.f32 %v3013, 1.0
      %v3031 = vadd.f32 %v3015, 1.0
      %v3032 = vadd.f32 %v3017, 1.0
      %v3033 = vadd.f32 %v3019, 1.0
      %v3034 = vadd.f32 %v3021, 1.0
      %v3035 = vadd.f32 %v3023, 1.0
      %v3036 = vrcp.pop %v3024
      %v3037 = vmul.f32 1.0, %v3036
      %v3038 = vrcp.pop %v3025
      %v3039 = vmul.f32 1.0, %v3038
      %v3040 = vrcp.pop %v3026
      %v3041 = vmul.f32 1.0, %v3040
      %v3042 = vrcp.pop %v3027
      %v3043 = vmul.f32 1.0, %v3042
      %v3044 = vrcp.pop %v3028
      %v3045 = vmul.f32 1.0, %v3044
      %v3046 = vrcp.pop %v3029
      %v3047 = vmul.f32 1.0, %v3046
      %v3048 = vrcp.pop %v3030
      %v3049 = vmul.f32 1.0, %v3048
      %v3050 = vrcp.pop %v3031
      %v3051 = vmul.f32 1.0, %v3050
      %v3052 = vrcp.pop %v3032
      %v3053 = vmul.f32 1.0, %v3052
      %v3054 = vrcp.pop %v3033
      %v3055 = vmul.f32 1.0, %v3054
      %v3056 = vrcp.pop %v3034
      %v3057 = vmul.f32 1.0, %v3056
      %v3058 = vrcp.pop %v3035
      %v3059 = vmul.f32 1.0, %v3058
      %v3060 = vmul.f32 %v2948, %v3037
      %v3061 = vmul.f32 %v2950, %v3039
      %v3062 = vmul.f32 %v2952, %v3041
      %v3063 = vmul.f32 %v2954, %v3043
      %v3064 = vmul.f32 %v2958, %v3045
      %v3065 = vmul.f32 %v2960, %v3047
      %v3066 = vmul.f32 %v2962, %v3049
      %v3067 = vmul.f32 %v2964, %v3051
      %v3068 = vmul.f32 %v2968, %v3053
      %v3069 = vmul.f32 %v2970, %v3055
      %v3070 = vmul.f32 %v2972, %v3057
      %v3071 = vmul.f32 %v2974, %v3059
      %v3072 = vpack.c.bf16 %v3062, %v3060
      %v3073 = vpack.c.bf16 %v3063, %v3061
      %v3074 = vpack.c.bf16 %v3066, %v3064
      %v3075 = vpack.c.bf16 %v3067, %v3065
      %v3076 = vpack.c.bf16 %v3070, %v3068
      %v3077 = vpack.c.bf16 %v3071, %v3069
      %v3078 = vld [vmem:[%s467] sm:$0xf]
      %v3079 = vld [vmem:[%s467 + $0x4] sm:$0xf]
      %v3080 = vld [vmem:[%s467 + $0x8] sm:$0xf]
      %v3081 = vld [vmem:[%s467 + $0xc] sm:$0xf]
      %v3082 = vld [vmem:[%s467 + $0x10] sm:$0xf]
      %v3083 = vld [vmem:[%s467 + $0x14] sm:$0xf]
      %v3084 = vld [vmem:[%s467 + $0x18] sm:$0xf]
      %v3085 = vld [vmem:[%s467 + $0x1c] sm:$0xf]
      %v3086 = vld [vmem:[%s467 + $0x20] sm:$0xf]
      %v3087 = vld [vmem:[%s467 + $0x24] sm:$0xf]
      %v3088 = vld [vmem:[%s467 + $0x28] sm:$0xf]
      %v3089 = vld [vmem:[%s467 + $0x2c] sm:$0xf]
      %v3090 = vld [vmem:[%s467 + $0x30] sm:$0xf]
      %v3091 = vld [vmem:[%s467 + $0x34] sm:$0xf]
      %v3092 = vld [vmem:[%s467 + $0x38] sm:$0xf]
      %v3093 = vld [vmem:[%s467 + $0x3c] sm:$0xf]
      %v3094 = vld [vmem:[%s467 + $0x40] sm:$0xf]
      %v3095 = vld [vmem:[%s467 + $0x44] sm:$0xf]
      %v3096 = vld [vmem:[%s467 + $0x48] sm:$0xf]
      %v3097 = vld [vmem:[%s467 + $0x4c] sm:$0xf]
      %v3098 = vld [vmem:[%s467 + $0x50] sm:$0xf]
      %v3099 = vld [vmem:[%s467 + $0x54] sm:$0xf]
      %v3100 = vld [vmem:[%s467 + $0x58] sm:$0xf]
      %v3101 = vld [vmem:[%s467 + $0x5c] sm:$0xf]
      %v3102 = vld [vmem:[%s467 + $0x60] sm:$0xf]
      %v3103 = vld [vmem:[%s467 + $0x64] sm:$0xf]
      %v3104 = vld [vmem:[%s467 + $0x68] sm:$0xf]
      %v3105 = vld [vmem:[%s467 + $0x6c] sm:$0xf]
      %v3106 = vld [vmem:[%s467 + $0x70] sm:$0xf]
      %v3107 = vld [vmem:[%s467 + $0x74] sm:$0xf]
      %v3108 = vld [vmem:[%s467 + $0x78] sm:$0xf]
      %v3109 = vld [vmem:[%s467 + $0x7c] sm:$0xf]
      %v3110 = vld [vmem:[%s472 + $0x6] ss:$0 sm:$0xff]
      %v3143 = vunpack.c.l.b16 %v3078
      %v3144 = vunpack.c.l.b16 %v3079
      %v3145 = vunpack.c.l.b16 %v3080
      %v3146 = vunpack.c.l.b16 %v3081
      %v3147 = vunpack.c.l.b16 %v3082
      %v3148 = vunpack.c.l.b16 %v3083
      %v3149 = vunpack.c.l.b16 %v3084
      %v3150 = vunpack.c.l.b16 %v3085
      %v3151 = vunpack.c.l.b16 %v3086
      %v3152 = vunpack.c.l.b16 %v3087
      %v3153 = vunpack.c.l.b16 %v3088
      %v3154 = vunpack.c.l.b16 %v3089
      %v3155 = vunpack.c.l.b16 %v3090
      %v3156 = vunpack.c.l.b16 %v3091
      %v3157 = vunpack.c.l.b16 %v3092
      %v3158 = vunpack.c.l.b16 %v3093
      %v3159 = vunpack.c.l.b16 %v3094
      %v3160 = vunpack.c.l.b16 %v3095
      %v3161 = vunpack.c.l.b16 %v3096
      %v3162 = vunpack.c.l.b16 %v3097
      %v3163 = vunpack.c.l.b16 %v3098
      %v3164 = vunpack.c.l.b16 %v3099
      %v3165 = vunpack.c.l.b16 %v3100
      %v3166 = vunpack.c.l.b16 %v3101
      %v3167 = vunpack.c.l.b16 %v3102
      %v3168 = vunpack.c.l.b16 %v3103
      %v3169 = vunpack.c.l.b16 %v3104
      %v3170 = vunpack.c.l.b16 %v3105
      %v3171 = vunpack.c.l.b16 %v3106
      %v3172 = vunpack.c.l.b16 %v3107
      %v3173 = vunpack.c.l.b16 %v3108
      %v3174 = vunpack.c.l.b16 %v3109
      %v3175 = vpack.c.b16 %v3144, %v3143
      %v3176 = vpack.c.b16 %v3146, %v3145
      %v3177 = vpack.c.b16 %v3148, %v3147
      %v3178 = vpack.c.b16 %v3150, %v3149
      %v3179 = vpack.c.b16 %v3152, %v3151
      %v3180 = vpack.c.b16 %v3154, %v3153
      %v3181 = vpack.c.b16 %v3156, %v3155
      %v3182 = vpack.c.b16 %v3158, %v3157
      %v3183 = vpack.c.b16 %v3160, %v3159
      %v3184 = vpack.c.b16 %v3162, %v3161
      %v3185 = vpack.c.b16 %v3164, %v3163
      %v3186 = vpack.c.b16 %v3166, %v3165
      %v3187 = vpack.c.b16 %v3168, %v3167
      %v3188 = vpack.c.b16 %v3170, %v3169
      %v3189 = vpack.c.b16 %v3172, %v3171
      %v3190 = vpack.c.b16 %v3174, %v3173
      %3207 = vmatprep.subr.bf16.mxu0 0
      %3208 = vmatpush1.bf16.msra.mxu0 %v3182
      %3209 = vmatprep.subr.bf16.mxu0 0
      %3210 = vmatpush1.bf16.msra.mxu0 %v3181
      %3211 = vmatprep.subr.bf16.mxu0 0
      %3212 = vmatpush1.bf16.msra.mxu0 %v3180
      %3213 = vmatprep.subr.bf16.mxu0 0
      %3214 = vmatpush1.bf16.msra.mxu0 %v3179
      %3215 = vmatprep.subr.bf16.mxu0 0
      %3216 = vmatpush1.bf16.msra.mxu0 %v3178
      %3217 = vmatprep.subr.bf16.mxu0 0
      %3218 = vmatpush1.bf16.msra.mxu0 %v3177
      %3219 = vmatprep.subr.bf16.mxu0 0
      %3220 = vmatpush1.bf16.msra.mxu0 %v3176
      %3221 = vmatprep.subr.bf16.mxu0 0
      %3222 = vmatpush1.bf16.msra.mxu0 %v3175
      %3223 = vmatprep.subr.bf16.mxu0 0
      %3224 = vmatpush2.bf16.msra.mxu0 %v3190
      %3225 = vmatprep.subr.bf16.mxu0 0
      %3226 = vmatpush2.bf16.msra.mxu0 %v3189
      %3227 = vmatprep.subr.bf16.mxu0 0
      %3228 = vmatpush2.bf16.msra.mxu0 %v3188
      %3229 = vmatprep.subr.bf16.mxu0 0
      %3230 = vmatpush2.bf16.msra.mxu0 %v3187
      %3231 = vmatprep.subr.bf16.mxu0 0
      %3232 = vmatpush2.bf16.msra.mxu0 %v3186
      %3233 = vmatprep.subr.bf16.mxu0 0
      %3234 = vmatpush2.bf16.msra.mxu0 %v3185
      %3235 = vmatprep.subr.bf16.mxu0 0
      %3236 = vmatpush2.bf16.msra.mxu0 %v3184
      %3237 = vmatprep.subr.bf16.mxu0 0
      %3238 = vmatpush2.bf16.msra.mxu0 %v3183
      %3239 = vmatprep.mubr.bf16.mxu0 %v3073
      %3240 = vmatmul.mubr.bf16.gmra.mxu0 %v3072
      %v3241 = vpop.f32.mrf.mxu0
      %v3242 = vadd.f32 %v3110, %v3241
      %v3243 = vpop.f32.mrf.mxu0
      %v3244 = vpop.f32.mrf.mxu0
      %v3245 = vadd.f32 %v3110, %v3244
      %v3246 = vpop.f32.mrf.mxu0
      %3247 = vmatprep.mubr.bf16.mxu0 %v3075
      %3248 = vmatmul.mubr.bf16.gmra.mxu0 %v3074
      %v3249 = vpop.f32.mrf.mxu0
      %v3250 = vadd.f32 %v3110, %v3249
      %v3251 = vpop.f32.mrf.mxu0
      %v3252 = vpop.f32.mrf.mxu0
      %v3253 = vadd.f32 %v3110, %v3252
      %v3254 = vpop.f32.mrf.mxu0
      %3255 = vmatprep.mubr.bf16.mxu0 %v3077
      %3256 = vmatmul.mubr.bf16.gmra.mxu0 %v3076
      %v3257 = vpop.f32.mrf.mxu0
      %v3258 = vadd.f32 %v3110, %v3257
      %v3259 = vpop.f32.mrf.mxu0
      %v3260 = vpop.f32.mrf.mxu0
      %v3261 = vadd.f32 %v3110, %v3260
      %v3262 = vpop.f32.mrf.mxu0
      %3263 = vdwg.mxu0
      %v3264 = vadd.f32 %v2715, %v3242
      %v3265 = vadd.f32 %v2716, %v3245
      %v3266 = vadd.f32 %v2717, %v3250
      %v3267 = vadd.f32 %v2718, %v3253
      %v3268 = vadd.f32 %v2719, %v3258
      %v3269 = vadd.f32 %v2720, %v3261
      %3270 = vst [vmem:[#allocation2] sm:$0xff] %v3264
      %3271 = vst [vmem:[#allocation2 + $0x8] sm:$0xff] %v3265
      %3272 = vst [vmem:[#allocation2 + $0x10] sm:$0xff] %v3266
      %3273 = vst [vmem:[#allocation2 + $0x18] sm:$0xff] %v3267
      %3274 = vst [vmem:[#allocation2 + $0x20] sm:$0xff] %v3268
      %3275 = vst [vmem:[#allocation2 + $0x28] sm:$0xff] %v3269
      %p3276 = scmp.eq.s32.totalorder %s26, 2
      // Predicated region
      $region65: #{clip_image_projector.1} parent=59 // pred_check
        %p3277 = pneg %p3276
      $region66: #{clip_image_projector.1} parent=59 // pred_check_branch
        %3279 = sbr.rel (%p3277) target = $region68
      $region67: #{clip_image_projector.1} parent=59 // pred_region
        %v3280 = vpack.c.bf16 %v3265, %v3264
        %v3281 = vpack.c.bf16 %v3267, %v3266
        %v3282 = vpack.c.bf16 %v3269, %v3268
        %v3283 = vld [vmem:[%s9] sm:$0xff]
        %v3284 = vld [vmem:[%s9 + $0x8] sm:$0xff]
        %v3285 = vld [vmem:[%s9 + $0x10] sm:$0xff]
        %v3286 = vld [vmem:[%s9 + $0x18] sm:$0xff]
        %v3287 = vld [vmem:[%s9 + $0x20] sm:$0xff]
        %v3288 = vld [vmem:[%s9 + $0x28] sm:$0xff]
        %v3289 = vld [vmem:[%s9 + $0x30] sm:$0xff]
        %v3290 = vld [vmem:[%s9 + $0x38] sm:$0xff]
        %v3291 = vld [vmem:[%s9 + $0x40] sm:$0xff]
        %v3292 = vld [vmem:[%s9 + $0x48] sm:$0xff]
        %v3293 = vld [vmem:[%s9 + $0x50] sm:$0xff]
        %v3294 = vld [vmem:[%s9 + $0x58] sm:$0xff]
        %v3295 = vld [vmem:[%s9 + $0x60] sm:$0xff]
        %v3296 = vld [vmem:[%s9 + $0x68] sm:$0xff]
        %v3297 = vld [vmem:[%s9 + $0x70] sm:$0xff]
        %v3298 = vld [vmem:[%s9 + $0x78] sm:$0xff]
        %s3299 = scalar_lea.vmem %s1, 2
        %v3300 = vld [vmem:[%s3299] ss:$8 sm:$0x3]
        %v3302 = vlaneseq
        %v3303 = vshrl.u32 %v3302, 7
        %v3304 = vsub.s32 0, %v3303
        %v3305 = vrot.slane %v3300, %v3304
        %v3306 = vlaneseq
        %v3307 = vshrl.u32 %v3306, 7
        %v3308 = vsub.s32 1, %v3307
        %v3309 = vrot.slane %v3300, %v3308
        %v3328 = vunpack.c.l.b16 %v3283
        %v3329 = vunpack.c.h.b16 %v3283
        %v3330 = vunpack.c.l.b16 %v3284
        %v3331 = vunpack.c.h.b16 %v3284
        %v3332 = vunpack.c.l.b16 %v3285
        %v3333 = vunpack.c.h.b16 %v3285
        %v3334 = vunpack.c.l.b16 %v3286
        %v3335 = vunpack.c.h.b16 %v3286
        %v3336 = vunpack.c.l.b16 %v3287
        %v3337 = vunpack.c.h.b16 %v3287
        %v3338 = vunpack.c.l.b16 %v3288
        %v3339 = vunpack.c.h.b16 %v3288
        %v3340 = vunpack.c.l.b16 %v3289
        %v3341 = vunpack.c.h.b16 %v3289
        %v3342 = vunpack.c.l.b16 %v3290
        %v3343 = vunpack.c.h.b16 %v3290
        %v3344 = vunpack.c.l.b16 %v3291
        %v3345 = vunpack.c.h.b16 %v3291
        %v3346 = vunpack.c.l.b16 %v3292
        %v3347 = vunpack.c.h.b16 %v3292
        %v3348 = vunpack.c.l.b16 %v3293
        %v3349 = vunpack.c.h.b16 %v3293
        %v3350 = vunpack.c.l.b16 %v3294
        %v3351 = vunpack.c.h.b16 %v3294
        %v3352 = vunpack.c.l.b16 %v3295
        %v3353 = vunpack.c.h.b16 %v3295
        %v3354 = vunpack.c.l.b16 %v3296
        %v3355 = vunpack.c.h.b16 %v3296
        %v3356 = vunpack.c.l.b16 %v3297
        %v3357 = vunpack.c.h.b16 %v3297
        %v3358 = vunpack.c.l.b16 %v3298
        %v3359 = vunpack.c.h.b16 %v3298
        %v3360 = vpack.c.b16 %v3330, %v3328
        %v3361 = vpack.c.b16 %v3331, %v3329
        %v3362 = vpack.c.b16 %v3334, %v3332
        %v3363 = vpack.c.b16 %v3335, %v3333
        %v3364 = vpack.c.b16 %v3338, %v3336
        %v3365 = vpack.c.b16 %v3339, %v3337
        %v3366 = vpack.c.b16 %v3342, %v3340
        %v3367 = vpack.c.b16 %v3343, %v3341
        %v3368 = vpack.c.b16 %v3346, %v3344
        %v3369 = vpack.c.b16 %v3347, %v3345
        %v3370 = vpack.c.b16 %v3350, %v3348
        %v3371 = vpack.c.b16 %v3351, %v3349
        %v3372 = vpack.c.b16 %v3354, %v3352
        %v3373 = vpack.c.b16 %v3355, %v3353
        %v3374 = vpack.c.b16 %v3358, %v3356
        %v3375 = vpack.c.b16 %v3359, %v3357
        %3392 = vmatprep.subr.bf16.mxu0 %v3375
        %3393 = vmatpush1.bf16.msra.mxu0 %v3374
        %3394 = vmatprep.subr.bf16.mxu0 %v3373
        %3395 = vmatpush1.bf16.msra.mxu0 %v3372
        %3396 = vmatprep.subr.bf16.mxu0 %v3371
        %3397 = vmatpush1.bf16.msra.mxu0 %v3370
        %3398 = vmatprep.subr.bf16.mxu0 %v3369
        %3399 = vmatpush1.bf16.msra.mxu0 %v3368
        %3400 = vmatprep.subr.bf16.mxu0 %v3367
        %3401 = vmatpush1.bf16.msra.mxu0 %v3366
        %3402 = vmatprep.subr.bf16.mxu0 %v3365
        %3403 = vmatpush1.bf16.msra.mxu0 %v3364
        %3404 = vmatprep.subr.bf16.mxu0 %v3363
        %3405 = vmatpush1.bf16.msra.mxu0 %v3362
        %3406 = vmatprep.subr.bf16.mxu0 %v3361
        %3407 = vmatpush1.bf16.msra.mxu0 %v3360
        %3408 = vmatprep.subr.bf16.mxu0 0
        %3409 = vmatpush2.bf16.msra.mxu0 0
        %3410 = vmatprep.subr.bf16.mxu0 0
        %3411 = vmatpush2.bf16.msra.mxu0 0
        %3412 = vmatprep.subr.bf16.mxu0 0
        %3413 = vmatpush2.bf16.msra.mxu0 0
        %3414 = vmatprep.subr.bf16.mxu0 0
        %3415 = vmatpush2.bf16.msra.mxu0 0
        %3416 = vmatprep.subr.bf16.mxu0 0
        %3417 = vmatpush2.bf16.msra.mxu0 0
        %3418 = vmatprep.subr.bf16.mxu0 0
        %3419 = vmatpush2.bf16.msra.mxu0 0
        %3420 = vmatprep.subr.bf16.mxu0 0
        %3421 = vmatpush2.bf16.msra.mxu0 0
        %3422 = vmatprep.subr.bf16.mxu0 0
        %3423 = vmatpush2.bf16.msra.mxu0 0
        %3424 = vmatprep.mubr.bf16.mxu0 0
        %3425 = vmatmul.mubr.bf16.gmra.mxu0 %v3280
        %v3426 = vpop.f32.mrf.mxu0
        %v3427 = vadd.f32 %v3305, %v3426
        %v3428 = vpop.f32.mrf.mxu0
        %v3429 = vadd.f32 %v3309, %v3428
        %v3430 = vpop.f32.mrf.mxu0
        %v3431 = vadd.f32 %v3305, %v3430
        %v3432 = vpop.f32.mrf.mxu0
        %v3433 = vadd.f32 %v3309, %v3432
        %3434 = vmatprep.mubr.bf16.mxu0 0
        %3435 = vmatmul.mubr.bf16.gmra.mxu0 %v3281
        %v3436 = vpop.f32.mrf.mxu0
        %v3437 = vadd.f32 %v3305, %v3436
        %v3438 = vpop.f32.mrf.mxu0
        %v3439 = vadd.f32 %v3309, %v3438
        %v3440 = vpop.f32.mrf.mxu0
        %v3441 = vadd.f32 %v3305, %v3440
        %v3442 = vpop.f32.mrf.mxu0
        %v3443 = vadd.f32 %v3309, %v3442
        %3444 = vmatprep.mubr.bf16.mxu0 0
        %3445 = vmatmul.mubr.bf16.gmra.mxu0 %v3282
        %v3446 = vpop.f32.mrf.mxu0
        %v3447 = vadd.f32 %v3305, %v3446
        %v3448 = vpop.f32.mrf.mxu0
        %v3449 = vadd.f32 %v3309, %v3448
        %v3450 = vpop.f32.mrf.mxu0
        %v3451 = vadd.f32 %v3305, %v3450
        %v3452 = vpop.f32.mrf.mxu0
        %v3453 = vadd.f32 %v3309, %v3452
        %3454 = vdwg.mxu0
        %v3455 = vlaneseq
        %v3456 = vshrl.u32 %v3455, 7
        %v3457 = vadd.s32 %v3456, 8
        %v3458 = vadd.s32 %v3456, 16
        %vm3459 = vcmp.lt.s32.totalorder %v3456, 17
        %vm3460 = vcmp.lt.s32.totalorder %v3457, 17
        %vm3461 = vcmp.lt.s32.totalorder %v3458, 17
        %v3462 = vsel %vm3459, %v3427, 0.0
        %v3463 = vsel %vm3459, %v3429, 0.0
        %v3464 = vsel %vm3460, %v3431, 0.0
        %v3465 = vsel %vm3460, %v3433, 0.0
        %v3466 = vsel %vm3461, %v3437, 0.0
        %v3467 = vsel %vm3461, %v3439, 0.0
        %v3468 = vsel %vm3459, %v3441, 0.0
        %v3469 = vsel %vm3459, %v3443, 0.0
        %v3470 = vsel %vm3460, %v3447, 0.0
        %v3471 = vsel %vm3460, %v3449, 0.0
        %v3472 = vsel %vm3461, %v3451, 0.0
        %v3473 = vsel %vm3461, %v3453, 0.0
        %3474 = vst [vmem:[%s478] sm:$0xff] %v3462
        %3475 = vst [vmem:[%s478 + $0x8] sm:$0xff] %v3463
        %3476 = vst [vmem:[%s478 + $0x10] sm:$0xff] %v3464
        %3477 = vst [vmem:[%s478 + $0x18] sm:$0xff] %v3465
        %3478 = vst [vmem:[%s478 + $0x20] sm:$0xff] %v3466
        %3479 = vst [vmem:[%s478 + $0x28] sm:$0xff] %v3467
        %3480 = vst [vmem:[%s478 + $0x30] sm:$0xff] %v3468
        %3481 = vst [vmem:[%s478 + $0x38] sm:$0xff] %v3469
        %3482 = vst [vmem:[%s478 + $0x40] sm:$0xff] %v3470
        %3483 = vst [vmem:[%s478 + $0x48] sm:$0xff] %v3471
        %3484 = vst [vmem:[%s478 + $0x50] sm:$0xff] %v3472
        %3485 = vst [vmem:[%s478 + $0x58] sm:$0xff] %v3473
      $region68: #{clip_image_projector.1} parent=59 // pred_fallthru
        _
      %s3486 = smul.u32 2, %s25
      %p3487 = scmp.lt.s32.totalorder %s3486, 1
      %s3488 = scalar_select %p3487, %s3486, 1
      %s3489 = smul.addr %s3488, 6
      %s3490 = smul.addr %s3489, 8
      %s3491 = scalar_lea.vmem %s10, %s3490
      // Predicated region
      $region69: #{clip_image_projector.1} parent=59 // pred_check
        %p3492 = pneg %p291
      $region70: #{clip_image_projector.1} parent=59 // pred_check_branch
        %3494 = sbr.rel (%p3492) target = $region72
      $region71: #{clip_image_projector.1} parent=59 // pred_region
        %s3495 = smul.u32 2, %s25
      $region72: #{clip_image_projector.1} parent=59 // pred_fallthru
        _
      // Predicated region
      $region73: #{clip_image_projector.1} parent=59 // pred_check
        %p3496 = pneg %p291
      $region74: #{clip_image_projector.1} parent=59 // pred_check_branch
        %3498 = sbr.rel (%p3496) target = $region76
      $region75: #{clip_image_projector.1} parent=59 // pred_region
        %s3499 = smul.u32 2, %s25
        %p3500 = scmp.lt.s32.totalorder %s3499, 1
        %s3501 = scalar_select %p3500, %s3499, 1
        %s3502 = smul.addr %s3501, 6
        %s3503 = smul.addr %s3502, 8
        %s3504 = scalar_lea.vmem %s10, %s3503
      $region76: #{clip_image_projector.1} parent=59 // pred_fallthru
        _
    $region60: #{clip_image_projector.1} parent=5 // pred_fallthru
      _
    %p3505 = scmp.le.s32.totalorder 2, %s16
    // Predicated region
    $region77: #{clip_image_projector.1} parent=5 // pred_check
      %p3506 = pneg %p3505
    $region78: #{clip_image_projector.1} parent=5 // pred_check_branch
      %3508 = sbr.rel (%p3506) target = $region80
    $region79: #{clip_image_projector.1} parent=5 // pred_region
      %s3509 = ssub.s32 %s16, 2
    $region80: #{clip_image_projector.1} parent=5 // pred_fallthru
      _
  $region6: #{clip_image_projector.1} parent=0 // loop_footer
    %s20 = sadd.s32 1, %s16
  $region7: #{clip_image_projector.1} parent=0 // loop_footer_branch
    %15 = sbr.rel target = $region3
  $region8: #{clip_image_projector.1} parent=0 // loop_exit
    _

</llo_original>
